<compile_context>
chip_gen: v7x
topology: tpu7x:2x2x1
jax: 0.10.0
libtpu: 0.0.40
codegen_flags: <defaults>
</compile_context>

<pallas_src>
import jax
import jax.numpy as jnp
from jax.experimental import pallas as pl
from jax.experimental.pallas import tpu as pltpu


# ----------------------------------------------------------------------------
# Static geometry of the synthesized VisionNetwork.
# ----------------------------------------------------------------------------
C_IN, H_IN, W_IN = 4, 16, 16
K1, S1, C1 = 4, 2, 16
OH1 = (H_IN - K1) // S1 + 1          # 7
OW1 = (W_IN - K1) // S1 + 1          # 7
K2, S2, C2 = 3, 2, 32
OH2 = (OH1 - K2) // S2 + 1           # 3
OW2 = (OW1 - K2) // S2 + 1           # 3
FLAT2 = C2 * OH2 * OW2               # 288
FC1 = 128
LATENT = 64                          # latent_size // 4
N_IMG = 3
OUT_WIDTH = 4 * LATENT               # 256


# ----------------------------------------------------------------------------
# Synthesized VisionNetwork parameters (raw, PyTorch-like shapes).
# ----------------------------------------------------------------------------
def init_vision_params(key, c_in, h, w, latent=LATENT):
    ks = jax.random.split(key, 8)

    def u(k, shape, fan_in):
        bound = 1.0 / jnp.sqrt(jnp.float32(fan_in))
        return jax.random.uniform(k, shape, jnp.float32, -bound, bound)

    oh1 = (h - K1) // S1 + 1
    ow1 = (w - K1) // S1 + 1
    oh2 = (oh1 - K2) // S2 + 1
    ow2 = (ow1 - K2) // S2 + 1
    flat = C2 * oh2 * ow2
    return {
        "conv1_w": u(ks[0], (C1, c_in, K1, K1), c_in * K1 * K1),
        "conv1_b": u(ks[1], (C1,), c_in * K1 * K1),
        "conv2_w": u(ks[2], (C2, C1, K2, K2), C1 * K2 * K2),
        "conv2_b": u(ks[3], (C2,), C1 * K2 * K2),
        "fc1_w": u(ks[4], (flat, FC1), flat),
        "fc1_b": u(ks[5], (FC1,), flat),
        "fc2_w": u(ks[6], (FC1, latent), FC1),
        "fc2_b": u(ks[7], (latent,), FC1),
    }


# ----------------------------------------------------------------------------
# One-time parameter preparation (outside the jitted forward): raw conv weights
# reshaped into im2col form, fc1 row-permuted to the kernel's (position,
# channel) order, fc2 replicated across the three 64-wide output blocks.
# ----------------------------------------------------------------------------
def prepare_fused_params(p, *, compute_dtype=jnp.bfloat16):
    conv1_w = p["conv1_w"].astype(jnp.float32)   # (16, C, 4, 4)  OIHW
    conv2_w = p["conv2_w"].astype(jnp.float32)   # (32, 16, 3, 3) OIHW
    fc1_w = p["fc1_w"].astype(jnp.float32)       # (288, 128)
    fc2_w = p["fc2_w"].astype(jnp.float32)       # (128, 64)

    # conv1 im2col weight: rows ordered (c, ki, kj) -> (64, 16)
    w1 = conv1_w.transpose(1, 2, 3, 0).reshape(C_IN * K1 * K1, C1)
    b1 = p["conv1_b"].astype(jnp.float32).reshape(1, C1)

    # conv2 im2col weight: rows ordered (ki, kj, c) -> (144, 32)
    # (matches the in-kernel tap order: tap-major, conv1-channel-minor)
    w2 = conv2_w.transpose(2, 3, 1, 0).reshape(C1 * K2 * K2, C2)
    b2 = p["conv2_b"].astype(jnp.float32).reshape(1, C2)

    # fc1 rows permuted from NCHW-flat (c*9 + pos) to kernel order (pos*32 + c)
    npos = OH2 * OW2
    w3 = fc1_w.reshape(C2, npos, FC1).transpose(1, 0, 2).reshape(C2 * npos, FC1)
    b3 = p["fc1_b"].astype(jnp.float32).reshape(1, FC1)

    # fc2 replicated across output blocks 0..2; block 3 (blank_4) stays zero.
    w4 = jnp.zeros((FC1, OUT_WIDTH), jnp.float32)
    b4 = jnp.zeros((1, OUT_WIDTH), jnp.float32)
    for n in range(N_IMG):
        w4 = w4.at[:, n * LATENT:(n + 1) * LATENT].set(fc2_w)
        b4 = b4.at[0, n * LATENT:(n + 1) * LATENT].set(
            p["fc2_b"].astype(jnp.float32))

    return {
        "w1": w1.astype(compute_dtype), "b1": b1,
        "w2": w2.astype(compute_dtype), "b2": b2,
        "w3": w3.astype(compute_dtype), "b3": b3,
        "w4": w4.astype(compute_dtype), "b4": b4,
    }


# ----------------------------------------------------------------------------
# Wrapper-side conv1 im2col (tiny: 12 KB in, 37 KB out), fused with the stack
# of the three modality images.  Rows ordered (oy, ox, image) so every conv2
# tap in the kernel is one contiguous 3-row static slice.
# ----------------------------------------------------------------------------
def _im2col_rows(x, k, stride):
    bsz, c, h, w = x.shape
    oh = (h - k) // stride + 1
    ow = (w - k) // stride + 1
    taps = []
    for ki in range(k):
        for kj in range(k):
            taps.append(x[:, :, ki:ki + stride * oh:stride,
                          kj:kj + stride * ow:stride])       # (B, C, oh, ow)
    p = jnp.stack(taps, axis=2)                              # (B, C, k*k, oh, ow)
    p = p.transpose(3, 4, 0, 1, 2)                           # (oh, ow, B, C, k*k)
    return p.reshape(oh * ow * bsz, c * k * k)               # rows=(y,x,b), feat=(c,ki,kj)


# ----------------------------------------------------------------------------
# The single fused Pallas kernel: conv1 (im2col matmul) -> conv2 (static patch
# slices, raw weights) -> fc1 (position-blocked) -> fc2 (block-replicated) and
# the blank_4 zero-pad, everything resident in VMEM/vregs.
# ----------------------------------------------------------------------------
def _fused_encoder_kernel(p1_ref, w1_ref, b1_ref, w2_ref, b2_ref,
                          w3_ref, b3_ref, w4_ref, b4_ref, o_ref):
    cdt = w1_ref.dtype                                       # bf16 MXU operands

    # conv1: (147, 64) @ (64, 16) + bias, ReLU.  Row r = (y1*OW1 + x1)*3 + img.
    h1 = jnp.dot(p1_ref[...].astype(cdt), w1_ref[...],
                 preferred_element_type=jnp.float32)
    h1 = jnp.maximum(h1 + b1_ref[...], 0.0)                  # (147, 16) f32

    # conv2 + fc1, position-blocked: never materializes a lane-flattened (3, 288);
    # only static row slices and small MXU dots (all raw, un-inflated weights).
    h3_acc = jnp.zeros((N_IMG, FC1), jnp.float32)
    for oy in range(OH2):
        for ox in range(OW2):
            pos_idx = oy * OW2 + ox
            acc = jnp.zeros((N_IMG, C2), jnp.float32)
            for ki in range(K2):
                for kj in range(K2):
                    t = ki * K2 + kj
                    r = ((S2 * oy + ki) * OW1 + (S2 * ox + kj)) * N_IMG
                    lhs = h1[r:r + N_IMG, :].astype(cdt)     # (3, 16) one tap, all imgs
                    acc = acc + jnp.dot(
                        lhs, w2_ref[t * C1:(t + 1) * C1, :],
                        preferred_element_type=jnp.float32)
            pos = jnp.maximum(acc + b2_ref[...], 0.0)        # (3, 32) conv2 out @ pos
            h3_acc = h3_acc + jnp.dot(
                pos.astype(cdt), w3_ref[pos_idx * C2:(pos_idx + 1) * C2, :],
                preferred_element_type=jnp.float32)
    h3 = jnp.maximum(h3_acc + b3_ref[...], 0.0)              # (3, 128) fc1 out

    # fc2 with block-replicated weight: e[b, 64n + j] = enc_b[j] for every n.
    # Selecting the diagonal blocks and summing over images yields the final
    # lane-dense (1, 256) = [enc(start)|enc(end)|enc(bbox)|zeros].
    e = jnp.dot(h3.astype(cdt), w4_ref[...],
                preferred_element_type=jnp.float32)          # (3, 256)
    row = jax.lax.broadcasted_iota(jnp.int32, e.shape, 0)
    col = jax.lax.broadcasted_iota(jnp.int32, e.shape, 1)
    sel = (col >= row * LATENT) & (col < (row + 1) * LATENT)
    o_ref[...] = jnp.sum(jnp.where(sel, e, 0.0), axis=0, keepdims=True) + b4_ref[...]


# ----------------------------------------------------------------------------
# ConcatEncoders.forward
# ----------------------------------------------------------------------------
@jax.jit
def concat_encoders_forward(prep, start, end, bbox):
    b = 1
    s1, w1_, h1_, c1_ = start.shape
    img1 = start.reshape(-1, c1_, h1_, w1_)      # raw reinterpret, as in reference
    s2, w2_, h2_, c2_ = end.shape
    img2 = end.reshape(-1, c2_, h2_, w2_)
    s3, c3_, h3_, w3_ = bbox.shape
    img3 = bbox.reshape(-1, c3_, h3_, w3_)
    assert s1 == s2 == s3 == 1, "reference concat with blank_4 requires s == 1"
    assert img1.shape == img2.shape == img3.shape == (1, C_IN, H_IN, W_IN)

    # Single tiny wrapper fusion: stacks the three modalities AND extracts the
    # conv1 patches feeding the kernel (replaces the old concat + reshape).
    x = jnp.concatenate([img1, img2, img3], axis=0)          # (3, C, H, W)
    patches = _im2col_rows(x.astype(jnp.float32), K1, S1)    # (147, 64)

    out = pl.pallas_call(
        _fused_encoder_kernel,
        out_shape=jax.ShapeDtypeStruct((1, OUT_WIDTH), jnp.float32),
        in_specs=[pl.BlockSpec(memory_space=pltpu.MemorySpace.VMEM)] * 9,
        out_specs=pl.BlockSpec(memory_space=pltpu.MemorySpace.VMEM),
        cost_estimate=pl.CostEstimate(flops=970_000, transcendentals=0,
                                      bytes_accessed=191_000),
    )(patches, prep["w1"], prep["b1"], prep["w2"], prep["b2"],
      prep["w3"], prep["b3"], prep["w4"], prep["b4"])

    return out.reshape(b, 1, OUT_WIDTH)                      # (1, 1, 256)


# ----------------------------------------------------------------------------
# Pure-JAX f32 reference (mirrors the torch module) for self-validation.
# ----------------------------------------------------------------------------
def _vision_network_reference(p, x_nchw):
    hp = jax.lax.Precision.HIGHEST
    y = jax.lax.conv_general_dilated(
        x_nchw, p["conv1_w"], window_strides=(S1, S1), padding="VALID",
        dimension_numbers=("NCHW", "OIHW", "NCHW"), precision=hp)
    y = jnp.maximum(y + p["conv1_b"][None, :, None, None], 0.0)
    y = jax.lax.conv_general_dilated(
        y, p["conv2_w"], window_strides=(S2, S2), padding="VALID",
        dimension_numbers=("NCHW", "OIHW", "NCHW"), precision=hp)
    y = jnp.maximum(y + p["conv2_b"][None, :, None, None], 0.0)
    y = y.reshape(y.shape[0], -1)
    y = jnp.maximum(jnp.dot(y, p["fc1_w"], precision=hp) + p["fc1_b"], 0.0)
    return jnp.dot(y, p["fc2_w"], precision=hp) + p["fc2_b"]


def concat_encoders_reference(p, start, end, bbox):
    b = 1
    s, w, h, c = start.shape
    e1 = _vision_network_reference(p, start.reshape(-1, c, h, w)).reshape(b, s, -1)
    s, w, h, c = end.shape
    e2 = _vision_network_reference(p, end.reshape(-1, c, h, w)).reshape(b, s, -1)
    s, c, h, w = bbox.shape
    e3 = _vision_network_reference(p, bbox.reshape(-1, c, h, w)).reshape(b, s, -1)
    blank = jnp.zeros((1, 1, LATENT), jnp.float32)
    return jnp.concatenate([e1, e2, e3, blank], axis=-1)


if __name__ == "__main__":
    key = jax.random.PRNGKey(0)
    k_start, k_end, k_bbox, k_params = jax.random.split(key, 4)

    # s must be 1 for the reference concat (blank_4 has s == 1) to be valid.
    S = 1
    start = jax.random.normal(k_start, (S, W_IN, H_IN, C_IN), jnp.float32)  # (s, w, h, c)
    end = jax.random.normal(k_end, (S, W_IN, H_IN, C_IN), jnp.float32)      # (s, w, h, c)
    bbox = jax.random.normal(k_bbox, (S, C_IN, H_IN, W_IN), jnp.float32)    # (s, c, h, w)

    raw_params = init_vision_params(k_params, c_in=C_IN, h=H_IN, w=W_IN)
    prep = prepare_fused_params(raw_params)

    out = concat_encoders_forward(prep, start, end, bbox)
    out = jax.block_until_ready(out)

    assert out.shape == (1, 1, OUT_WIDTH), out.shape
    assert out.dtype == jnp.float32
    # blank_4 block is exactly zero (zero fc2 block + zero bias, f32 accumulation)
    assert bool(jnp.all(out[..., 3 * LATENT:] == 0.0))
    # numerical parity with the f32 reference (bf16 MXU operands -> loose tol)
    ref = concat_encoders_reference(raw_params, start, end, bbox)
    assert jnp.allclose(out, ref, rtol=2e-2, atol=2e-2), float(
        jnp.max(jnp.abs(out - ref)))
    print("KERNEL_OK")
</pallas_src>

<mosaic_0001>
module attributes {stable_mosaic.version = 11 : i64} {
  func.func @_fused_encoder_kernel(%arg0: memref<147x64xf32, #tpu.memory_space<vmem>>, %arg1: memref<64x16xbf16, #tpu.memory_space<vmem>>, %arg2: memref<1x16xf32, #tpu.memory_space<vmem>>, %arg3: memref<144x32xbf16, #tpu.memory_space<vmem>>, %arg4: memref<1x32xf32, #tpu.memory_space<vmem>>, %arg5: memref<288x128xbf16, #tpu.memory_space<vmem>>, %arg6: memref<1x128xf32, #tpu.memory_space<vmem>>, %arg7: memref<128x256xbf16, #tpu.memory_space<vmem>>, %arg8: memref<1x256xf32, #tpu.memory_space<vmem>>, %arg9: memref<1x256xf32, #tpu.memory_space<vmem>>) attributes {dimension_semantics = [], scalar_prefetch = 0 : i64, scratch_operands = 0 : i64, tpu.core_type = #tpu.core_type<tc>} {
    %c0 = arith.constant 0 : index
    %c0_0 = arith.constant 0 : index
    %0 = vector.load %arg0[%c0, %c0_0] : memref<147x64xf32, #tpu.memory_space<vmem>>, vector<147x64xf32>
    %1 = arith.truncf %0 : vector<147x64xf32> to vector<147x64xbf16>
    %c0_1 = arith.constant 0 : index
    %c0_2 = arith.constant 0 : index
    %2 = vector.load %arg1[%c0_1, %c0_2] : memref<64x16xbf16, #tpu.memory_space<vmem>>, vector<64x16xbf16>
    %cst = arith.constant dense<0.000000e+00> : vector<147x16xf32>
    %3 = tpu.matmul %1, %2, %cst {dimension_numbers = #tpu.dot_dimension_numbers<[1], [0], [0], [1], [0, 0, 1, 1], [], []>} : vector<147x64xbf16>, vector<64x16xbf16>, vector<147x16xf32> -> vector<147x16xf32>
    %c0_3 = arith.constant 0 : index
    %c0_4 = arith.constant 0 : index
    %4 = vector.load %arg2[%c0_3, %c0_4] : memref<1x16xf32, #tpu.memory_space<vmem>>, vector<1x16xf32>
    %5 = vector.broadcast %4 : vector<1x16xf32> to vector<147x16xf32>
    %6 = arith.addf %3, %5 : vector<147x16xf32>
    %cst_5 = arith.constant 0.000000e+00 : f32
    %7 = vector.broadcast %cst_5 : f32 to vector<147x16xf32>
    %8 = arith.maximumf %6, %7 : vector<147x16xf32>
    %cst_6 = arith.constant 0.000000e+00 : f32
    %9 = vector.broadcast %cst_6 : f32 to vector<3x128xf32>
    %cst_7 = arith.constant 0.000000e+00 : f32
    %10 = vector.broadcast %cst_7 : f32 to vector<3x32xf32>
    %11 = vector.extract_strided_slice %8 {offsets = [0, 0], sizes = [3, 16], strides = [1, 1]} : vector<147x16xf32> to vector<3x16xf32>
    %12 = arith.truncf %11 : vector<3x16xf32> to vector<3x16xbf16>
    %c0_8 = arith.constant 0 : index
    %c0_9 = arith.constant 0 : index
    %13 = vector.load %arg3[%c0_8, %c0_9] : memref<144x32xbf16, #tpu.memory_space<vmem>>, vector<16x32xbf16>
    %cst_10 = arith.constant dense<0.000000e+00> : vector<3x32xf32>
    %14 = tpu.matmul %12, %13, %cst_10 {dimension_numbers = #tpu.dot_dimension_numbers<[1], [0], [0], [1], [0, 0, 1, 1], [], []>} : vector<3x16xbf16>, vector<16x32xbf16>, vector<3x32xf32> -> vector<3x32xf32>
    %15 = arith.addf %10, %14 : vector<3x32xf32>
    %16 = vector.extract_strided_slice %8 {offsets = [3, 0], sizes = [3, 16], strides = [1, 1]} : vector<147x16xf32> to vector<3x16xf32>
    %17 = arith.truncf %16 : vector<3x16xf32> to vector<3x16xbf16>
    %c16 = arith.constant 16 : index
    %c0_11 = arith.constant 0 : index
    %18 = vector.load %arg3[%c16, %c0_11] : memref<144x32xbf16, #tpu.memory_space<vmem>>, vector<16x32xbf16>
    %cst_12 = arith.constant dense<0.000000e+00> : vector<3x32xf32>
    %19 = tpu.matmul %17, %18, %cst_12 {dimension_numbers = #tpu.dot_dimension_numbers<[1], [0], [0], [1], [0, 0, 1, 1], [], []>} : vector<3x16xbf16>, vector<16x32xbf16>, vector<3x32xf32> -> vector<3x32xf32>
    %20 = arith.addf %15, %19 : vector<3x32xf32>
    %21 = vector.extract_strided_slice %8 {offsets = [6, 0], sizes = [3, 16], strides = [1, 1]} : vector<147x16xf32> to vector<3x16xf32>
    %22 = arith.truncf %21 : vector<3x16xf32> to vector<3x16xbf16>
    %c32 = arith.constant 32 : index
    %c0_13 = arith.constant 0 : index
    %23 = vector.load %arg3[%c32, %c0_13] : memref<144x32xbf16, #tpu.memory_space<vmem>>, vector<16x32xbf16>
    %cst_14 = arith.constant dense<0.000000e+00> : vector<3x32xf32>
    %24 = tpu.matmul %22, %23, %cst_14 {dimension_numbers = #tpu.dot_dimension_numbers<[1], [0], [0], [1], [0, 0, 1, 1], [], []>} : vector<3x16xbf16>, vector<16x32xbf16>, vector<3x32xf32> -> vector<3x32xf32>
    %25 = arith.addf %20, %24 : vector<3x32xf32>
    %26 = vector.extract_strided_slice %8 {offsets = [21, 0], sizes = [3, 16], strides = [1, 1]} : vector<147x16xf32> to vector<3x16xf32>
    %27 = arith.truncf %26 : vector<3x16xf32> to vector<3x16xbf16>
    %c48 = arith.constant 48 : index
    %c0_15 = arith.constant 0 : index
    %28 = vector.load %arg3[%c48, %c0_15] : memref<144x32xbf16, #tpu.memory_space<vmem>>, vector<16x32xbf16>
    %cst_16 = arith.constant dense<0.000000e+00> : vector<3x32xf32>
    %29 = tpu.matmul %27, %28, %cst_16 {dimension_numbers = #tpu.dot_dimension_numbers<[1], [0], [0], [1], [0, 0, 1, 1], [], []>} : vector<3x16xbf16>, vector<16x32xbf16>, vector<3x32xf32> -> vector<3x32xf32>
    %30 = arith.addf %25, %29 : vector<3x32xf32>
    %31 = vector.extract_strided_slice %8 {offsets = [24, 0], sizes = [3, 16], strides = [1, 1]} : vector<147x16xf32> to vector<3x16xf32>
    %32 = arith.truncf %31 : vector<3x16xf32> to vector<3x16xbf16>
    %c64 = arith.constant 64 : index
    %c0_17 = arith.constant 0 : index
    %33 = vector.load %arg3[%c64, %c0_17] : memref<144x32xbf16, #tpu.memory_space<vmem>>, vector<16x32xbf16>
    %cst_18 = arith.constant dense<0.000000e+00> : vector<3x32xf32>
    %34 = tpu.matmul %32, %33, %cst_18 {dimension_numbers = #tpu.dot_dimension_numbers<[1], [0], [0], [1], [0, 0, 1, 1], [], []>} : vector<3x16xbf16>, vector<16x32xbf16>, vector<3x32xf32> -> vector<3x32xf32>
    %35 = arith.addf %30, %34 : vector<3x32xf32>
    %36 = vector.extract_strided_slice %8 {offsets = [27, 0], sizes = [3, 16], strides = [1, 1]} : vector<147x16xf32> to vector<3x16xf32>
    %37 = arith.truncf %36 : vector<3x16xf32> to vector<3x16xbf16>
    %c80 = arith.constant 80 : index
    %c0_19 = arith.constant 0 : index
    %38 = vector.load %arg3[%c80, %c0_19] : memref<144x32xbf16, #tpu.memory_space<vmem>>, vector<16x32xbf16>
    %cst_20 = arith.constant dense<0.000000e+00> : vector<3x32xf32>
    %39 = tpu.matmul %37, %38, %cst_20 {dimension_numbers = #tpu.dot_dimension_numbers<[1], [0], [0], [1], [0, 0, 1, 1], [], []>} : vector<3x16xbf16>, vector<16x32xbf16>, vector<3x32xf32> -> vector<3x32xf32>
    %40 = arith.addf %35, %39 : vector<3x32xf32>
    %41 = vector.extract_strided_slice %8 {offsets = [42, 0], sizes = [3, 16], strides = [1, 1]} : vector<147x16xf32> to vector<3x16xf32>
    %42 = arith.truncf %41 : vector<3x16xf32> to vector<3x16xbf16>
    %c96 = arith.constant 96 : index
    %c0_21 = arith.constant 0 : index
    %43 = vector.load %arg3[%c96, %c0_21] : memref<144x32xbf16, #tpu.memory_space<vmem>>, vector<16x32xbf16>
    %cst_22 = arith.constant dense<0.000000e+00> : vector<3x32xf32>
    %44 = tpu.matmul %42, %43, %cst_22 {dimension_numbers = #tpu.dot_dimension_numbers<[1], [0], [0], [1], [0, 0, 1, 1], [], []>} : vector<3x16xbf16>, vector<16x32xbf16>, vector<3x32xf32> -> vector<3x32xf32>
    %45 = arith.addf %40, %44 : vector<3x32xf32>
    %46 = vector.extract_strided_slice %8 {offsets = [45, 0], sizes = [3, 16], strides = [1, 1]} : vector<147x16xf32> to vector<3x16xf32>
    %47 = arith.truncf %46 : vector<3x16xf32> to vector<3x16xbf16>
    %c112 = arith.constant 112 : index
    %c0_23 = arith.constant 0 : index
    %48 = vector.load %arg3[%c112, %c0_23] : memref<144x32xbf16, #tpu.memory_space<vmem>>, vector<16x32xbf16>
    %cst_24 = arith.constant dense<0.000000e+00> : vector<3x32xf32>
    %49 = tpu.matmul %47, %48, %cst_24 {dimension_numbers = #tpu.dot_dimension_numbers<[1], [0], [0], [1], [0, 0, 1, 1], [], []>} : vector<3x16xbf16>, vector<16x32xbf16>, vector<3x32xf32> -> vector<3x32xf32>
    %50 = arith.addf %45, %49 : vector<3x32xf32>
    %51 = vector.extract_strided_slice %8 {offsets = [48, 0], sizes = [3, 16], strides = [1, 1]} : vector<147x16xf32> to vector<3x16xf32>
    %52 = arith.truncf %51 : vector<3x16xf32> to vector<3x16xbf16>
    %c128 = arith.constant 128 : index
    %c0_25 = arith.constant 0 : index
    %53 = vector.load %arg3[%c128, %c0_25] : memref<144x32xbf16, #tpu.memory_space<vmem>>, vector<16x32xbf16>
    %cst_26 = arith.constant dense<0.000000e+00> : vector<3x32xf32>
    %54 = tpu.matmul %52, %53, %cst_26 {dimension_numbers = #tpu.dot_dimension_numbers<[1], [0], [0], [1], [0, 0, 1, 1], [], []>} : vector<3x16xbf16>, vector<16x32xbf16>, vector<3x32xf32> -> vector<3x32xf32>
    %55 = arith.addf %50, %54 : vector<3x32xf32>
    %c0_27 = arith.constant 0 : index
    %c0_28 = arith.constant 0 : index
    %56 = vector.load %arg4[%c0_27, %c0_28] : memref<1x32xf32, #tpu.memory_space<vmem>>, vector<1x32xf32>
    %57 = vector.broadcast %56 : vector<1x32xf32> to vector<3x32xf32>
    %58 = arith.addf %55, %57 : vector<3x32xf32>
    %cst_29 = arith.constant 0.000000e+00 : f32
    %59 = vector.broadcast %cst_29 : f32 to vector<3x32xf32>
    %60 = arith.maximumf %58, %59 : vector<3x32xf32>
    %61 = arith.truncf %60 : vector<3x32xf32> to vector<3x32xbf16>
    %c0_30 = arith.constant 0 : index
    %c0_31 = arith.constant 0 : index
    %62 = vector.load %arg5[%c0_30, %c0_31] : memref<288x128xbf16, #tpu.memory_space<vmem>>, vector<32x128xbf16>
    %cst_32 = arith.constant dense<0.000000e+00> : vector<3x128xf32>
    %63 = tpu.matmul %61, %62, %cst_32 {dimension_numbers = #tpu.dot_dimension_numbers<[1], [0], [0], [1], [0, 0, 1, 1], [], []>} : vector<3x32xbf16>, vector<32x128xbf16>, vector<3x128xf32> -> vector<3x128xf32>
    %64 = arith.addf %9, %63 : vector<3x128xf32>
    %cst_33 = arith.constant 0.000000e+00 : f32
    %65 = vector.broadcast %cst_33 : f32 to vector<3x32xf32>
    %66 = vector.extract_strided_slice %8 {offsets = [6, 0], sizes = [3, 16], strides = [1, 1]} : vector<147x16xf32> to vector<3x16xf32>
    %67 = arith.truncf %66 : vector<3x16xf32> to vector<3x16xbf16>
    %c0_34 = arith.constant 0 : index
    %c0_35 = arith.constant 0 : index
    %68 = vector.load %arg3[%c0_34, %c0_35] : memref<144x32xbf16, #tpu.memory_space<vmem>>, vector<16x32xbf16>
    %cst_36 = arith.constant dense<0.000000e+00> : vector<3x32xf32>
    %69 = tpu.matmul %67, %68, %cst_36 {dimension_numbers = #tpu.dot_dimension_numbers<[1], [0], [0], [1], [0, 0, 1, 1], [], []>} : vector<3x16xbf16>, vector<16x32xbf16>, vector<3x32xf32> -> vector<3x32xf32>
    %70 = arith.addf %65, %69 : vector<3x32xf32>
    %71 = vector.extract_strided_slice %8 {offsets = [9, 0], sizes = [3, 16], strides = [1, 1]} : vector<147x16xf32> to vector<3x16xf32>
    %72 = arith.truncf %71 : vector<3x16xf32> to vector<3x16xbf16>
    %c16_37 = arith.constant 16 : index
    %c0_38 = arith.constant 0 : index
    %73 = vector.load %arg3[%c16_37, %c0_38] : memref<144x32xbf16, #tpu.memory_space<vmem>>, vector<16x32xbf16>
    %cst_39 = arith.constant dense<0.000000e+00> : vector<3x32xf32>
    %74 = tpu.matmul %72, %73, %cst_39 {dimension_numbers = #tpu.dot_dimension_numbers<[1], [0], [0], [1], [0, 0, 1, 1], [], []>} : vector<3x16xbf16>, vector<16x32xbf16>, vector<3x32xf32> -> vector<3x32xf32>
    %75 = arith.addf %70, %74 : vector<3x32xf32>
    %76 = vector.extract_strided_slice %8 {offsets = [12, 0], sizes = [3, 16], strides = [1, 1]} : vector<147x16xf32> to vector<3x16xf32>
    %77 = arith.truncf %76 : vector<3x16xf32> to vector<3x16xbf16>
    %c32_40 = arith.constant 32 : index
    %c0_41 = arith.constant 0 : index
    %78 = vector.load %arg3[%c32_40, %c0_41] : memref<144x32xbf16, #tpu.memory_space<vmem>>, vector<16x32xbf16>
    %cst_42 = arith.constant dense<0.000000e+00> : vector<3x32xf32>
    %79 = tpu.matmul %77, %78, %cst_42 {dimension_numbers = #tpu.dot_dimension_numbers<[1], [0], [0], [1], [0, 0, 1, 1], [], []>} : vector<3x16xbf16>, vector<16x32xbf16>, vector<3x32xf32> -> vector<3x32xf32>
    %80 = arith.addf %75, %79 : vector<3x32xf32>
    %81 = vector.extract_strided_slice %8 {offsets = [27, 0], sizes = [3, 16], strides = [1, 1]} : vector<147x16xf32> to vector<3x16xf32>
    %82 = arith.truncf %81 : vector<3x16xf32> to vector<3x16xbf16>
    %c48_43 = arith.constant 48 : index
    %c0_44 = arith.constant 0 : index
    %83 = vector.load %arg3[%c48_43, %c0_44] : memref<144x32xbf16, #tpu.memory_space<vmem>>, vector<16x32xbf16>
    %cst_45 = arith.constant dense<0.000000e+00> : vector<3x32xf32>
    %84 = tpu.matmul %82, %83, %cst_45 {dimension_numbers = #tpu.dot_dimension_numbers<[1], [0], [0], [1], [0, 0, 1, 1], [], []>} : vector<3x16xbf16>, vector<16x32xbf16>, vector<3x32xf32> -> vector<3x32xf32>
    %85 = arith.addf %80, %84 : vector<3x32xf32>
    %86 = vector.extract_strided_slice %8 {offsets = [30, 0], sizes = [3, 16], strides = [1, 1]} : vector<147x16xf32> to vector<3x16xf32>
    %87 = arith.truncf %86 : vector<3x16xf32> to vector<3x16xbf16>
    %c64_46 = arith.constant 64 : index
    %c0_47 = arith.constant 0 : index
    %88 = vector.load %arg3[%c64_46, %c0_47] : memref<144x32xbf16, #tpu.memory_space<vmem>>, vector<16x32xbf16>
    %cst_48 = arith.constant dense<0.000000e+00> : vector<3x32xf32>
    %89 = tpu.matmul %87, %88, %cst_48 {dimension_numbers = #tpu.dot_dimension_numbers<[1], [0], [0], [1], [0, 0, 1, 1], [], []>} : vector<3x16xbf16>, vector<16x32xbf16>, vector<3x32xf32> -> vector<3x32xf32>
    %90 = arith.addf %85, %89 : vector<3x32xf32>
    %91 = vector.extract_strided_slice %8 {offsets = [33, 0], sizes = [3, 16], strides = [1, 1]} : vector<147x16xf32> to vector<3x16xf32>
    %92 = arith.truncf %91 : vector<3x16xf32> to vector<3x16xbf16>
    %c80_49 = arith.constant 80 : index
    %c0_50 = arith.constant 0 : index
    %93 = vector.load %arg3[%c80_49, %c0_50] : memref<144x32xbf16, #tpu.memory_space<vmem>>, vector<16x32xbf16>
    %cst_51 = arith.constant dense<0.000000e+00> : vector<3x32xf32>
    %94 = tpu.matmul %92, %93, %cst_51 {dimension_numbers = #tpu.dot_dimension_numbers<[1], [0], [0], [1], [0, 0, 1, 1], [], []>} : vector<3x16xbf16>, vector<16x32xbf16>, vector<3x32xf32> -> vector<3x32xf32>
    %95 = arith.addf %90, %94 : vector<3x32xf32>
    %96 = vector.extract_strided_slice %8 {offsets = [48, 0], sizes = [3, 16], strides = [1, 1]} : vector<147x16xf32> to vector<3x16xf32>
    %97 = arith.truncf %96 : vector<3x16xf32> to vector<3x16xbf16>
    %c96_52 = arith.constant 96 : index
    %c0_53 = arith.constant 0 : index
    %98 = vector.load %arg3[%c96_52, %c0_53] : memref<144x32xbf16, #tpu.memory_space<vmem>>, vector<16x32xbf16>
    %cst_54 = arith.constant dense<0.000000e+00> : vector<3x32xf32>
    %99 = tpu.matmul %97, %98, %cst_54 {dimension_numbers = #tpu.dot_dimension_numbers<[1], [0], [0], [1], [0, 0, 1, 1], [], []>} : vector<3x16xbf16>, vector<16x32xbf16>, vector<3x32xf32> -> vector<3x32xf32>
    %100 = arith.addf %95, %99 : vector<3x32xf32>
    %101 = vector.extract_strided_slice %8 {offsets = [51, 0], sizes = [3, 16], strides = [1, 1]} : vector<147x16xf32> to vector<3x16xf32>
    %102 = arith.truncf %101 : vector<3x16xf32> to vector<3x16xbf16>
    %c112_55 = arith.constant 112 : index
    %c0_56 = arith.constant 0 : index
    %103 = vector.load %arg3[%c112_55, %c0_56] : memref<144x32xbf16, #tpu.memory_space<vmem>>, vector<16x32xbf16>
    %cst_57 = arith.constant dense<0.000000e+00> : vector<3x32xf32>
    %104 = tpu.matmul %102, %103, %cst_57 {dimension_numbers = #tpu.dot_dimension_numbers<[1], [0], [0], [1], [0, 0, 1, 1], [], []>} : vector<3x16xbf16>, vector<16x32xbf16>, vector<3x32xf32> -> vector<3x32xf32>
    %105 = arith.addf %100, %104 : vector<3x32xf32>
    %106 = vector.extract_strided_slice %8 {offsets = [54, 0], sizes = [3, 16], strides = [1, 1]} : vector<147x16xf32> to vector<3x16xf32>
    %107 = arith.truncf %106 : vector<3x16xf32> to vector<3x16xbf16>
    %c128_58 = arith.constant 128 : index
    %c0_59 = arith.constant 0 : index
    %108 = vector.load %arg3[%c128_58, %c0_59] : memref<144x32xbf16, #tpu.memory_space<vmem>>, vector<16x32xbf16>
    %cst_60 = arith.constant dense<0.000000e+00> : vector<3x32xf32>
    %109 = tpu.matmul %107, %108, %cst_60 {dimension_numbers = #tpu.dot_dimension_numbers<[1], [0], [0], [1], [0, 0, 1, 1], [], []>} : vector<3x16xbf16>, vector<16x32xbf16>, vector<3x32xf32> -> vector<3x32xf32>
    %110 = arith.addf %105, %109 : vector<3x32xf32>
    %c0_61 = arith.constant 0 : index
    %c0_62 = arith.constant 0 : index
    %111 = vector.load %arg4[%c0_61, %c0_62] : memref<1x32xf32, #tpu.memory_space<vmem>>, vector<1x32xf32>
    %112 = vector.broadcast %111 : vector<1x32xf32> to vector<3x32xf32>
    %113 = arith.addf %110, %112 : vector<3x32xf32>
    %cst_63 = arith.constant 0.000000e+00 : f32
    %114 = vector.broadcast %cst_63 : f32 to vector<3x32xf32>
    %115 = arith.maximumf %113, %114 : vector<3x32xf32>
    %116 = arith.truncf %115 : vector<3x32xf32> to vector<3x32xbf16>
    %c32_64 = arith.constant 32 : index
    %c0_65 = arith.constant 0 : index
    %117 = vector.load %arg5[%c32_64, %c0_65] : memref<288x128xbf16, #tpu.memory_space<vmem>>, vector<32x128xbf16>
    %cst_66 = arith.constant dense<0.000000e+00> : vector<3x128xf32>
    %118 = tpu.matmul %116, %117, %cst_66 {dimension_numbers = #tpu.dot_dimension_numbers<[1], [0], [0], [1], [0, 0, 1, 1], [], []>} : vector<3x32xbf16>, vector<32x128xbf16>, vector<3x128xf32> -> vector<3x128xf32>
    %119 = arith.addf %64, %118 : vector<3x128xf32>
    %cst_67 = arith.constant 0.000000e+00 : f32
    %120 = vector.broadcast %cst_67 : f32 to vector<3x32xf32>
    %121 = vector.extract_strided_slice %8 {offsets = [12, 0], sizes = [3, 16], strides = [1, 1]} : vector<147x16xf32> to vector<3x16xf32>
    %122 = arith.truncf %121 : vector<3x16xf32> to vector<3x16xbf16>
    %c0_68 = arith.constant 0 : index
    %c0_69 = arith.constant 0 : index
    %123 = vector.load %arg3[%c0_68, %c0_69] : memref<144x32xbf16, #tpu.memory_space<vmem>>, vector<16x32xbf16>
    %cst_70 = arith.constant dense<0.000000e+00> : vector<3x32xf32>
    %124 = tpu.matmul %122, %123, %cst_70 {dimension_numbers = #tpu.dot_dimension_numbers<[1], [0], [0], [1], [0, 0, 1, 1], [], []>} : vector<3x16xbf16>, vector<16x32xbf16>, vector<3x32xf32> -> vector<3x32xf32>
    %125 = arith.addf %120, %124 : vector<3x32xf32>
    %126 = vector.extract_strided_slice %8 {offsets = [15, 0], sizes = [3, 16], strides = [1, 1]} : vector<147x16xf32> to vector<3x16xf32>
    %127 = arith.truncf %126 : vector<3x16xf32> to vector<3x16xbf16>
    %c16_71 = arith.constant 16 : index
    %c0_72 = arith.constant 0 : index
    %128 = vector.load %arg3[%c16_71, %c0_72] : memref<144x32xbf16, #tpu.memory_space<vmem>>, vector<16x32xbf16>
    %cst_73 = arith.constant dense<0.000000e+00> : vector<3x32xf32>
    %129 = tpu.matmul %127, %128, %cst_73 {dimension_numbers = #tpu.dot_dimension_numbers<[1], [0], [0], [1], [0, 0, 1, 1], [], []>} : vector<3x16xbf16>, vector<16x32xbf16>, vector<3x32xf32> -> vector<3x32xf32>
    %130 = arith.addf %125, %129 : vector<3x32xf32>
    %131 = vector.extract_strided_slice %8 {offsets = [18, 0], sizes = [3, 16], strides = [1, 1]} : vector<147x16xf32> to vector<3x16xf32>
    %132 = arith.truncf %131 : vector<3x16xf32> to vector<3x16xbf16>
    %c32_74 = arith.constant 32 : index
    %c0_75 = arith.constant 0 : index
    %133 = vector.load %arg3[%c32_74, %c0_75] : memref<144x32xbf16, #tpu.memory_space<vmem>>, vector<16x32xbf16>
    %cst_76 = arith.constant dense<0.000000e+00> : vector<3x32xf32>
    %134 = tpu.matmul %132, %133, %cst_76 {dimension_numbers = #tpu.dot_dimension_numbers<[1], [0], [0], [1], [0, 0, 1, 1], [], []>} : vector<3x16xbf16>, vector<16x32xbf16>, vector<3x32xf32> -> vector<3x32xf32>
    %135 = arith.addf %130, %134 : vector<3x32xf32>
    %136 = vector.extract_strided_slice %8 {offsets = [33, 0], sizes = [3, 16], strides = [1, 1]} : vector<147x16xf32> to vector<3x16xf32>
    %137 = arith.truncf %136 : vector<3x16xf32> to vector<3x16xbf16>
    %c48_77 = arith.constant 48 : index
    %c0_78 = arith.constant 0 : index
    %138 = vector.load %arg3[%c48_77, %c0_78] : memref<144x32xbf16, #tpu.memory_space<vmem>>, vector<16x32xbf16>
    %cst_79 = arith.constant dense<0.000000e+00> : vector<3x32xf32>
    %139 = tpu.matmul %137, %138, %cst_79 {dimension_numbers = #tpu.dot_dimension_numbers<[1], [0], [0], [1], [0, 0, 1, 1], [], []>} : vector<3x16xbf16>, vector<16x32xbf16>, vector<3x32xf32> -> vector<3x32xf32>
    %140 = arith.addf %135, %139 : vector<3x32xf32>
    %141 = vector.extract_strided_slice %8 {offsets = [36, 0], sizes = [3, 16], strides = [1, 1]} : vector<147x16xf32> to vector<3x16xf32>
    %142 = arith.truncf %141 : vector<3x16xf32> to vector<3x16xbf16>
    %c64_80 = arith.constant 64 : index
    %c0_81 = arith.constant 0 : index
    %143 = vector.load %arg3[%c64_80, %c0_81] : memref<144x32xbf16, #tpu.memory_space<vmem>>, vector<16x32xbf16>
    %cst_82 = arith.constant dense<0.000000e+00> : vector<3x32xf32>
    %144 = tpu.matmul %142, %143, %cst_82 {dimension_numbers = #tpu.dot_dimension_numbers<[1], [0], [0], [1], [0, 0, 1, 1], [], []>} : vector<3x16xbf16>, vector<16x32xbf16>, vector<3x32xf32> -> vector<3x32xf32>
    %145 = arith.addf %140, %144 : vector<3x32xf32>
    %146 = vector.extract_strided_slice %8 {offsets = [39, 0], sizes = [3, 16], strides = [1, 1]} : vector<147x16xf32> to vector<3x16xf32>
    %147 = arith.truncf %146 : vector<3x16xf32> to vector<3x16xbf16>
    %c80_83 = arith.constant 80 : index
    %c0_84 = arith.constant 0 : index
    %148 = vector.load %arg3[%c80_83, %c0_84] : memref<144x32xbf16, #tpu.memory_space<vmem>>, vector<16x32xbf16>
    %cst_85 = arith.constant dense<0.000000e+00> : vector<3x32xf32>
    %149 = tpu.matmul %147, %148, %cst_85 {dimension_numbers = #tpu.dot_dimension_numbers<[1], [0], [0], [1], [0, 0, 1, 1], [], []>} : vector<3x16xbf16>, vector<16x32xbf16>, vector<3x32xf32> -> vector<3x32xf32>
    %150 = arith.addf %145, %149 : vector<3x32xf32>
    %151 = vector.extract_strided_slice %8 {offsets = [54, 0], sizes = [3, 16], strides = [1, 1]} : vector<147x16xf32> to vector<3x16xf32>
    %152 = arith.truncf %151 : vector<3x16xf32> to vector<3x16xbf16>
    %c96_86 = arith.constant 96 : index
    %c0_87 = arith.constant 0 : index
    %153 = vector.load %arg3[%c96_86, %c0_87] : memref<144x32xbf16, #tpu.memory_space<vmem>>, vector<16x32xbf16>
    %cst_88 = arith.constant dense<0.000000e+00> : vector<3x32xf32>
    %154 = tpu.matmul %152, %153, %cst_88 {dimension_numbers = #tpu.dot_dimension_numbers<[1], [0], [0], [1], [0, 0, 1, 1], [], []>} : vector<3x16xbf16>, vector<16x32xbf16>, vector<3x32xf32> -> vector<3x32xf32>
    %155 = arith.addf %150, %154 : vector<3x32xf32>
    %156 = vector.extract_strided_slice %8 {offsets = [57, 0], sizes = [3, 16], strides = [1, 1]} : vector<147x16xf32> to vector<3x16xf32>
    %157 = arith.truncf %156 : vector<3x16xf32> to vector<3x16xbf16>
    %c112_89 = arith.constant 112 : index
    %c0_90 = arith.constant 0 : index
    %158 = vector.load %arg3[%c112_89, %c0_90] : memref<144x32xbf16, #tpu.memory_space<vmem>>, vector<16x32xbf16>
    %cst_91 = arith.constant dense<0.000000e+00> : vector<3x32xf32>
    %159 = tpu.matmul %157, %158, %cst_91 {dimension_numbers = #tpu.dot_dimension_numbers<[1], [0], [0], [1], [0, 0, 1, 1], [], []>} : vector<3x16xbf16>, vector<16x32xbf16>, vector<3x32xf32> -> vector<3x32xf32>
    %160 = arith.addf %155, %159 : vector<3x32xf32>
    %161 = vector.extract_strided_slice %8 {offsets = [60, 0], sizes = [3, 16], strides = [1, 1]} : vector<147x16xf32> to vector<3x16xf32>
    %162 = arith.truncf %161 : vector<3x16xf32> to vector<3x16xbf16>
    %c128_92 = arith.constant 128 : index
    %c0_93 = arith.constant 0 : index
    %163 = vector.load %arg3[%c128_92, %c0_93] : memref<144x32xbf16, #tpu.memory_space<vmem>>, vector<16x32xbf16>
    %cst_94 = arith.constant dense<0.000000e+00> : vector<3x32xf32>
    %164 = tpu.matmul %162, %163, %cst_94 {dimension_numbers = #tpu.dot_dimension_numbers<[1], [0], [0], [1], [0, 0, 1, 1], [], []>} : vector<3x16xbf16>, vector<16x32xbf16>, vector<3x32xf32> -> vector<3x32xf32>
    %165 = arith.addf %160, %164 : vector<3x32xf32>
    %c0_95 = arith.constant 0 : index
    %c0_96 = arith.constant 0 : index
    %166 = vector.load %arg4[%c0_95, %c0_96] : memref<1x32xf32, #tpu.memory_space<vmem>>, vector<1x32xf32>
    %167 = vector.broadcast %166 : vector<1x32xf32> to vector<3x32xf32>
    %168 = arith.addf %165, %167 : vector<3x32xf32>
    %cst_97 = arith.constant 0.000000e+00 : f32
    %169 = vector.broadcast %cst_97 : f32 to vector<3x32xf32>
    %170 = arith.maximumf %168, %169 : vector<3x32xf32>
    %171 = arith.truncf %170 : vector<3x32xf32> to vector<3x32xbf16>
    %c64_98 = arith.constant 64 : index
    %c0_99 = arith.constant 0 : index
    %172 = vector.load %arg5[%c64_98, %c0_99] : memref<288x128xbf16, #tpu.memory_space<vmem>>, vector<32x128xbf16>
    %cst_100 = arith.constant dense<0.000000e+00> : vector<3x128xf32>
    %173 = tpu.matmul %171, %172, %cst_100 {dimension_numbers = #tpu.dot_dimension_numbers<[1], [0], [0], [1], [0, 0, 1, 1], [], []>} : vector<3x32xbf16>, vector<32x128xbf16>, vector<3x128xf32> -> vector<3x128xf32>
    %174 = arith.addf %119, %173 : vector<3x128xf32>
    %cst_101 = arith.constant 0.000000e+00 : f32
    %175 = vector.broadcast %cst_101 : f32 to vector<3x32xf32>
    %176 = vector.extract_strided_slice %8 {offsets = [42, 0], sizes = [3, 16], strides = [1, 1]} : vector<147x16xf32> to vector<3x16xf32>
    %177 = arith.truncf %176 : vector<3x16xf32> to vector<3x16xbf16>
    %c0_102 = arith.constant 0 : index
    %c0_103 = arith.constant 0 : index
    %178 = vector.load %arg3[%c0_102, %c0_103] : memref<144x32xbf16, #tpu.memory_space<vmem>>, vector<16x32xbf16>
    %cst_104 = arith.constant dense<0.000000e+00> : vector<3x32xf32>
    %179 = tpu.matmul %177, %178, %cst_104 {dimension_numbers = #tpu.dot_dimension_numbers<[1], [0], [0], [1], [0, 0, 1, 1], [], []>} : vector<3x16xbf16>, vector<16x32xbf16>, vector<3x32xf32> -> vector<3x32xf32>
    %180 = arith.addf %175, %179 : vector<3x32xf32>
    %181 = vector.extract_strided_slice %8 {offsets = [45, 0], sizes = [3, 16], strides = [1, 1]} : vector<147x16xf32> to vector<3x16xf32>
    %182 = arith.truncf %181 : vector<3x16xf32> to vector<3x16xbf16>
    %c16_105 = arith.constant 16 : index
    %c0_106 = arith.constant 0 : index
    %183 = vector.load %arg3[%c16_105, %c0_106] : memref<144x32xbf16, #tpu.memory_space<vmem>>, vector<16x32xbf16>
    %cst_107 = arith.constant dense<0.000000e+00> : vector<3x32xf32>
    %184 = tpu.matmul %182, %183, %cst_107 {dimension_numbers = #tpu.dot_dimension_numbers<[1], [0], [0], [1], [0, 0, 1, 1], [], []>} : vector<3x16xbf16>, vector<16x32xbf16>, vector<3x32xf32> -> vector<3x32xf32>
    %185 = arith.addf %180, %184 : vector<3x32xf32>
    %186 = vector.extract_strided_slice %8 {offsets = [48, 0], sizes = [3, 16], strides = [1, 1]} : vector<147x16xf32> to vector<3x16xf32>
    %187 = arith.truncf %186 : vector<3x16xf32> to vector<3x16xbf16>
    %c32_108 = arith.constant 32 : index
    %c0_109 = arith.constant 0 : index
    %188 = vector.load %arg3[%c32_108, %c0_109] : memref<144x32xbf16, #tpu.memory_space<vmem>>, vector<16x32xbf16>
    %cst_110 = arith.constant dense<0.000000e+00> : vector<3x32xf32>
    %189 = tpu.matmul %187, %188, %cst_110 {dimension_numbers = #tpu.dot_dimension_numbers<[1], [0], [0], [1], [0, 0, 1, 1], [], []>} : vector<3x16xbf16>, vector<16x32xbf16>, vector<3x32xf32> -> vector<3x32xf32>
    %190 = arith.addf %185, %189 : vector<3x32xf32>
    %191 = vector.extract_strided_slice %8 {offsets = [63, 0], sizes = [3, 16], strides = [1, 1]} : vector<147x16xf32> to vector<3x16xf32>
    %192 = arith.truncf %191 : vector<3x16xf32> to vector<3x16xbf16>
    %c48_111 = arith.constant 48 : index
    %c0_112 = arith.constant 0 : index
    %193 = vector.load %arg3[%c48_111, %c0_112] : memref<144x32xbf16, #tpu.memory_space<vmem>>, vector<16x32xbf16>
    %cst_113 = arith.constant dense<0.000000e+00> : vector<3x32xf32>
    %194 = tpu.matmul %192, %193, %cst_113 {dimension_numbers = #tpu.dot_dimension_numbers<[1], [0], [0], [1], [0, 0, 1, 1], [], []>} : vector<3x16xbf16>, vector<16x32xbf16>, vector<3x32xf32> -> vector<3x32xf32>
    %195 = arith.addf %190, %194 : vector<3x32xf32>
    %196 = vector.extract_strided_slice %8 {offsets = [66, 0], sizes = [3, 16], strides = [1, 1]} : vector<147x16xf32> to vector<3x16xf32>
    %197 = arith.truncf %196 : vector<3x16xf32> to vector<3x16xbf16>
    %c64_114 = arith.constant 64 : index
    %c0_115 = arith.constant 0 : index
    %198 = vector.load %arg3[%c64_114, %c0_115] : memref<144x32xbf16, #tpu.memory_space<vmem>>, vector<16x32xbf16>
    %cst_116 = arith.constant dense<0.000000e+00> : vector<3x32xf32>
    %199 = tpu.matmul %197, %198, %cst_116 {dimension_numbers = #tpu.dot_dimension_numbers<[1], [0], [0], [1], [0, 0, 1, 1], [], []>} : vector<3x16xbf16>, vector<16x32xbf16>, vector<3x32xf32> -> vector<3x32xf32>
    %200 = arith.addf %195, %199 : vector<3x32xf32>
    %201 = vector.extract_strided_slice %8 {offsets = [69, 0], sizes = [3, 16], strides = [1, 1]} : vector<147x16xf32> to vector<3x16xf32>
    %202 = arith.truncf %201 : vector<3x16xf32> to vector<3x16xbf16>
    %c80_117 = arith.constant 80 : index
    %c0_118 = arith.constant 0 : index
    %203 = vector.load %arg3[%c80_117, %c0_118] : memref<144x32xbf16, #tpu.memory_space<vmem>>, vector<16x32xbf16>
    %cst_119 = arith.constant dense<0.000000e+00> : vector<3x32xf32>
    %204 = tpu.matmul %202, %203, %cst_119 {dimension_numbers = #tpu.dot_dimension_numbers<[1], [0], [0], [1], [0, 0, 1, 1], [], []>} : vector<3x16xbf16>, vector<16x32xbf16>, vector<3x32xf32> -> vector<3x32xf32>
    %205 = arith.addf %200, %204 : vector<3x32xf32>
    %206 = vector.extract_strided_slice %8 {offsets = [84, 0], sizes = [3, 16], strides = [1, 1]} : vector<147x16xf32> to vector<3x16xf32>
    %207 = arith.truncf %206 : vector<3x16xf32> to vector<3x16xbf16>
    %c96_120 = arith.constant 96 : index
    %c0_121 = arith.constant 0 : index
    %208 = vector.load %arg3[%c96_120, %c0_121] : memref<144x32xbf16, #tpu.memory_space<vmem>>, vector<16x32xbf16>
    %cst_122 = arith.constant dense<0.000000e+00> : vector<3x32xf32>
    %209 = tpu.matmul %207, %208, %cst_122 {dimension_numbers = #tpu.dot_dimension_numbers<[1], [0], [0], [1], [0, 0, 1, 1], [], []>} : vector<3x16xbf16>, vector<16x32xbf16>, vector<3x32xf32> -> vector<3x32xf32>
    %210 = arith.addf %205, %209 : vector<3x32xf32>
    %211 = vector.extract_strided_slice %8 {offsets = [87, 0], sizes = [3, 16], strides = [1, 1]} : vector<147x16xf32> to vector<3x16xf32>
    %212 = arith.truncf %211 : vector<3x16xf32> to vector<3x16xbf16>
    %c112_123 = arith.constant 112 : index
    %c0_124 = arith.constant 0 : index
    %213 = vector.load %arg3[%c112_123, %c0_124] : memref<144x32xbf16, #tpu.memory_space<vmem>>, vector<16x32xbf16>
    %cst_125 = arith.constant dense<0.000000e+00> : vector<3x32xf32>
    %214 = tpu.matmul %212, %213, %cst_125 {dimension_numbers = #tpu.dot_dimension_numbers<[1], [0], [0], [1], [0, 0, 1, 1], [], []>} : vector<3x16xbf16>, vector<16x32xbf16>, vector<3x32xf32> -> vector<3x32xf32>
    %215 = arith.addf %210, %214 : vector<3x32xf32>
    %216 = vector.extract_strided_slice %8 {offsets = [90, 0], sizes = [3, 16], strides = [1, 1]} : vector<147x16xf32> to vector<3x16xf32>
    %217 = arith.truncf %216 : vector<3x16xf32> to vector<3x16xbf16>
    %c128_126 = arith.constant 128 : index
    %c0_127 = arith.constant 0 : index
    %218 = vector.load %arg3[%c128_126, %c0_127] : memref<144x32xbf16, #tpu.memory_space<vmem>>, vector<16x32xbf16>
    %cst_128 = arith.constant dense<0.000000e+00> : vector<3x32xf32>
    %219 = tpu.matmul %217, %218, %cst_128 {dimension_numbers = #tpu.dot_dimension_numbers<[1], [0], [0], [1], [0, 0, 1, 1], [], []>} : vector<3x16xbf16>, vector<16x32xbf16>, vector<3x32xf32> -> vector<3x32xf32>
    %220 = arith.addf %215, %219 : vector<3x32xf32>
    %c0_129 = arith.constant 0 : index
    %c0_130 = arith.constant 0 : index
    %221 = vector.load %arg4[%c0_129, %c0_130] : memref<1x32xf32, #tpu.memory_space<vmem>>, vector<1x32xf32>
    %222 = vector.broadcast %221 : vector<1x32xf32> to vector<3x32xf32>
    %223 = arith.addf %220, %222 : vector<3x32xf32>
    %cst_131 = arith.constant 0.000000e+00 : f32
    %224 = vector.broadcast %cst_131 : f32 to vector<3x32xf32>
    %225 = arith.maximumf %223, %224 : vector<3x32xf32>
    %226 = arith.truncf %225 : vector<3x32xf32> to vector<3x32xbf16>
    %c96_132 = arith.constant 96 : index
    %c0_133 = arith.constant 0 : index
    %227 = vector.load %arg5[%c96_132, %c0_133] : memref<288x128xbf16, #tpu.memory_space<vmem>>, vector<32x128xbf16>
    %cst_134 = arith.constant dense<0.000000e+00> : vector<3x128xf32>
    %228 = tpu.matmul %226, %227, %cst_134 {dimension_numbers = #tpu.dot_dimension_numbers<[1], [0], [0], [1], [0, 0, 1, 1], [], []>} : vector<3x32xbf16>, vector<32x128xbf16>, vector<3x128xf32> -> vector<3x128xf32>
    %229 = arith.addf %174, %228 : vector<3x128xf32>
    %cst_135 = arith.constant 0.000000e+00 : f32
    %230 = vector.broadcast %cst_135 : f32 to vector<3x32xf32>
    %231 = vector.extract_strided_slice %8 {offsets = [48, 0], sizes = [3, 16], strides = [1, 1]} : vector<147x16xf32> to vector<3x16xf32>
    %232 = arith.truncf %231 : vector<3x16xf32> to vector<3x16xbf16>
    %c0_136 = arith.constant 0 : index
    %c0_137 = arith.constant 0 : index
    %233 = vector.load %arg3[%c0_136, %c0_137] : memref<144x32xbf16, #tpu.memory_space<vmem>>, vector<16x32xbf16>
    %cst_138 = arith.constant dense<0.000000e+00> : vector<3x32xf32>
    %234 = tpu.matmul %232, %233, %cst_138 {dimension_numbers = #tpu.dot_dimension_numbers<[1], [0], [0], [1], [0, 0, 1, 1], [], []>} : vector<3x16xbf16>, vector<16x32xbf16>, vector<3x32xf32> -> vector<3x32xf32>
    %235 = arith.addf %230, %234 : vector<3x32xf32>
    %236 = vector.extract_strided_slice %8 {offsets = [51, 0], sizes = [3, 16], strides = [1, 1]} : vector<147x16xf32> to vector<3x16xf32>
    %237 = arith.truncf %236 : vector<3x16xf32> to vector<3x16xbf16>
    %c16_139 = arith.constant 16 : index
    %c0_140 = arith.constant 0 : index
    %238 = vector.load %arg3[%c16_139, %c0_140] : memref<144x32xbf16, #tpu.memory_space<vmem>>, vector<16x32xbf16>
    %cst_141 = arith.constant dense<0.000000e+00> : vector<3x32xf32>
    %239 = tpu.matmul %237, %238, %cst_141 {dimension_numbers = #tpu.dot_dimension_numbers<[1], [0], [0], [1], [0, 0, 1, 1], [], []>} : vector<3x16xbf16>, vector<16x32xbf16>, vector<3x32xf32> -> vector<3x32xf32>
    %240 = arith.addf %235, %239 : vector<3x32xf32>
    %241 = vector.extract_strided_slice %8 {offsets = [54, 0], sizes = [3, 16], strides = [1, 1]} : vector<147x16xf32> to vector<3x16xf32>
    %242 = arith.truncf %241 : vector<3x16xf32> to vector<3x16xbf16>
    %c32_142 = arith.constant 32 : index
    %c0_143 = arith.constant 0 : index
    %243 = vector.load %arg3[%c32_142, %c0_143] : memref<144x32xbf16, #tpu.memory_space<vmem>>, vector<16x32xbf16>
    %cst_144 = arith.constant dense<0.000000e+00> : vector<3x32xf32>
    %244 = tpu.matmul %242, %243, %cst_144 {dimension_numbers = #tpu.dot_dimension_numbers<[1], [0], [0], [1], [0, 0, 1, 1], [], []>} : vector<3x16xbf16>, vector<16x32xbf16>, vector<3x32xf32> -> vector<3x32xf32>
    %245 = arith.addf %240, %244 : vector<3x32xf32>
    %246 = vector.extract_strided_slice %8 {offsets = [69, 0], sizes = [3, 16], strides = [1, 1]} : vector<147x16xf32> to vector<3x16xf32>
    %247 = arith.truncf %246 : vector<3x16xf32> to vector<3x16xbf16>
    %c48_145 = arith.constant 48 : index
    %c0_146 = arith.constant 0 : index
    %248 = vector.load %arg3[%c48_145, %c0_146] : memref<144x32xbf16, #tpu.memory_space<vmem>>, vector<16x32xbf16>
    %cst_147 = arith.constant dense<0.000000e+00> : vector<3x32xf32>
    %249 = tpu.matmul %247, %248, %cst_147 {dimension_numbers = #tpu.dot_dimension_numbers<[1], [0], [0], [1], [0, 0, 1, 1], [], []>} : vector<3x16xbf16>, vector<16x32xbf16>, vector<3x32xf32> -> vector<3x32xf32>
    %250 = arith.addf %245, %249 : vector<3x32xf32>
    %251 = vector.extract_strided_slice %8 {offsets = [72, 0], sizes = [3, 16], strides = [1, 1]} : vector<147x16xf32> to vector<3x16xf32>
    %252 = arith.truncf %251 : vector<3x16xf32> to vector<3x16xbf16>
    %c64_148 = arith.constant 64 : index
    %c0_149 = arith.constant 0 : index
    %253 = vector.load %arg3[%c64_148, %c0_149] : memref<144x32xbf16, #tpu.memory_space<vmem>>, vector<16x32xbf16>
    %cst_150 = arith.constant dense<0.000000e+00> : vector<3x32xf32>
    %254 = tpu.matmul %252, %253, %cst_150 {dimension_numbers = #tpu.dot_dimension_numbers<[1], [0], [0], [1], [0, 0, 1, 1], [], []>} : vector<3x16xbf16>, vector<16x32xbf16>, vector<3x32xf32> -> vector<3x32xf32>
    %255 = arith.addf %250, %254 : vector<3x32xf32>
    %256 = vector.extract_strided_slice %8 {offsets = [75, 0], sizes = [3, 16], strides = [1, 1]} : vector<147x16xf32> to vector<3x16xf32>
    %257 = arith.truncf %256 : vector<3x16xf32> to vector<3x16xbf16>
    %c80_151 = arith.constant 80 : index
    %c0_152 = arith.constant 0 : index
    %258 = vector.load %arg3[%c80_151, %c0_152] : memref<144x32xbf16, #tpu.memory_space<vmem>>, vector<16x32xbf16>
    %cst_153 = arith.constant dense<0.000000e+00> : vector<3x32xf32>
    %259 = tpu.matmul %257, %258, %cst_153 {dimension_numbers = #tpu.dot_dimension_numbers<[1], [0], [0], [1], [0, 0, 1, 1], [], []>} : vector<3x16xbf16>, vector<16x32xbf16>, vector<3x32xf32> -> vector<3x32xf32>
    %260 = arith.addf %255, %259 : vector<3x32xf32>
    %261 = vector.extract_strided_slice %8 {offsets = [90, 0], sizes = [3, 16], strides = [1, 1]} : vector<147x16xf32> to vector<3x16xf32>
    %262 = arith.truncf %261 : vector<3x16xf32> to vector<3x16xbf16>
    %c96_154 = arith.constant 96 : index
    %c0_155 = arith.constant 0 : index
    %263 = vector.load %arg3[%c96_154, %c0_155] : memref<144x32xbf16, #tpu.memory_space<vmem>>, vector<16x32xbf16>
    %cst_156 = arith.constant dense<0.000000e+00> : vector<3x32xf32>
    %264 = tpu.matmul %262, %263, %cst_156 {dimension_numbers = #tpu.dot_dimension_numbers<[1], [0], [0], [1], [0, 0, 1, 1], [], []>} : vector<3x16xbf16>, vector<16x32xbf16>, vector<3x32xf32> -> vector<3x32xf32>
    %265 = arith.addf %260, %264 : vector<3x32xf32>
    %266 = vector.extract_strided_slice %8 {offsets = [93, 0], sizes = [3, 16], strides = [1, 1]} : vector<147x16xf32> to vector<3x16xf32>
    %267 = arith.truncf %266 : vector<3x16xf32> to vector<3x16xbf16>
    %c112_157 = arith.constant 112 : index
    %c0_158 = arith.constant 0 : index
    %268 = vector.load %arg3[%c112_157, %c0_158] : memref<144x32xbf16, #tpu.memory_space<vmem>>, vector<16x32xbf16>
    %cst_159 = arith.constant dense<0.000000e+00> : vector<3x32xf32>
    %269 = tpu.matmul %267, %268, %cst_159 {dimension_numbers = #tpu.dot_dimension_numbers<[1], [0], [0], [1], [0, 0, 1, 1], [], []>} : vector<3x16xbf16>, vector<16x32xbf16>, vector<3x32xf32> -> vector<3x32xf32>
    %270 = arith.addf %265, %269 : vector<3x32xf32>
    %271 = vector.extract_strided_slice %8 {offsets = [96, 0], sizes = [3, 16], strides = [1, 1]} : vector<147x16xf32> to vector<3x16xf32>
    %272 = arith.truncf %271 : vector<3x16xf32> to vector<3x16xbf16>
    %c128_160 = arith.constant 128 : index
    %c0_161 = arith.constant 0 : index
    %273 = vector.load %arg3[%c128_160, %c0_161] : memref<144x32xbf16, #tpu.memory_space<vmem>>, vector<16x32xbf16>
    %cst_162 = arith.constant dense<0.000000e+00> : vector<3x32xf32>
    %274 = tpu.matmul %272, %273, %cst_162 {dimension_numbers = #tpu.dot_dimension_numbers<[1], [0], [0], [1], [0, 0, 1, 1], [], []>} : vector<3x16xbf16>, vector<16x32xbf16>, vector<3x32xf32> -> vector<3x32xf32>
    %275 = arith.addf %270, %274 : vector<3x32xf32>
    %c0_163 = arith.constant 0 : index
    %c0_164 = arith.constant 0 : index
    %276 = vector.load %arg4[%c0_163, %c0_164] : memref<1x32xf32, #tpu.memory_space<vmem>>, vector<1x32xf32>
    %277 = vector.broadcast %276 : vector<1x32xf32> to vector<3x32xf32>
    %278 = arith.addf %275, %277 : vector<3x32xf32>
    %cst_165 = arith.constant 0.000000e+00 : f32
    %279 = vector.broadcast %cst_165 : f32 to vector<3x32xf32>
    %280 = arith.maximumf %278, %279 : vector<3x32xf32>
    %281 = arith.truncf %280 : vector<3x32xf32> to vector<3x32xbf16>
    %c128_166 = arith.constant 128 : index
    %c0_167 = arith.constant 0 : index
    %282 = vector.load %arg5[%c128_166, %c0_167] : memref<288x128xbf16, #tpu.memory_space<vmem>>, vector<32x128xbf16>
    %cst_168 = arith.constant dense<0.000000e+00> : vector<3x128xf32>
    %283 = tpu.matmul %281, %282, %cst_168 {dimension_numbers = #tpu.dot_dimension_numbers<[1], [0], [0], [1], [0, 0, 1, 1], [], []>} : vector<3x32xbf16>, vector<32x128xbf16>, vector<3x128xf32> -> vector<3x128xf32>
    %284 = arith.addf %229, %283 : vector<3x128xf32>
    %cst_169 = arith.constant 0.000000e+00 : f32
    %285 = vector.broadcast %cst_169 : f32 to vector<3x32xf32>
    %286 = vector.extract_strided_slice %8 {offsets = [54, 0], sizes = [3, 16], strides = [1, 1]} : vector<147x16xf32> to vector<3x16xf32>
    %287 = arith.truncf %286 : vector<3x16xf32> to vector<3x16xbf16>
    %c0_170 = arith.constant 0 : index
    %c0_171 = arith.constant 0 : index
    %288 = vector.load %arg3[%c0_170, %c0_171] : memref<144x32xbf16, #tpu.memory_space<vmem>>, vector<16x32xbf16>
    %cst_172 = arith.constant dense<0.000000e+00> : vector<3x32xf32>
    %289 = tpu.matmul %287, %288, %cst_172 {dimension_numbers = #tpu.dot_dimension_numbers<[1], [0], [0], [1], [0, 0, 1, 1], [], []>} : vector<3x16xbf16>, vector<16x32xbf16>, vector<3x32xf32> -> vector<3x32xf32>
    %290 = arith.addf %285, %289 : vector<3x32xf32>
    %291 = vector.extract_strided_slice %8 {offsets = [57, 0], sizes = [3, 16], strides = [1, 1]} : vector<147x16xf32> to vector<3x16xf32>
    %292 = arith.truncf %291 : vector<3x16xf32> to vector<3x16xbf16>
    %c16_173 = arith.constant 16 : index
    %c0_174 = arith.constant 0 : index
    %293 = vector.load %arg3[%c16_173, %c0_174] : memref<144x32xbf16, #tpu.memory_space<vmem>>, vector<16x32xbf16>
    %cst_175 = arith.constant dense<0.000000e+00> : vector<3x32xf32>
    %294 = tpu.matmul %292, %293, %cst_175 {dimension_numbers = #tpu.dot_dimension_numbers<[1], [0], [0], [1], [0, 0, 1, 1], [], []>} : vector<3x16xbf16>, vector<16x32xbf16>, vector<3x32xf32> -> vector<3x32xf32>
    %295 = arith.addf %290, %294 : vector<3x32xf32>
    %296 = vector.extract_strided_slice %8 {offsets = [60, 0], sizes = [3, 16], strides = [1, 1]} : vector<147x16xf32> to vector<3x16xf32>
    %297 = arith.truncf %296 : vector<3x16xf32> to vector<3x16xbf16>
    %c32_176 = arith.constant 32 : index
    %c0_177 = arith.constant 0 : index
    %298 = vector.load %arg3[%c32_176, %c0_177] : memref<144x32xbf16, #tpu.memory_space<vmem>>, vector<16x32xbf16>
    %cst_178 = arith.constant dense<0.000000e+00> : vector<3x32xf32>
    %299 = tpu.matmul %297, %298, %cst_178 {dimension_numbers = #tpu.dot_dimension_numbers<[1], [0], [0], [1], [0, 0, 1, 1], [], []>} : vector<3x16xbf16>, vector<16x32xbf16>, vector<3x32xf32> -> vector<3x32xf32>
    %300 = arith.addf %295, %299 : vector<3x32xf32>
    %301 = vector.extract_strided_slice %8 {offsets = [75, 0], sizes = [3, 16], strides = [1, 1]} : vector<147x16xf32> to vector<3x16xf32>
    %302 = arith.truncf %301 : vector<3x16xf32> to vector<3x16xbf16>
    %c48_179 = arith.constant 48 : index
    %c0_180 = arith.constant 0 : index
    %303 = vector.load %arg3[%c48_179, %c0_180] : memref<144x32xbf16, #tpu.memory_space<vmem>>, vector<16x32xbf16>
    %cst_181 = arith.constant dense<0.000000e+00> : vector<3x32xf32>
    %304 = tpu.matmul %302, %303, %cst_181 {dimension_numbers = #tpu.dot_dimension_numbers<[1], [0], [0], [1], [0, 0, 1, 1], [], []>} : vector<3x16xbf16>, vector<16x32xbf16>, vector<3x32xf32> -> vector<3x32xf32>
    %305 = arith.addf %300, %304 : vector<3x32xf32>
    %306 = vector.extract_strided_slice %8 {offsets = [78, 0], sizes = [3, 16], strides = [1, 1]} : vector<147x16xf32> to vector<3x16xf32>
    %307 = arith.truncf %306 : vector<3x16xf32> to vector<3x16xbf16>
    %c64_182 = arith.constant 64 : index
    %c0_183 = arith.constant 0 : index
    %308 = vector.load %arg3[%c64_182, %c0_183] : memref<144x32xbf16, #tpu.memory_space<vmem>>, vector<16x32xbf16>
    %cst_184 = arith.constant dense<0.000000e+00> : vector<3x32xf32>
    %309 = tpu.matmul %307, %308, %cst_184 {dimension_numbers = #tpu.dot_dimension_numbers<[1], [0], [0], [1], [0, 0, 1, 1], [], []>} : vector<3x16xbf16>, vector<16x32xbf16>, vector<3x32xf32> -> vector<3x32xf32>
    %310 = arith.addf %305, %309 : vector<3x32xf32>
    %311 = vector.extract_strided_slice %8 {offsets = [81, 0], sizes = [3, 16], strides = [1, 1]} : vector<147x16xf32> to vector<3x16xf32>
    %312 = arith.truncf %311 : vector<3x16xf32> to vector<3x16xbf16>
    %c80_185 = arith.constant 80 : index
    %c0_186 = arith.constant 0 : index
    %313 = vector.load %arg3[%c80_185, %c0_186] : memref<144x32xbf16, #tpu.memory_space<vmem>>, vector<16x32xbf16>
    %cst_187 = arith.constant dense<0.000000e+00> : vector<3x32xf32>
    %314 = tpu.matmul %312, %313, %cst_187 {dimension_numbers = #tpu.dot_dimension_numbers<[1], [0], [0], [1], [0, 0, 1, 1], [], []>} : vector<3x16xbf16>, vector<16x32xbf16>, vector<3x32xf32> -> vector<3x32xf32>
    %315 = arith.addf %310, %314 : vector<3x32xf32>
    %316 = vector.extract_strided_slice %8 {offsets = [96, 0], sizes = [3, 16], strides = [1, 1]} : vector<147x16xf32> to vector<3x16xf32>
    %317 = arith.truncf %316 : vector<3x16xf32> to vector<3x16xbf16>
    %c96_188 = arith.constant 96 : index
    %c0_189 = arith.constant 0 : index
    %318 = vector.load %arg3[%c96_188, %c0_189] : memref<144x32xbf16, #tpu.memory_space<vmem>>, vector<16x32xbf16>
    %cst_190 = arith.constant dense<0.000000e+00> : vector<3x32xf32>
    %319 = tpu.matmul %317, %318, %cst_190 {dimension_numbers = #tpu.dot_dimension_numbers<[1], [0], [0], [1], [0, 0, 1, 1], [], []>} : vector<3x16xbf16>, vector<16x32xbf16>, vector<3x32xf32> -> vector<3x32xf32>
    %320 = arith.addf %315, %319 : vector<3x32xf32>
    %321 = vector.extract_strided_slice %8 {offsets = [99, 0], sizes = [3, 16], strides = [1, 1]} : vector<147x16xf32> to vector<3x16xf32>
    %322 = arith.truncf %321 : vector<3x16xf32> to vector<3x16xbf16>
    %c112_191 = arith.constant 112 : index
    %c0_192 = arith.constant 0 : index
    %323 = vector.load %arg3[%c112_191, %c0_192] : memref<144x32xbf16, #tpu.memory_space<vmem>>, vector<16x32xbf16>
    %cst_193 = arith.constant dense<0.000000e+00> : vector<3x32xf32>
    %324 = tpu.matmul %322, %323, %cst_193 {dimension_numbers = #tpu.dot_dimension_numbers<[1], [0], [0], [1], [0, 0, 1, 1], [], []>} : vector<3x16xbf16>, vector<16x32xbf16>, vector<3x32xf32> -> vector<3x32xf32>
    %325 = arith.addf %320, %324 : vector<3x32xf32>
    %326 = vector.extract_strided_slice %8 {offsets = [102, 0], sizes = [3, 16], strides = [1, 1]} : vector<147x16xf32> to vector<3x16xf32>
    %327 = arith.truncf %326 : vector<3x16xf32> to vector<3x16xbf16>
    %c128_194 = arith.constant 128 : index
    %c0_195 = arith.constant 0 : index
    %328 = vector.load %arg3[%c128_194, %c0_195] : memref<144x32xbf16, #tpu.memory_space<vmem>>, vector<16x32xbf16>
    %cst_196 = arith.constant dense<0.000000e+00> : vector<3x32xf32>
    %329 = tpu.matmul %327, %328, %cst_196 {dimension_numbers = #tpu.dot_dimension_numbers<[1], [0], [0], [1], [0, 0, 1, 1], [], []>} : vector<3x16xbf16>, vector<16x32xbf16>, vector<3x32xf32> -> vector<3x32xf32>
    %330 = arith.addf %325, %329 : vector<3x32xf32>
    %c0_197 = arith.constant 0 : index
    %c0_198 = arith.constant 0 : index
    %331 = vector.load %arg4[%c0_197, %c0_198] : memref<1x32xf32, #tpu.memory_space<vmem>>, vector<1x32xf32>
    %332 = vector.broadcast %331 : vector<1x32xf32> to vector<3x32xf32>
    %333 = arith.addf %330, %332 : vector<3x32xf32>
    %cst_199 = arith.constant 0.000000e+00 : f32
    %334 = vector.broadcast %cst_199 : f32 to vector<3x32xf32>
    %335 = arith.maximumf %333, %334 : vector<3x32xf32>
    %336 = arith.truncf %335 : vector<3x32xf32> to vector<3x32xbf16>
    %c160 = arith.constant 160 : index
    %c0_200 = arith.constant 0 : index
    %337 = vector.load %arg5[%c160, %c0_200] : memref<288x128xbf16, #tpu.memory_space<vmem>>, vector<32x128xbf16>
    %cst_201 = arith.constant dense<0.000000e+00> : vector<3x128xf32>
    %338 = tpu.matmul %336, %337, %cst_201 {dimension_numbers = #tpu.dot_dimension_numbers<[1], [0], [0], [1], [0, 0, 1, 1], [], []>} : vector<3x32xbf16>, vector<32x128xbf16>, vector<3x128xf32> -> vector<3x128xf32>
    %339 = arith.addf %284, %338 : vector<3x128xf32>
    %cst_202 = arith.constant 0.000000e+00 : f32
    %340 = vector.broadcast %cst_202 : f32 to vector<3x32xf32>
    %341 = vector.extract_strided_slice %8 {offsets = [84, 0], sizes = [3, 16], strides = [1, 1]} : vector<147x16xf32> to vector<3x16xf32>
    %342 = arith.truncf %341 : vector<3x16xf32> to vector<3x16xbf16>
    %c0_203 = arith.constant 0 : index
    %c0_204 = arith.constant 0 : index
    %343 = vector.load %arg3[%c0_203, %c0_204] : memref<144x32xbf16, #tpu.memory_space<vmem>>, vector<16x32xbf16>
    %cst_205 = arith.constant dense<0.000000e+00> : vector<3x32xf32>
    %344 = tpu.matmul %342, %343, %cst_205 {dimension_numbers = #tpu.dot_dimension_numbers<[1], [0], [0], [1], [0, 0, 1, 1], [], []>} : vector<3x16xbf16>, vector<16x32xbf16>, vector<3x32xf32> -> vector<3x32xf32>
    %345 = arith.addf %340, %344 : vector<3x32xf32>
    %346 = vector.extract_strided_slice %8 {offsets = [87, 0], sizes = [3, 16], strides = [1, 1]} : vector<147x16xf32> to vector<3x16xf32>
    %347 = arith.truncf %346 : vector<3x16xf32> to vector<3x16xbf16>
    %c16_206 = arith.constant 16 : index
    %c0_207 = arith.constant 0 : index
    %348 = vector.load %arg3[%c16_206, %c0_207] : memref<144x32xbf16, #tpu.memory_space<vmem>>, vector<16x32xbf16>
    %cst_208 = arith.constant dense<0.000000e+00> : vector<3x32xf32>
    %349 = tpu.matmul %347, %348, %cst_208 {dimension_numbers = #tpu.dot_dimension_numbers<[1], [0], [0], [1], [0, 0, 1, 1], [], []>} : vector<3x16xbf16>, vector<16x32xbf16>, vector<3x32xf32> -> vector<3x32xf32>
    %350 = arith.addf %345, %349 : vector<3x32xf32>
    %351 = vector.extract_strided_slice %8 {offsets = [90, 0], sizes = [3, 16], strides = [1, 1]} : vector<147x16xf32> to vector<3x16xf32>
    %352 = arith.truncf %351 : vector<3x16xf32> to vector<3x16xbf16>
    %c32_209 = arith.constant 32 : index
    %c0_210 = arith.constant 0 : index
    %353 = vector.load %arg3[%c32_209, %c0_210] : memref<144x32xbf16, #tpu.memory_space<vmem>>, vector<16x32xbf16>
    %cst_211 = arith.constant dense<0.000000e+00> : vector<3x32xf32>
    %354 = tpu.matmul %352, %353, %cst_211 {dimension_numbers = #tpu.dot_dimension_numbers<[1], [0], [0], [1], [0, 0, 1, 1], [], []>} : vector<3x16xbf16>, vector<16x32xbf16>, vector<3x32xf32> -> vector<3x32xf32>
    %355 = arith.addf %350, %354 : vector<3x32xf32>
    %356 = vector.extract_strided_slice %8 {offsets = [105, 0], sizes = [3, 16], strides = [1, 1]} : vector<147x16xf32> to vector<3x16xf32>
    %357 = arith.truncf %356 : vector<3x16xf32> to vector<3x16xbf16>
    %c48_212 = arith.constant 48 : index
    %c0_213 = arith.constant 0 : index
    %358 = vector.load %arg3[%c48_212, %c0_213] : memref<144x32xbf16, #tpu.memory_space<vmem>>, vector<16x32xbf16>
    %cst_214 = arith.constant dense<0.000000e+00> : vector<3x32xf32>
    %359 = tpu.matmul %357, %358, %cst_214 {dimension_numbers = #tpu.dot_dimension_numbers<[1], [0], [0], [1], [0, 0, 1, 1], [], []>} : vector<3x16xbf16>, vector<16x32xbf16>, vector<3x32xf32> -> vector<3x32xf32>
    %360 = arith.addf %355, %359 : vector<3x32xf32>
    %361 = vector.extract_strided_slice %8 {offsets = [108, 0], sizes = [3, 16], strides = [1, 1]} : vector<147x16xf32> to vector<3x16xf32>
    %362 = arith.truncf %361 : vector<3x16xf32> to vector<3x16xbf16>
    %c64_215 = arith.constant 64 : index
    %c0_216 = arith.constant 0 : index
    %363 = vector.load %arg3[%c64_215, %c0_216] : memref<144x32xbf16, #tpu.memory_space<vmem>>, vector<16x32xbf16>
    %cst_217 = arith.constant dense<0.000000e+00> : vector<3x32xf32>
    %364 = tpu.matmul %362, %363, %cst_217 {dimension_numbers = #tpu.dot_dimension_numbers<[1], [0], [0], [1], [0, 0, 1, 1], [], []>} : vector<3x16xbf16>, vector<16x32xbf16>, vector<3x32xf32> -> vector<3x32xf32>
    %365 = arith.addf %360, %364 : vector<3x32xf32>
    %366 = vector.extract_strided_slice %8 {offsets = [111, 0], sizes = [3, 16], strides = [1, 1]} : vector<147x16xf32> to vector<3x16xf32>
    %367 = arith.truncf %366 : vector<3x16xf32> to vector<3x16xbf16>
    %c80_218 = arith.constant 80 : index
    %c0_219 = arith.constant 0 : index
    %368 = vector.load %arg3[%c80_218, %c0_219] : memref<144x32xbf16, #tpu.memory_space<vmem>>, vector<16x32xbf16>
    %cst_220 = arith.constant dense<0.000000e+00> : vector<3x32xf32>
    %369 = tpu.matmul %367, %368, %cst_220 {dimension_numbers = #tpu.dot_dimension_numbers<[1], [0], [0], [1], [0, 0, 1, 1], [], []>} : vector<3x16xbf16>, vector<16x32xbf16>, vector<3x32xf32> -> vector<3x32xf32>
    %370 = arith.addf %365, %369 : vector<3x32xf32>
    %371 = vector.extract_strided_slice %8 {offsets = [126, 0], sizes = [3, 16], strides = [1, 1]} : vector<147x16xf32> to vector<3x16xf32>
    %372 = arith.truncf %371 : vector<3x16xf32> to vector<3x16xbf16>
    %c96_221 = arith.constant 96 : index
    %c0_222 = arith.constant 0 : index
    %373 = vector.load %arg3[%c96_221, %c0_222] : memref<144x32xbf16, #tpu.memory_space<vmem>>, vector<16x32xbf16>
    %cst_223 = arith.constant dense<0.000000e+00> : vector<3x32xf32>
    %374 = tpu.matmul %372, %373, %cst_223 {dimension_numbers = #tpu.dot_dimension_numbers<[1], [0], [0], [1], [0, 0, 1, 1], [], []>} : vector<3x16xbf16>, vector<16x32xbf16>, vector<3x32xf32> -> vector<3x32xf32>
    %375 = arith.addf %370, %374 : vector<3x32xf32>
    %376 = vector.extract_strided_slice %8 {offsets = [129, 0], sizes = [3, 16], strides = [1, 1]} : vector<147x16xf32> to vector<3x16xf32>
    %377 = arith.truncf %376 : vector<3x16xf32> to vector<3x16xbf16>
    %c112_224 = arith.constant 112 : index
    %c0_225 = arith.constant 0 : index
    %378 = vector.load %arg3[%c112_224, %c0_225] : memref<144x32xbf16, #tpu.memory_space<vmem>>, vector<16x32xbf16>
    %cst_226 = arith.constant dense<0.000000e+00> : vector<3x32xf32>
    %379 = tpu.matmul %377, %378, %cst_226 {dimension_numbers = #tpu.dot_dimension_numbers<[1], [0], [0], [1], [0, 0, 1, 1], [], []>} : vector<3x16xbf16>, vector<16x32xbf16>, vector<3x32xf32> -> vector<3x32xf32>
    %380 = arith.addf %375, %379 : vector<3x32xf32>
    %381 = vector.extract_strided_slice %8 {offsets = [132, 0], sizes = [3, 16], strides = [1, 1]} : vector<147x16xf32> to vector<3x16xf32>
    %382 = arith.truncf %381 : vector<3x16xf32> to vector<3x16xbf16>
    %c128_227 = arith.constant 128 : index
    %c0_228 = arith.constant 0 : index
    %383 = vector.load %arg3[%c128_227, %c0_228] : memref<144x32xbf16, #tpu.memory_space<vmem>>, vector<16x32xbf16>
    %cst_229 = arith.constant dense<0.000000e+00> : vector<3x32xf32>
    %384 = tpu.matmul %382, %383, %cst_229 {dimension_numbers = #tpu.dot_dimension_numbers<[1], [0], [0], [1], [0, 0, 1, 1], [], []>} : vector<3x16xbf16>, vector<16x32xbf16>, vector<3x32xf32> -> vector<3x32xf32>
    %385 = arith.addf %380, %384 : vector<3x32xf32>
    %c0_230 = arith.constant 0 : index
    %c0_231 = arith.constant 0 : index
    %386 = vector.load %arg4[%c0_230, %c0_231] : memref<1x32xf32, #tpu.memory_space<vmem>>, vector<1x32xf32>
    %387 = vector.broadcast %386 : vector<1x32xf32> to vector<3x32xf32>
    %388 = arith.addf %385, %387 : vector<3x32xf32>
    %cst_232 = arith.constant 0.000000e+00 : f32
    %389 = vector.broadcast %cst_232 : f32 to vector<3x32xf32>
    %390 = arith.maximumf %388, %389 : vector<3x32xf32>
    %391 = arith.truncf %390 : vector<3x32xf32> to vector<3x32xbf16>
    %c192 = arith.constant 192 : index
    %c0_233 = arith.constant 0 : index
    %392 = vector.load %arg5[%c192, %c0_233] : memref<288x128xbf16, #tpu.memory_space<vmem>>, vector<32x128xbf16>
    %cst_234 = arith.constant dense<0.000000e+00> : vector<3x128xf32>
    %393 = tpu.matmul %391, %392, %cst_234 {dimension_numbers = #tpu.dot_dimension_numbers<[1], [0], [0], [1], [0, 0, 1, 1], [], []>} : vector<3x32xbf16>, vector<32x128xbf16>, vector<3x128xf32> -> vector<3x128xf32>
    %394 = arith.addf %339, %393 : vector<3x128xf32>
    %cst_235 = arith.constant 0.000000e+00 : f32
    %395 = vector.broadcast %cst_235 : f32 to vector<3x32xf32>
    %396 = vector.extract_strided_slice %8 {offsets = [90, 0], sizes = [3, 16], strides = [1, 1]} : vector<147x16xf32> to vector<3x16xf32>
    %397 = arith.truncf %396 : vector<3x16xf32> to vector<3x16xbf16>
    %c0_236 = arith.constant 0 : index
    %c0_237 = arith.constant 0 : index
    %398 = vector.load %arg3[%c0_236, %c0_237] : memref<144x32xbf16, #tpu.memory_space<vmem>>, vector<16x32xbf16>
    %cst_238 = arith.constant dense<0.000000e+00> : vector<3x32xf32>
    %399 = tpu.matmul %397, %398, %cst_238 {dimension_numbers = #tpu.dot_dimension_numbers<[1], [0], [0], [1], [0, 0, 1, 1], [], []>} : vector<3x16xbf16>, vector<16x32xbf16>, vector<3x32xf32> -> vector<3x32xf32>
    %400 = arith.addf %395, %399 : vector<3x32xf32>
    %401 = vector.extract_strided_slice %8 {offsets = [93, 0], sizes = [3, 16], strides = [1, 1]} : vector<147x16xf32> to vector<3x16xf32>
    %402 = arith.truncf %401 : vector<3x16xf32> to vector<3x16xbf16>
    %c16_239 = arith.constant 16 : index
    %c0_240 = arith.constant 0 : index
    %403 = vector.load %arg3[%c16_239, %c0_240] : memref<144x32xbf16, #tpu.memory_space<vmem>>, vector<16x32xbf16>
    %cst_241 = arith.constant dense<0.000000e+00> : vector<3x32xf32>
    %404 = tpu.matmul %402, %403, %cst_241 {dimension_numbers = #tpu.dot_dimension_numbers<[1], [0], [0], [1], [0, 0, 1, 1], [], []>} : vector<3x16xbf16>, vector<16x32xbf16>, vector<3x32xf32> -> vector<3x32xf32>
    %405 = arith.addf %400, %404 : vector<3x32xf32>
    %406 = vector.extract_strided_slice %8 {offsets = [96, 0], sizes = [3, 16], strides = [1, 1]} : vector<147x16xf32> to vector<3x16xf32>
    %407 = arith.truncf %406 : vector<3x16xf32> to vector<3x16xbf16>
    %c32_242 = arith.constant 32 : index
    %c0_243 = arith.constant 0 : index
    %408 = vector.load %arg3[%c32_242, %c0_243] : memref<144x32xbf16, #tpu.memory_space<vmem>>, vector<16x32xbf16>
    %cst_244 = arith.constant dense<0.000000e+00> : vector<3x32xf32>
    %409 = tpu.matmul %407, %408, %cst_244 {dimension_numbers = #tpu.dot_dimension_numbers<[1], [0], [0], [1], [0, 0, 1, 1], [], []>} : vector<3x16xbf16>, vector<16x32xbf16>, vector<3x32xf32> -> vector<3x32xf32>
    %410 = arith.addf %405, %409 : vector<3x32xf32>
    %411 = vector.extract_strided_slice %8 {offsets = [111, 0], sizes = [3, 16], strides = [1, 1]} : vector<147x16xf32> to vector<3x16xf32>
    %412 = arith.truncf %411 : vector<3x16xf32> to vector<3x16xbf16>
    %c48_245 = arith.constant 48 : index
    %c0_246 = arith.constant 0 : index
    %413 = vector.load %arg3[%c48_245, %c0_246] : memref<144x32xbf16, #tpu.memory_space<vmem>>, vector<16x32xbf16>
    %cst_247 = arith.constant dense<0.000000e+00> : vector<3x32xf32>
    %414 = tpu.matmul %412, %413, %cst_247 {dimension_numbers = #tpu.dot_dimension_numbers<[1], [0], [0], [1], [0, 0, 1, 1], [], []>} : vector<3x16xbf16>, vector<16x32xbf16>, vector<3x32xf32> -> vector<3x32xf32>
    %415 = arith.addf %410, %414 : vector<3x32xf32>
    %416 = vector.extract_strided_slice %8 {offsets = [114, 0], sizes = [3, 16], strides = [1, 1]} : vector<147x16xf32> to vector<3x16xf32>
    %417 = arith.truncf %416 : vector<3x16xf32> to vector<3x16xbf16>
    %c64_248 = arith.constant 64 : index
    %c0_249 = arith.constant 0 : index
    %418 = vector.load %arg3[%c64_248, %c0_249] : memref<144x32xbf16, #tpu.memory_space<vmem>>, vector<16x32xbf16>
    %cst_250 = arith.constant dense<0.000000e+00> : vector<3x32xf32>
    %419 = tpu.matmul %417, %418, %cst_250 {dimension_numbers = #tpu.dot_dimension_numbers<[1], [0], [0], [1], [0, 0, 1, 1], [], []>} : vector<3x16xbf16>, vector<16x32xbf16>, vector<3x32xf32> -> vector<3x32xf32>
    %420 = arith.addf %415, %419 : vector<3x32xf32>
    %421 = vector.extract_strided_slice %8 {offsets = [117, 0], sizes = [3, 16], strides = [1, 1]} : vector<147x16xf32> to vector<3x16xf32>
    %422 = arith.truncf %421 : vector<3x16xf32> to vector<3x16xbf16>
    %c80_251 = arith.constant 80 : index
    %c0_252 = arith.constant 0 : index
    %423 = vector.load %arg3[%c80_251, %c0_252] : memref<144x32xbf16, #tpu.memory_space<vmem>>, vector<16x32xbf16>
    %cst_253 = arith.constant dense<0.000000e+00> : vector<3x32xf32>
    %424 = tpu.matmul %422, %423, %cst_253 {dimension_numbers = #tpu.dot_dimension_numbers<[1], [0], [0], [1], [0, 0, 1, 1], [], []>} : vector<3x16xbf16>, vector<16x32xbf16>, vector<3x32xf32> -> vector<3x32xf32>
    %425 = arith.addf %420, %424 : vector<3x32xf32>
    %426 = vector.extract_strided_slice %8 {offsets = [132, 0], sizes = [3, 16], strides = [1, 1]} : vector<147x16xf32> to vector<3x16xf32>
    %427 = arith.truncf %426 : vector<3x16xf32> to vector<3x16xbf16>
    %c96_254 = arith.constant 96 : index
    %c0_255 = arith.constant 0 : index
    %428 = vector.load %arg3[%c96_254, %c0_255] : memref<144x32xbf16, #tpu.memory_space<vmem>>, vector<16x32xbf16>
    %cst_256 = arith.constant dense<0.000000e+00> : vector<3x32xf32>
    %429 = tpu.matmul %427, %428, %cst_256 {dimension_numbers = #tpu.dot_dimension_numbers<[1], [0], [0], [1], [0, 0, 1, 1], [], []>} : vector<3x16xbf16>, vector<16x32xbf16>, vector<3x32xf32> -> vector<3x32xf32>
    %430 = arith.addf %425, %429 : vector<3x32xf32>
    %431 = vector.extract_strided_slice %8 {offsets = [135, 0], sizes = [3, 16], strides = [1, 1]} : vector<147x16xf32> to vector<3x16xf32>
    %432 = arith.truncf %431 : vector<3x16xf32> to vector<3x16xbf16>
    %c112_257 = arith.constant 112 : index
    %c0_258 = arith.constant 0 : index
    %433 = vector.load %arg3[%c112_257, %c0_258] : memref<144x32xbf16, #tpu.memory_space<vmem>>, vector<16x32xbf16>
    %cst_259 = arith.constant dense<0.000000e+00> : vector<3x32xf32>
    %434 = tpu.matmul %432, %433, %cst_259 {dimension_numbers = #tpu.dot_dimension_numbers<[1], [0], [0], [1], [0, 0, 1, 1], [], []>} : vector<3x16xbf16>, vector<16x32xbf16>, vector<3x32xf32> -> vector<3x32xf32>
    %435 = arith.addf %430, %434 : vector<3x32xf32>
    %436 = vector.extract_strided_slice %8 {offsets = [138, 0], sizes = [3, 16], strides = [1, 1]} : vector<147x16xf32> to vector<3x16xf32>
    %437 = arith.truncf %436 : vector<3x16xf32> to vector<3x16xbf16>
    %c128_260 = arith.constant 128 : index
    %c0_261 = arith.constant 0 : index
    %438 = vector.load %arg3[%c128_260, %c0_261] : memref<144x32xbf16, #tpu.memory_space<vmem>>, vector<16x32xbf16>
    %cst_262 = arith.constant dense<0.000000e+00> : vector<3x32xf32>
    %439 = tpu.matmul %437, %438, %cst_262 {dimension_numbers = #tpu.dot_dimension_numbers<[1], [0], [0], [1], [0, 0, 1, 1], [], []>} : vector<3x16xbf16>, vector<16x32xbf16>, vector<3x32xf32> -> vector<3x32xf32>
    %440 = arith.addf %435, %439 : vector<3x32xf32>
    %c0_263 = arith.constant 0 : index
    %c0_264 = arith.constant 0 : index
    %441 = vector.load %arg4[%c0_263, %c0_264] : memref<1x32xf32, #tpu.memory_space<vmem>>, vector<1x32xf32>
    %442 = vector.broadcast %441 : vector<1x32xf32> to vector<3x32xf32>
    %443 = arith.addf %440, %442 : vector<3x32xf32>
    %cst_265 = arith.constant 0.000000e+00 : f32
    %444 = vector.broadcast %cst_265 : f32 to vector<3x32xf32>
    %445 = arith.maximumf %443, %444 : vector<3x32xf32>
    %446 = arith.truncf %445 : vector<3x32xf32> to vector<3x32xbf16>
    %c224 = arith.constant 224 : index
    %c0_266 = arith.constant 0 : index
    %447 = vector.load %arg5[%c224, %c0_266] : memref<288x128xbf16, #tpu.memory_space<vmem>>, vector<32x128xbf16>
    %cst_267 = arith.constant dense<0.000000e+00> : vector<3x128xf32>
    %448 = tpu.matmul %446, %447, %cst_267 {dimension_numbers = #tpu.dot_dimension_numbers<[1], [0], [0], [1], [0, 0, 1, 1], [], []>} : vector<3x32xbf16>, vector<32x128xbf16>, vector<3x128xf32> -> vector<3x128xf32>
    %449 = arith.addf %394, %448 : vector<3x128xf32>
    %cst_268 = arith.constant 0.000000e+00 : f32
    %450 = vector.broadcast %cst_268 : f32 to vector<3x32xf32>
    %451 = vector.extract_strided_slice %8 {offsets = [96, 0], sizes = [3, 16], strides = [1, 1]} : vector<147x16xf32> to vector<3x16xf32>
    %452 = arith.truncf %451 : vector<3x16xf32> to vector<3x16xbf16>
    %c0_269 = arith.constant 0 : index
    %c0_270 = arith.constant 0 : index
    %453 = vector.load %arg3[%c0_269, %c0_270] : memref<144x32xbf16, #tpu.memory_space<vmem>>, vector<16x32xbf16>
    %cst_271 = arith.constant dense<0.000000e+00> : vector<3x32xf32>
    %454 = tpu.matmul %452, %453, %cst_271 {dimension_numbers = #tpu.dot_dimension_numbers<[1], [0], [0], [1], [0, 0, 1, 1], [], []>} : vector<3x16xbf16>, vector<16x32xbf16>, vector<3x32xf32> -> vector<3x32xf32>
    %455 = arith.addf %450, %454 : vector<3x32xf32>
    %456 = vector.extract_strided_slice %8 {offsets = [99, 0], sizes = [3, 16], strides = [1, 1]} : vector<147x16xf32> to vector<3x16xf32>
    %457 = arith.truncf %456 : vector<3x16xf32> to vector<3x16xbf16>
    %c16_272 = arith.constant 16 : index
    %c0_273 = arith.constant 0 : index
    %458 = vector.load %arg3[%c16_272, %c0_273] : memref<144x32xbf16, #tpu.memory_space<vmem>>, vector<16x32xbf16>
    %cst_274 = arith.constant dense<0.000000e+00> : vector<3x32xf32>
    %459 = tpu.matmul %457, %458, %cst_274 {dimension_numbers = #tpu.dot_dimension_numbers<[1], [0], [0], [1], [0, 0, 1, 1], [], []>} : vector<3x16xbf16>, vector<16x32xbf16>, vector<3x32xf32> -> vector<3x32xf32>
    %460 = arith.addf %455, %459 : vector<3x32xf32>
    %461 = vector.extract_strided_slice %8 {offsets = [102, 0], sizes = [3, 16], strides = [1, 1]} : vector<147x16xf32> to vector<3x16xf32>
    %462 = arith.truncf %461 : vector<3x16xf32> to vector<3x16xbf16>
    %c32_275 = arith.constant 32 : index
    %c0_276 = arith.constant 0 : index
    %463 = vector.load %arg3[%c32_275, %c0_276] : memref<144x32xbf16, #tpu.memory_space<vmem>>, vector<16x32xbf16>
    %cst_277 = arith.constant dense<0.000000e+00> : vector<3x32xf32>
    %464 = tpu.matmul %462, %463, %cst_277 {dimension_numbers = #tpu.dot_dimension_numbers<[1], [0], [0], [1], [0, 0, 1, 1], [], []>} : vector<3x16xbf16>, vector<16x32xbf16>, vector<3x32xf32> -> vector<3x32xf32>
    %465 = arith.addf %460, %464 : vector<3x32xf32>
    %466 = vector.extract_strided_slice %8 {offsets = [117, 0], sizes = [3, 16], strides = [1, 1]} : vector<147x16xf32> to vector<3x16xf32>
    %467 = arith.truncf %466 : vector<3x16xf32> to vector<3x16xbf16>
    %c48_278 = arith.constant 48 : index
    %c0_279 = arith.constant 0 : index
    %468 = vector.load %arg3[%c48_278, %c0_279] : memref<144x32xbf16, #tpu.memory_space<vmem>>, vector<16x32xbf16>
    %cst_280 = arith.constant dense<0.000000e+00> : vector<3x32xf32>
    %469 = tpu.matmul %467, %468, %cst_280 {dimension_numbers = #tpu.dot_dimension_numbers<[1], [0], [0], [1], [0, 0, 1, 1], [], []>} : vector<3x16xbf16>, vector<16x32xbf16>, vector<3x32xf32> -> vector<3x32xf32>
    %470 = arith.addf %465, %469 : vector<3x32xf32>
    %471 = vector.extract_strided_slice %8 {offsets = [120, 0], sizes = [3, 16], strides = [1, 1]} : vector<147x16xf32> to vector<3x16xf32>
    %472 = arith.truncf %471 : vector<3x16xf32> to vector<3x16xbf16>
    %c64_281 = arith.constant 64 : index
    %c0_282 = arith.constant 0 : index
    %473 = vector.load %arg3[%c64_281, %c0_282] : memref<144x32xbf16, #tpu.memory_space<vmem>>, vector<16x32xbf16>
    %cst_283 = arith.constant dense<0.000000e+00> : vector<3x32xf32>
    %474 = tpu.matmul %472, %473, %cst_283 {dimension_numbers = #tpu.dot_dimension_numbers<[1], [0], [0], [1], [0, 0, 1, 1], [], []>} : vector<3x16xbf16>, vector<16x32xbf16>, vector<3x32xf32> -> vector<3x32xf32>
    %475 = arith.addf %470, %474 : vector<3x32xf32>
    %476 = vector.extract_strided_slice %8 {offsets = [123, 0], sizes = [3, 16], strides = [1, 1]} : vector<147x16xf32> to vector<3x16xf32>
    %477 = arith.truncf %476 : vector<3x16xf32> to vector<3x16xbf16>
    %c80_284 = arith.constant 80 : index
    %c0_285 = arith.constant 0 : index
    %478 = vector.load %arg3[%c80_284, %c0_285] : memref<144x32xbf16, #tpu.memory_space<vmem>>, vector<16x32xbf16>
    %cst_286 = arith.constant dense<0.000000e+00> : vector<3x32xf32>
    %479 = tpu.matmul %477, %478, %cst_286 {dimension_numbers = #tpu.dot_dimension_numbers<[1], [0], [0], [1], [0, 0, 1, 1], [], []>} : vector<3x16xbf16>, vector<16x32xbf16>, vector<3x32xf32> -> vector<3x32xf32>
    %480 = arith.addf %475, %479 : vector<3x32xf32>
    %481 = vector.extract_strided_slice %8 {offsets = [138, 0], sizes = [3, 16], strides = [1, 1]} : vector<147x16xf32> to vector<3x16xf32>
    %482 = arith.truncf %481 : vector<3x16xf32> to vector<3x16xbf16>
    %c96_287 = arith.constant 96 : index
    %c0_288 = arith.constant 0 : index
    %483 = vector.load %arg3[%c96_287, %c0_288] : memref<144x32xbf16, #tpu.memory_space<vmem>>, vector<16x32xbf16>
    %cst_289 = arith.constant dense<0.000000e+00> : vector<3x32xf32>
    %484 = tpu.matmul %482, %483, %cst_289 {dimension_numbers = #tpu.dot_dimension_numbers<[1], [0], [0], [1], [0, 0, 1, 1], [], []>} : vector<3x16xbf16>, vector<16x32xbf16>, vector<3x32xf32> -> vector<3x32xf32>
    %485 = arith.addf %480, %484 : vector<3x32xf32>
    %486 = vector.extract_strided_slice %8 {offsets = [141, 0], sizes = [3, 16], strides = [1, 1]} : vector<147x16xf32> to vector<3x16xf32>
    %487 = arith.truncf %486 : vector<3x16xf32> to vector<3x16xbf16>
    %c112_290 = arith.constant 112 : index
    %c0_291 = arith.constant 0 : index
    %488 = vector.load %arg3[%c112_290, %c0_291] : memref<144x32xbf16, #tpu.memory_space<vmem>>, vector<16x32xbf16>
    %cst_292 = arith.constant dense<0.000000e+00> : vector<3x32xf32>
    %489 = tpu.matmul %487, %488, %cst_292 {dimension_numbers = #tpu.dot_dimension_numbers<[1], [0], [0], [1], [0, 0, 1, 1], [], []>} : vector<3x16xbf16>, vector<16x32xbf16>, vector<3x32xf32> -> vector<3x32xf32>
    %490 = arith.addf %485, %489 : vector<3x32xf32>
    %491 = vector.extract_strided_slice %8 {offsets = [144, 0], sizes = [3, 16], strides = [1, 1]} : vector<147x16xf32> to vector<3x16xf32>
    %492 = arith.truncf %491 : vector<3x16xf32> to vector<3x16xbf16>
    %c128_293 = arith.constant 128 : index
    %c0_294 = arith.constant 0 : index
    %493 = vector.load %arg3[%c128_293, %c0_294] : memref<144x32xbf16, #tpu.memory_space<vmem>>, vector<16x32xbf16>
    %cst_295 = arith.constant dense<0.000000e+00> : vector<3x32xf32>
    %494 = tpu.matmul %492, %493, %cst_295 {dimension_numbers = #tpu.dot_dimension_numbers<[1], [0], [0], [1], [0, 0, 1, 1], [], []>} : vector<3x16xbf16>, vector<16x32xbf16>, vector<3x32xf32> -> vector<3x32xf32>
    %495 = arith.addf %490, %494 : vector<3x32xf32>
    %c0_296 = arith.constant 0 : index
    %c0_297 = arith.constant 0 : index
    %496 = vector.load %arg4[%c0_296, %c0_297] : memref<1x32xf32, #tpu.memory_space<vmem>>, vector<1x32xf32>
    %497 = vector.broadcast %496 : vector<1x32xf32> to vector<3x32xf32>
    %498 = arith.addf %495, %497 : vector<3x32xf32>
    %cst_298 = arith.constant 0.000000e+00 : f32
    %499 = vector.broadcast %cst_298 : f32 to vector<3x32xf32>
    %500 = arith.maximumf %498, %499 : vector<3x32xf32>
    %501 = arith.truncf %500 : vector<3x32xf32> to vector<3x32xbf16>
    %c256 = arith.constant 256 : index
    %c0_299 = arith.constant 0 : index
    %502 = vector.load %arg5[%c256, %c0_299] : memref<288x128xbf16, #tpu.memory_space<vmem>>, vector<32x128xbf16>
    %cst_300 = arith.constant dense<0.000000e+00> : vector<3x128xf32>
    %503 = tpu.matmul %501, %502, %cst_300 {dimension_numbers = #tpu.dot_dimension_numbers<[1], [0], [0], [1], [0, 0, 1, 1], [], []>} : vector<3x32xbf16>, vector<32x128xbf16>, vector<3x128xf32> -> vector<3x128xf32>
    %504 = arith.addf %449, %503 : vector<3x128xf32>
    %c0_301 = arith.constant 0 : index
    %c0_302 = arith.constant 0 : index
    %505 = vector.load %arg6[%c0_301, %c0_302] : memref<1x128xf32, #tpu.memory_space<vmem>>, vector<1x128xf32>
    %506 = vector.broadcast %505 : vector<1x128xf32> to vector<3x128xf32>
    %507 = arith.addf %504, %506 : vector<3x128xf32>
    %cst_303 = arith.constant 0.000000e+00 : f32
    %508 = vector.broadcast %cst_303 : f32 to vector<3x128xf32>
    %509 = arith.maximumf %507, %508 : vector<3x128xf32>
    %510 = arith.truncf %509 : vector<3x128xf32> to vector<3x128xbf16>
    %c0_304 = arith.constant 0 : index
    %c0_305 = arith.constant 0 : index
    %511 = vector.load %arg7[%c0_304, %c0_305] : memref<128x256xbf16, #tpu.memory_space<vmem>>, vector<128x256xbf16>
    %cst_306 = arith.constant dense<0.000000e+00> : vector<3x256xf32>
    %512 = tpu.matmul %510, %511, %cst_306 {dimension_numbers = #tpu.dot_dimension_numbers<[1], [0], [0], [1], [0, 0, 1, 1], [], []>} : vector<3x128xbf16>, vector<128x256xbf16>, vector<3x256xf32> -> vector<3x256xf32>
    %513 = tpu.iota {dimensions = array<i32: 0>} : vector<3x256xi32>
    %514 = tpu.iota {dimensions = array<i32: 1>} : vector<3x256xi32>
    %c64_i32 = arith.constant 64 : i32
    %515 = vector.broadcast %c64_i32 : i32 to vector<3x256xi32>
    %516 = arith.muli %513, %515 : vector<3x256xi32>
    %517 = arith.cmpi sge, %514, %516 : vector<3x256xi32>
    %c1_i32 = arith.constant 1 : i32
    %518 = vector.broadcast %c1_i32 : i32 to vector<3x256xi32>
    %519 = arith.addi %513, %518 : vector<3x256xi32>
    %c64_i32_307 = arith.constant 64 : i32
    %520 = vector.broadcast %c64_i32_307 : i32 to vector<3x256xi32>
    %521 = arith.muli %519, %520 : vector<3x256xi32>
    %522 = arith.cmpi slt, %514, %521 : vector<3x256xi32>
    %523 = arith.andi %517, %522 : vector<3x256xi1>
    %cst_308 = arith.constant 0.000000e+00 : f32
    %524 = vector.broadcast %cst_308 : f32 to vector<3x256xf32>
    %525 = arith.select %523, %512, %524 : vector<3x256xi1>, vector<3x256xf32>
    %cst_309 = arith.constant dense<0.000000e+00> : vector<256xf32>
    %526 = vector.multi_reduction <add>, %525, %cst_309 [0] : vector<3x256xf32> to vector<256xf32>
    %527 = vector.shape_cast %526 : vector<256xf32> to vector<1x256xf32>
    %c0_310 = arith.constant 0 : index
    %c0_311 = arith.constant 0 : index
    %528 = vector.load %arg8[%c0_310, %c0_311] : memref<1x256xf32, #tpu.memory_space<vmem>>, vector<1x256xf32>
    %529 = arith.addf %527, %528 : vector<1x256xf32>
    %c0_312 = arith.constant 0 : index
    %c0_313 = arith.constant 0 : index
    %530 = vector.load %arg9[%c0_312, %c0_313] : memref<1x256xf32, #tpu.memory_space<vmem>>, vector<1x256xf32>
    tpu.vector_store %arg9[%c0_312, %c0_313], %529 {strides = array<i32>} : memref<1x256xf32, #tpu.memory_space<vmem>>, vector<1x256xf32>,
    return
  }
}

</mosaic_0001>

<llo_original>
// kernel: concat_encoders_forward.1
$region0: #{concat_encoders_forward.1}
  #allocation0 [shape = 'u32[]', space=smem, size = 0x4, offset = 0x4, fixed_abs, tag = 'smem constant byte address 0x4 - core index']
  #allocation1 [shape = 'u32[144,128]{1,0:T(1,128)}', space=vmem, size = 0x12000, scoped, tag = 'internal scratch']
  %s0 = inlined_call_operand.vmem [shape: f32[147,64], index: 0, kind: input, shape index: {}]
  %s1 = inlined_call_operand.vmem [shape: bf16[64,16], index: 1, kind: input, shape index: {}]
  %s2 = inlined_call_operand.vmem [shape: f32[1,16], index: 2, kind: input, shape index: {}]
  %s3 = inlined_call_operand.vmem [shape: bf16[144,32], index: 3, kind: input, shape index: {}]
  %s4 = inlined_call_operand.vmem [shape: f32[1,32], index: 4, kind: input, shape index: {}]
  %s5 = inlined_call_operand.vmem [shape: bf16[288,128], index: 5, kind: input, shape index: {}]
  %s6 = inlined_call_operand.vmem [shape: f32[1,128], index: 6, kind: input, shape index: {}]
  %s7 = inlined_call_operand.vmem [shape: bf16[128,256], index: 7, kind: input, shape index: {}]
  %s8 = inlined_call_operand.vmem [shape: f32[1,256], index: 8, kind: input, shape index: {}]
  %s9 = inlined_call_operand.hbm [shape: f32[1,256], index: 9, kind: output, shape index: {}]
  %s10 = sld [smem:[#allocation0]]
  $region46: #{concat_encoders_forward.1} parent=0
    _
  %s12 = ssub.s32 1, %s10
  %s13 = scalar_select 0, %s12, %s10
  $region1: #{concat_encoders_forward.1} parent=0
    #allocation2 [shape = 'u8[1024]{0}', space=vmem, size = 0x400, scoped, tag = 'output window, operand 0, single buffered']
    #allocation3 [shape = 's32[1]{0}', space=sflag, size = 0x4, scoped, tag = 'scoped memory for concat_encoders_forward.1']
    %14 = vsyncpa [#allocation3], 0
    // Predicated region
    $region2: #{concat_encoders_forward.1} parent=1 // pred_check
      _
    $region3: #{concat_encoders_forward.1} parent=1 // pred_check_branch
      %16 = sbr.rel (0) target = $region5
    $region4: #{concat_encoders_forward.1} parent=1 // pred_region
      _
    $region5: #{concat_encoders_forward.1} parent=1 // pred_fallthru
      _
    // Predicated region
    $region6: #{concat_encoders_forward.1} parent=1 // pred_check
      _
    $region7: #{concat_encoders_forward.1} parent=1 // pred_check_branch
      %18 = sbr.rel (0) target = $region9
    $region8: #{concat_encoders_forward.1} parent=1 // pred_region
      _
    $region9: #{concat_encoders_forward.1} parent=1 // pred_fallthru
      _
    // Predicated region
    $region10: #{concat_encoders_forward.1} parent=1 // pred_check
      _
    $region11: #{concat_encoders_forward.1} parent=1 // pred_check_branch
      %20 = sbr.rel (0) target = $region13
    $region12: #{concat_encoders_forward.1} parent=1 // pred_region
      _
    $region13: #{concat_encoders_forward.1} parent=1 // pred_fallthru
      _
    // Predicated region
    $region14: #{concat_encoders_forward.1} parent=1 // pred_check
      _
    $region15: #{concat_encoders_forward.1} parent=1 // pred_check_branch
      %22 = sbr.rel (0) target = $region17
    $region16: #{concat_encoders_forward.1} parent=1 // pred_region
      _
    $region17: #{concat_encoders_forward.1} parent=1 // pred_fallthru
      _
    // Predicated region
    $region18: #{concat_encoders_forward.1} parent=1 // pred_check
      _
    $region19: #{concat_encoders_forward.1} parent=1 // pred_check_branch
      %24 = sbr.rel (0) target = $region21
    $region20: #{concat_encoders_forward.1} parent=1 // pred_region
      _
    $region21: #{concat_encoders_forward.1} parent=1 // pred_fallthru
      _
    // Predicated region
    $region22: #{concat_encoders_forward.1} parent=1 // pred_check
      _
    $region23: #{concat_encoders_forward.1} parent=1 // pred_check_branch
      %26 = sbr.rel (0) target = $region25
    $region24: #{concat_encoders_forward.1} parent=1 // pred_region
      _
    $region25: #{concat_encoders_forward.1} parent=1 // pred_fallthru
      _
    // Predicated region
    $region26: #{concat_encoders_forward.1} parent=1 // pred_check
      _
    $region27: #{concat_encoders_forward.1} parent=1 // pred_check_branch
      %28 = sbr.rel (0) target = $region29
    $region28: #{concat_encoders_forward.1} parent=1 // pred_region
      _
    $region29: #{concat_encoders_forward.1} parent=1 // pred_fallthru
      _
    // Predicated region
    $region30: #{concat_encoders_forward.1} parent=1 // pred_check
      _
    $region31: #{concat_encoders_forward.1} parent=1 // pred_check_branch
      %30 = sbr.rel (0) target = $region33
    $region32: #{concat_encoders_forward.1} parent=1 // pred_region
      _
    $region33: #{concat_encoders_forward.1} parent=1 // pred_fallthru
      _
    // Predicated region
    $region34: #{concat_encoders_forward.1} parent=1 // pred_check
      _
    $region35: #{concat_encoders_forward.1} parent=1 // pred_check_branch
      %32 = sbr.rel (0) target = $region37
    $region36: #{concat_encoders_forward.1} parent=1 // pred_region
      _
    $region37: #{concat_encoders_forward.1} parent=1 // pred_fallthru
      _
    %v34 = vld [vmem:[%s0] sm:$0xff]
    %v35 = vld [vmem:[%s0 + $0x8] sm:$0xff]
    %v36 = vld [vmem:[%s0 + $0x10] sm:$0xff]
    %v37 = vld [vmem:[%s0 + $0x18] sm:$0xff]
    %v38 = vld [vmem:[%s0 + $0x20] sm:$0xff]
    %v39 = vld [vmem:[%s0 + $0x28] sm:$0xff]
    %v40 = vld [vmem:[%s0 + $0x30] sm:$0xff]
    %v41 = vld [vmem:[%s0 + $0x38] sm:$0xff]
    %v42 = vld [vmem:[%s0 + $0x40] sm:$0xff]
    %v43 = vld [vmem:[%s0 + $0x48] sm:$0xff]
    %v44 = vld [vmem:[%s0 + $0x50] sm:$0xff]
    %v45 = vld [vmem:[%s0 + $0x58] sm:$0xff]
    %v46 = vld [vmem:[%s0 + $0x60] sm:$0xff]
    %v47 = vld [vmem:[%s0 + $0x68] sm:$0xff]
    %v48 = vld [vmem:[%s0 + $0x70] sm:$0xff]
    %v49 = vld [vmem:[%s0 + $0x78] sm:$0xff]
    %v50 = vld [vmem:[%s0 + $0x80] sm:$0xff]
    %v51 = vld [vmem:[%s0 + $0x88] sm:$0xff]
    %v52 = vld [vmem:[%s0 + $0x90] sm:$0x7]
    %v53 = vpack.c.bf16 %v35, %v34
    %v54 = vpack.c.bf16 %v37, %v36
    %v55 = vpack.c.bf16 %v39, %v38
    %v56 = vpack.c.bf16 %v41, %v40
    %v57 = vpack.c.bf16 %v43, %v42
    %v58 = vpack.c.bf16 %v45, %v44
    %v59 = vpack.c.bf16 %v47, %v46
    %v60 = vpack.c.bf16 %v49, %v48
    %v61 = vpack.c.bf16 %v51, %v50
    %v62 = vpack.c.bf16 %v52, %v52
    %v63 = vld [vmem:[%s1] sm:$0xf]
    %v64 = vld [vmem:[%s1 + $0x4] sm:$0xf]
    %v65 = vld [vmem:[%s1 + $0x8] sm:$0xf]
    %v66 = vld [vmem:[%s1 + $0xc] sm:$0xf]
    %v67 = vld [vmem:[%s1 + $0x10] sm:$0xf]
    %v68 = vld [vmem:[%s1 + $0x14] sm:$0xf]
    %v69 = vld [vmem:[%s1 + $0x18] sm:$0xf]
    %v70 = vld [vmem:[%s1 + $0x1c] sm:$0xf]
    %v71 = vld [vmem:[%s2] sm:$0x1]
    %v73 = vlaneseq
    %v74 = vshrl.u32 %v73, 7
    %v75 = vsub.s32 0, %v74
    %v76 = vrot.slane %v71, %v75
    %v86 = vunpack.c.l.b16 %v63
    %v87 = vunpack.c.l.b16 %v64
    %v88 = vunpack.c.l.b16 %v65
    %v89 = vunpack.c.l.b16 %v66
    %v90 = vunpack.c.l.b16 %v67
    %v91 = vunpack.c.l.b16 %v68
    %v92 = vunpack.c.l.b16 %v69
    %v93 = vunpack.c.l.b16 %v70
    %v94 = vpack.c.b16 %v87, %v86
    %v95 = vpack.c.b16 %v89, %v88
    %v96 = vpack.c.b16 %v91, %v90
    %v97 = vpack.c.b16 %v93, %v92
    %vm102 = vcmask 523264
    %v104 = vsel %vm102, %v53, 0
    %v107 = vsel %vm102, %v54, 0
    %v110 = vsel %vm102, %v55, 0
    %v113 = vsel %vm102, %v56, 0
    %v116 = vsel %vm102, %v57, 0
    %v119 = vsel %vm102, %v58, 0
    %v122 = vsel %vm102, %v59, 0
    %v125 = vsel %vm102, %v60, 0
    %v128 = vsel %vm102, %v61, 0
    %v131 = vsel %vm102, %v62, 0
    %133 = vmatprep.subr.bf16.mxu0 0
    %134 = vmatpush1.bf16.msra.mxu0 %v94
    %135 = vmatprep.subr.bf16.mxu0 0
    %136 = vmatpush1.bf16.msra.mxu0 %v95
    %137 = vmatprep.subr.bf16.mxu0 0
    %138 = vmatpush1.bf16.msra.mxu0 %v96
    %139 = vmatprep.subr.bf16.mxu0 0
    %140 = vmatpush1.bf16.msra.mxu0 %v97
    %141 = vmatprep.subr.bf16.mxu0 0
    %142 = vmatpush1.bf16.msra.mxu0 0
    %143 = vmatprep.subr.bf16.mxu0 0
    %144 = vmatpush1.bf16.msra.mxu0 0
    %145 = vmatprep.subr.bf16.mxu0 0
    %146 = vmatpush1.bf16.msra.mxu0 0
    %147 = vmatprep.subr.bf16.mxu0 0
    %148 = vmatpush1.bf16.msra.mxu0 0
    %149 = vmatprep.subr.bf16.mxu0 0
    %150 = vmatpush1.bf16.msra.mxu0 0
    %151 = vmatprep.subr.bf16.mxu0 0
    %152 = vmatpush1.bf16.msra.mxu0 0
    %153 = vmatprep.subr.bf16.mxu0 0
    %154 = vmatpush1.bf16.msra.mxu0 0
    %155 = vmatprep.subr.bf16.mxu0 0
    %156 = vmatpush1.bf16.msra.mxu0 0
    %157 = vmatprep.subr.bf16.mxu0 0
    %158 = vmatpush1.bf16.msra.mxu0 0
    %159 = vmatprep.subr.bf16.mxu0 0
    %160 = vmatpush1.bf16.msra.mxu0 0
    %161 = vmatprep.subr.bf16.mxu0 0
    %162 = vmatpush1.bf16.msra.mxu0 0
    %163 = vmatprep.subr.bf16.mxu0 0
    %164 = vmatpush1.bf16.msra.mxu0 0
    %165 = vmatprep.mubr.bf16.mxu0 0
    %166 = vmatmul.mubr.bf16.gmra.mrb[0].mxu0 %v104
    %v167 = vpop.f32.mrb[0].mxu0
    %v168 = vadd.f32 %v76, %v167
    %v169 = vpop.f32.mrb[0].mxu0
    %v170 = vpop.f32.mrb[0].mxu0
    %v171 = vadd.f32 %v76, %v170
    %v172 = vpop.f32.mrb[0].mxu0
    %173 = vmatprep.mubr.bf16.mxu0 0
    %174 = vmatmul.mubr.bf16.gmra.mrb[0].mxu0 %v107
    %v175 = vpop.f32.mrb[0].mxu0
    %v176 = vadd.f32 %v76, %v175
    %v177 = vpop.f32.mrb[0].mxu0
    %v178 = vpop.f32.mrb[0].mxu0
    %v179 = vadd.f32 %v76, %v178
    %v180 = vpop.f32.mrb[0].mxu0
    %181 = vmatprep.mubr.bf16.mxu0 0
    %182 = vmatmul.mubr.bf16.gmra.mrb[0].mxu0 %v110
    %v183 = vpop.f32.mrb[0].mxu0
    %v184 = vadd.f32 %v76, %v183
    %v185 = vpop.f32.mrb[0].mxu0
    %v186 = vpop.f32.mrb[0].mxu0
    %v187 = vadd.f32 %v76, %v186
    %v188 = vpop.f32.mrb[0].mxu0
    %189 = vmatprep.mubr.bf16.mxu0 0
    %190 = vmatmul.mubr.bf16.gmra.mrb[0].mxu0 %v113
    %v191 = vpop.f32.mrb[0].mxu0
    %v192 = vadd.f32 %v76, %v191
    %v193 = vpop.f32.mrb[0].mxu0
    %v194 = vpop.f32.mrb[0].mxu0
    %v195 = vadd.f32 %v76, %v194
    %v196 = vpop.f32.mrb[0].mxu0
    %197 = vmatprep.mubr.bf16.mxu0 0
    %198 = vmatmul.mubr.bf16.gmra.mrb[0].mxu0 %v116
    %v199 = vpop.f32.mrb[0].mxu0
    %v200 = vadd.f32 %v76, %v199
    %v201 = vpop.f32.mrb[0].mxu0
    %v202 = vpop.f32.mrb[0].mxu0
    %v203 = vadd.f32 %v76, %v202
    %v204 = vpop.f32.mrb[0].mxu0
    %205 = vmatprep.mubr.bf16.mxu0 0
    %206 = vmatmul.mubr.bf16.gmra.mrb[0].mxu0 %v119
    %v207 = vpop.f32.mrb[0].mxu0
    %v208 = vadd.f32 %v76, %v207
    %v209 = vpop.f32.mrb[0].mxu0
    %v210 = vpop.f32.mrb[0].mxu0
    %v211 = vadd.f32 %v76, %v210
    %v212 = vpop.f32.mrb[0].mxu0
    %213 = vmatprep.mubr.bf16.mxu0 0
    %214 = vmatmul.mubr.bf16.gmra.mrb[0].mxu0 %v122
    %v215 = vpop.f32.mrb[0].mxu0
    %v216 = vadd.f32 %v76, %v215
    %v217 = vpop.f32.mrb[0].mxu0
    %v218 = vpop.f32.mrb[0].mxu0
    %v219 = vadd.f32 %v76, %v218
    %v220 = vpop.f32.mrb[0].mxu0
    %221 = vmatprep.mubr.bf16.mxu0 0
    %222 = vmatmul.mubr.bf16.gmra.mrb[0].mxu0 %v125
    %v223 = vpop.f32.mrb[0].mxu0
    %v224 = vadd.f32 %v76, %v223
    %v225 = vpop.f32.mrb[0].mxu0
    %v226 = vpop.f32.mrb[0].mxu0
    %v227 = vadd.f32 %v76, %v226
    %v228 = vpop.f32.mrb[0].mxu0
    %229 = vmatprep.mubr.bf16.mxu0 0
    %230 = vmatmul.mubr.bf16.gmra.mrb[0].mxu0 %v128
    %v231 = vpop.f32.mrb[0].mxu0
    %v232 = vadd.f32 %v76, %v231
    %v233 = vpop.f32.mrb[0].mxu0
    %v234 = vpop.f32.mrb[0].mxu0
    %v235 = vadd.f32 %v76, %v234
    %v236 = vpop.f32.mrb[0].mxu0
    %237 = vmatprep.mubr.bf16.mxu0 0
    %238 = vmatmul.mubr.bf16.gmra.mrb[0].mxu0 %v131
    %v239 = vpop.f32.mrb[0].mxu0
    %v240 = vadd.f32 %v76, %v239
    %v241 = vpop.f32.mrb[0].mxu0
    %v242 = vpop.f32.mrb[0].mxu0
    %v243 = vpop.f32.mrb[0].mxu0
    %244 = vdwg.mxu0
    %v245 = vmax.f32 %v168, 0.0
    %v246 = vmax.f32 %v171, 0.0
    %v247 = vmax.f32 %v176, 0.0
    %v248 = vmax.f32 %v179, 0.0
    %v249 = vmax.f32 %v184, 0.0
    %v250 = vmax.f32 %v187, 0.0
    %v251 = vmax.f32 %v192, 0.0
    %v252 = vmax.f32 %v195, 0.0
    %v253 = vmax.f32 %v200, 0.0
    %v254 = vmax.f32 %v203, 0.0
    %v255 = vmax.f32 %v208, 0.0
    %v256 = vmax.f32 %v211, 0.0
    %v257 = vmax.f32 %v216, 0.0
    %v258 = vmax.f32 %v219, 0.0
    %v259 = vmax.f32 %v224, 0.0
    %v260 = vmax.f32 %v227, 0.0
    %v261 = vmax.f32 %v232, 0.0
    %v262 = vmax.f32 %v235, 0.0
    %v263 = vmax.f32 %v240, 0.0
    %v264 = vpack.c.bf16 %v245, %v245
    %v265 = vld [vmem:[%s3] sm:$0xf]
    %v266 = vld [vmem:[%s3 + $0x4] sm:$0xf]
    %v267 = vld [vmem:[%s3 + $0x8] sm:$0xf]
    %v268 = vld [vmem:[%s3 + $0xc] sm:$0xf]
    %v270 = vshrl.u32 %v264, 16
    %v272 = vrot.slane %v270, 1
    %v273 = vshll.u32 %v264, 16
    %v275 = vrot.slane %v273, 2
    %v276 = vor.u32 %v272, %v275
    %v279 = vunpack.c.l.b16 %v267
    %v280 = vunpack.c.l.b16 %v268
    %v281 = vpack.c.b16 %v280, %v279
    %vm283 = vcmask 130048
    %v285 = vsel %vm283, %v276, 0
    %287 = vmatprep.subr.bf16.mxu0 0
    %288 = vmatpush1.bf16.msra.mxu0 %v281
    %289 = vmatprep.subr.bf16.mxu0 0
    %290 = vmatpush1.bf16.msra.mxu0 0
    %291 = vmatprep.subr.bf16.mxu0 0
    %292 = vmatpush1.bf16.msra.mxu0 0
    %293 = vmatprep.subr.bf16.mxu0 0
    %294 = vmatpush1.bf16.msra.mxu0 0
    %295 = vmatprep.subr.bf16.mxu0 0
    %296 = vmatpush1.bf16.msra.mxu0 0
    %297 = vmatprep.subr.bf16.mxu0 0
    %298 = vmatpush1.bf16.msra.mxu0 0
    %299 = vmatprep.subr.bf16.mxu0 0
    %300 = vmatpush1.bf16.msra.mxu0 0
    %301 = vmatprep.subr.bf16.mxu0 0
    %302 = vmatpush1.bf16.msra.mxu0 0
    %303 = vmatprep.subr.bf16.mxu0 0
    %304 = vmatpush1.bf16.msra.mxu0 0
    %305 = vmatprep.subr.bf16.mxu0 0
    %306 = vmatpush1.bf16.msra.mxu0 0
    %307 = vmatprep.subr.bf16.mxu0 0
    %308 = vmatpush1.bf16.msra.mxu0 0
    %309 = vmatprep.subr.bf16.mxu0 0
    %310 = vmatpush1.bf16.msra.mxu0 0
    %311 = vmatprep.subr.bf16.mxu0 0
    %312 = vmatpush1.bf16.msra.mxu0 0
    %313 = vmatprep.subr.bf16.mxu0 0
    %314 = vmatpush1.bf16.msra.mxu0 0
    %315 = vmatprep.subr.bf16.mxu0 0
    %316 = vmatpush1.bf16.msra.mxu0 0
    %317 = vmatprep.subr.bf16.mxu0 0
    %318 = vmatpush1.bf16.msra.mxu0 0
    %319 = vmatprep.mubr.bf16.mxu0 0
    %320 = vmatmul.mubr.bf16.gmra.mrb[0].mxu0 %v285
    %v321 = vpop.f32.mrb[0].mxu0
    %v322 = vadd.f32 0.0, %v321
    %v323 = vpop.f32.mrb[0].mxu0
    %v324 = vpop.f32.mrb[0].mxu0
    %v325 = vpop.f32.mrb[0].mxu0
    %326 = vdwg.mxu0
    %v329 = vunpack.c.l.b16 %v265
    %v330 = vunpack.c.l.b16 %v266
    %v331 = vpack.c.b16 %v330, %v329
    %v333 = vsel %vm283, %v264, 0
    %335 = vmatprep.subr.bf16.mxu0 0
    %336 = vmatpush1.bf16.msra.mxu0 %v331
    %337 = vmatprep.subr.bf16.mxu0 0
    %338 = vmatpush1.bf16.msra.mxu0 0
    %339 = vmatprep.subr.bf16.mxu0 0
    %340 = vmatpush1.bf16.msra.mxu0 0
    %341 = vmatprep.subr.bf16.mxu0 0
    %342 = vmatpush1.bf16.msra.mxu0 0
    %343 = vmatprep.subr.bf16.mxu0 0
    %344 = vmatpush1.bf16.msra.mxu0 0
    %345 = vmatprep.subr.bf16.mxu0 0
    %346 = vmatpush1.bf16.msra.mxu0 0
    %347 = vmatprep.subr.bf16.mxu0 0
    %348 = vmatpush1.bf16.msra.mxu0 0
    %349 = vmatprep.subr.bf16.mxu0 0
    %350 = vmatpush1.bf16.msra.mxu0 0
    %351 = vmatprep.subr.bf16.mxu0 0
    %352 = vmatpush1.bf16.msra.mxu0 0
    %353 = vmatprep.subr.bf16.mxu0 0
    %354 = vmatpush1.bf16.msra.mxu0 0
    %355 = vmatprep.subr.bf16.mxu0 0
    %356 = vmatpush1.bf16.msra.mxu0 0
    %357 = vmatprep.subr.bf16.mxu0 0
    %358 = vmatpush1.bf16.msra.mxu0 0
    %359 = vmatprep.subr.bf16.mxu0 0
    %360 = vmatpush1.bf16.msra.mxu0 0
    %361 = vmatprep.subr.bf16.mxu0 0
    %362 = vmatpush1.bf16.msra.mxu0 0
    %363 = vmatprep.subr.bf16.mxu0 0
    %364 = vmatpush1.bf16.msra.mxu0 0
    %365 = vmatprep.subr.bf16.mxu0 0
    %366 = vmatpush1.bf16.msra.mxu0 0
    %367 = vmatprep.mubr.bf16.mxu0 0
    %368 = vmatmul.mubr.bf16.gmra.mrb[0].mxu0 %v333
    %v369 = vpop.f32.mrb[0].mxu0
    %v370 = vadd.f32 %v322, %v369
    %v371 = vpop.f32.mrb[0].mxu0
    %v372 = vpop.f32.mrb[0].mxu0
    %v373 = vpop.f32.mrb[0].mxu0
    %374 = vdwg.mxu0
    %v375 = vpack.c.bf16 %v246, %v245
    %v376 = vld [vmem:[%s3 + $0x10] sm:$0xf]
    %v377 = vld [vmem:[%s3 + $0x14] sm:$0xf]
    %v379 = vrot.slane %v375, 3
    %v382 = vunpack.c.l.b16 %v376
    %v383 = vunpack.c.l.b16 %v377
    %v384 = vpack.c.b16 %v383, %v382
    %v387 = vsel %vm283, %v379, 0
    %389 = vmatprep.subr.bf16.mxu0 0
    %390 = vmatpush1.bf16.msra.mxu0 %v384
    %391 = vmatprep.subr.bf16.mxu0 0
    %392 = vmatpush1.bf16.msra.mxu0 0
    %393 = vmatprep.subr.bf16.mxu0 0
    %394 = vmatpush1.bf16.msra.mxu0 0
    %395 = vmatprep.subr.bf16.mxu0 0
    %396 = vmatpush1.bf16.msra.mxu0 0
    %397 = vmatprep.subr.bf16.mxu0 0
    %398 = vmatpush1.bf16.msra.mxu0 0
    %399 = vmatprep.subr.bf16.mxu0 0
    %400 = vmatpush1.bf16.msra.mxu0 0
    %401 = vmatprep.subr.bf16.mxu0 0
    %402 = vmatpush1.bf16.msra.mxu0 0
    %403 = vmatprep.subr.bf16.mxu0 0
    %404 = vmatpush1.bf16.msra.mxu0 0
    %405 = vmatprep.subr.bf16.mxu0 0
    %406 = vmatpush1.bf16.msra.mxu0 0
    %407 = vmatprep.subr.bf16.mxu0 0
    %408 = vmatpush1.bf16.msra.mxu0 0
    %409 = vmatprep.subr.bf16.mxu0 0
    %410 = vmatpush1.bf16.msra.mxu0 0
    %411 = vmatprep.subr.bf16.mxu0 0
    %412 = vmatpush1.bf16.msra.mxu0 0
    %413 = vmatprep.subr.bf16.mxu0 0
    %414 = vmatpush1.bf16.msra.mxu0 0
    %415 = vmatprep.subr.bf16.mxu0 0
    %416 = vmatpush1.bf16.msra.mxu0 0
    %417 = vmatprep.subr.bf16.mxu0 0
    %418 = vmatpush1.bf16.msra.mxu0 0
    %419 = vmatprep.subr.bf16.mxu0 0
    %420 = vmatpush1.bf16.msra.mxu0 0
    %421 = vmatprep.mubr.bf16.mxu0 0
    %422 = vmatmul.mubr.bf16.gmra.mrb[0].mxu0 %v387
    %v423 = vpop.f32.mrb[0].mxu0
    %v424 = vadd.f32 0.0, %v423
    %v425 = vpop.f32.mrb[0].mxu0
    %v426 = vpop.f32.mrb[0].mxu0
    %v427 = vpop.f32.mrb[0].mxu0
    %428 = vdwg.mxu0
    %v429 = vadd.f32 %v370, %v424
    %v430 = vpack.c.bf16 %v247, %v247
    %v431 = vld [vmem:[%s3 + $0x18] sm:$0xf]
    %v432 = vld [vmem:[%s3 + $0x1c] sm:$0xf]
    %v434 = vshrl.u32 %v430, 16
    %v436 = vrot.slane %v434, 2
    %v437 = vshll.u32 %v430, 16
    %v439 = vrot.slane %v437, 3
    %v440 = vor.u32 %v436, %v439
    %v443 = vunpack.c.l.b16 %v431
    %v444 = vunpack.c.l.b16 %v432
    %v445 = vpack.c.b16 %v444, %v443
    %v448 = vsel %vm283, %v440, 0
    %450 = vmatprep.subr.bf16.mxu0 0
    %451 = vmatpush1.bf16.msra.mxu0 %v445
    %452 = vmatprep.subr.bf16.mxu0 0
    %453 = vmatpush1.bf16.msra.mxu0 0
    %454 = vmatprep.subr.bf16.mxu0 0
    %455 = vmatpush1.bf16.msra.mxu0 0
    %456 = vmatprep.subr.bf16.mxu0 0
    %457 = vmatpush1.bf16.msra.mxu0 0
    %458 = vmatprep.subr.bf16.mxu0 0
    %459 = vmatpush1.bf16.msra.mxu0 0
    %460 = vmatprep.subr.bf16.mxu0 0
    %461 = vmatpush1.bf16.msra.mxu0 0
    %462 = vmatprep.subr.bf16.mxu0 0
    %463 = vmatpush1.bf16.msra.mxu0 0
    %464 = vmatprep.subr.bf16.mxu0 0
    %465 = vmatpush1.bf16.msra.mxu0 0
    %466 = vmatprep.subr.bf16.mxu0 0
    %467 = vmatpush1.bf16.msra.mxu0 0
    %468 = vmatprep.subr.bf16.mxu0 0
    %469 = vmatpush1.bf16.msra.mxu0 0
    %470 = vmatprep.subr.bf16.mxu0 0
    %471 = vmatpush1.bf16.msra.mxu0 0
    %472 = vmatprep.subr.bf16.mxu0 0
    %473 = vmatpush1.bf16.msra.mxu0 0
    %474 = vmatprep.subr.bf16.mxu0 0
    %475 = vmatpush1.bf16.msra.mxu0 0
    %476 = vmatprep.subr.bf16.mxu0 0
    %477 = vmatpush1.bf16.msra.mxu0 0
    %478 = vmatprep.subr.bf16.mxu0 0
    %479 = vmatpush1.bf16.msra.mxu0 0
    %480 = vmatprep.subr.bf16.mxu0 0
    %481 = vmatpush1.bf16.msra.mxu0 0
    %482 = vmatprep.mubr.bf16.mxu0 0
    %483 = vmatmul.mubr.bf16.gmra.mrb[0].mxu0 %v448
    %v484 = vpop.f32.mrb[0].mxu0
    %v485 = vadd.f32 0.0, %v484
    %v486 = vpop.f32.mrb[0].mxu0
    %v487 = vpop.f32.mrb[0].mxu0
    %v488 = vpop.f32.mrb[0].mxu0
    %489 = vdwg.mxu0
    %v490 = vadd.f32 %v429, %v485
    %v491 = vpack.c.bf16 %v248, %v248
    %v492 = vld [vmem:[%s3 + $0x20] sm:$0xf]
    %v493 = vld [vmem:[%s3 + $0x24] sm:$0xf]
    %v496 = vunpack.c.l.b16 %v492
    %v497 = vunpack.c.l.b16 %v493
    %v498 = vpack.c.b16 %v497, %v496
    %v501 = vsel %vm283, %v491, 0
    %503 = vmatprep.subr.bf16.mxu0 0
    %504 = vmatpush1.bf16.msra.mxu0 %v498
    %505 = vmatprep.subr.bf16.mxu0 0
    %506 = vmatpush1.bf16.msra.mxu0 0
    %507 = vmatprep.subr.bf16.mxu0 0
    %508 = vmatpush1.bf16.msra.mxu0 0
    %509 = vmatprep.subr.bf16.mxu0 0
    %510 = vmatpush1.bf16.msra.mxu0 0
    %511 = vmatprep.subr.bf16.mxu0 0
    %512 = vmatpush1.bf16.msra.mxu0 0
    %513 = vmatprep.subr.bf16.mxu0 0
    %514 = vmatpush1.bf16.msra.mxu0 0
    %515 = vmatprep.subr.bf16.mxu0 0
    %516 = vmatpush1.bf16.msra.mxu0 0
    %517 = vmatprep.subr.bf16.mxu0 0
    %518 = vmatpush1.bf16.msra.mxu0 0
    %519 = vmatprep.subr.bf16.mxu0 0
    %520 = vmatpush1.bf16.msra.mxu0 0
    %521 = vmatprep.subr.bf16.mxu0 0
    %522 = vmatpush1.bf16.msra.mxu0 0
    %523 = vmatprep.subr.bf16.mxu0 0
    %524 = vmatpush1.bf16.msra.mxu0 0
    %525 = vmatprep.subr.bf16.mxu0 0
    %526 = vmatpush1.bf16.msra.mxu0 0
    %527 = vmatprep.subr.bf16.mxu0 0
    %528 = vmatpush1.bf16.msra.mxu0 0
    %529 = vmatprep.subr.bf16.mxu0 0
    %530 = vmatpush1.bf16.msra.mxu0 0
    %531 = vmatprep.subr.bf16.mxu0 0
    %532 = vmatpush1.bf16.msra.mxu0 0
    %533 = vmatprep.subr.bf16.mxu0 0
    %534 = vmatpush1.bf16.msra.mxu0 0
    %535 = vmatprep.mubr.bf16.mxu0 0
    %536 = vmatmul.mubr.bf16.gmra.mrb[0].mxu0 %v501
    %v537 = vpop.f32.mrb[0].mxu0
    %v538 = vadd.f32 0.0, %v537
    %v539 = vpop.f32.mrb[0].mxu0
    %v540 = vpop.f32.mrb[0].mxu0
    %v541 = vpop.f32.mrb[0].mxu0
    %542 = vdwg.mxu0
    %v543 = vadd.f32 %v490, %v538
    %v544 = vld [vmem:[%s3 + $0x28] sm:$0xf]
    %v545 = vld [vmem:[%s3 + $0x2c] sm:$0xf]
    %v546 = vshrl.u32 %v491, 16
    %v548 = vrot.slane %v546, 1
    %v549 = vshll.u32 %v491, 16
    %v551 = vrot.slane %v549, 2
    %v552 = vor.u32 %v548, %v551
    %v555 = vunpack.c.l.b16 %v544
    %v556 = vunpack.c.l.b16 %v545
    %v557 = vpack.c.b16 %v556, %v555
    %v560 = vsel %vm283, %v552, 0
    %562 = vmatprep.subr.bf16.mxu0 0
    %563 = vmatpush1.bf16.msra.mxu0 %v557
    %564 = vmatprep.subr.bf16.mxu0 0
    %565 = vmatpush1.bf16.msra.mxu0 0
    %566 = vmatprep.subr.bf16.mxu0 0
    %567 = vmatpush1.bf16.msra.mxu0 0
    %568 = vmatprep.subr.bf16.mxu0 0
    %569 = vmatpush1.bf16.msra.mxu0 0
    %570 = vmatprep.subr.bf16.mxu0 0
    %571 = vmatpush1.bf16.msra.mxu0 0
    %572 = vmatprep.subr.bf16.mxu0 0
    %573 = vmatpush1.bf16.msra.mxu0 0
    %574 = vmatprep.subr.bf16.mxu0 0
    %575 = vmatpush1.bf16.msra.mxu0 0
    %576 = vmatprep.subr.bf16.mxu0 0
    %577 = vmatpush1.bf16.msra.mxu0 0
    %578 = vmatprep.subr.bf16.mxu0 0
    %579 = vmatpush1.bf16.msra.mxu0 0
    %580 = vmatprep.subr.bf16.mxu0 0
    %581 = vmatpush1.bf16.msra.mxu0 0
    %582 = vmatprep.subr.bf16.mxu0 0
    %583 = vmatpush1.bf16.msra.mxu0 0
    %584 = vmatprep.subr.bf16.mxu0 0
    %585 = vmatpush1.bf16.msra.mxu0 0
    %586 = vmatprep.subr.bf16.mxu0 0
    %587 = vmatpush1.bf16.msra.mxu0 0
    %588 = vmatprep.subr.bf16.mxu0 0
    %589 = vmatpush1.bf16.msra.mxu0 0
    %590 = vmatprep.subr.bf16.mxu0 0
    %591 = vmatpush1.bf16.msra.mxu0 0
    %592 = vmatprep.subr.bf16.mxu0 0
    %593 = vmatpush1.bf16.msra.mxu0 0
    %594 = vmatprep.mubr.bf16.mxu0 0
    %595 = vmatmul.mubr.bf16.gmra.mrb[0].mxu0 %v560
    %v596 = vpop.f32.mrb[0].mxu0
    %v597 = vadd.f32 0.0, %v596
    %v598 = vpop.f32.mrb[0].mxu0
    %v599 = vpop.f32.mrb[0].mxu0
    %v600 = vpop.f32.mrb[0].mxu0
    %601 = vdwg.mxu0
    %v602 = vadd.f32 %v543, %v597
    %v603 = vpack.c.bf16 %v250, %v250
    %v604 = vld [vmem:[%s3 + $0x30] sm:$0xf]
    %v605 = vld [vmem:[%s3 + $0x34] sm:$0xf]
    %v607 = vrot.slane %v603, 1
    %v610 = vunpack.c.l.b16 %v604
    %v611 = vunpack.c.l.b16 %v605
    %v612 = vpack.c.b16 %v611, %v610
    %v615 = vsel %vm283, %v607, 0
    %617 = vmatprep.subr.bf16.mxu0 0
    %618 = vmatpush1.bf16.msra.mxu0 %v612
    %619 = vmatprep.subr.bf16.mxu0 0
    %620 = vmatpush1.bf16.msra.mxu0 0
    %621 = vmatprep.subr.bf16.mxu0 0
    %622 = vmatpush1.bf16.msra.mxu0 0
    %623 = vmatprep.subr.bf16.mxu0 0
    %624 = vmatpush1.bf16.msra.mxu0 0
    %625 = vmatprep.subr.bf16.mxu0 0
    %626 = vmatpush1.bf16.msra.mxu0 0
    %627 = vmatprep.subr.bf16.mxu0 0
    %628 = vmatpush1.bf16.msra.mxu0 0
    %629 = vmatprep.subr.bf16.mxu0 0
    %630 = vmatpush1.bf16.msra.mxu0 0
    %631 = vmatprep.subr.bf16.mxu0 0
    %632 = vmatpush1.bf16.msra.mxu0 0
    %633 = vmatprep.subr.bf16.mxu0 0
    %634 = vmatpush1.bf16.msra.mxu0 0
    %635 = vmatprep.subr.bf16.mxu0 0
    %636 = vmatpush1.bf16.msra.mxu0 0
    %637 = vmatprep.subr.bf16.mxu0 0
    %638 = vmatpush1.bf16.msra.mxu0 0
    %639 = vmatprep.subr.bf16.mxu0 0
    %640 = vmatpush1.bf16.msra.mxu0 0
    %641 = vmatprep.subr.bf16.mxu0 0
    %642 = vmatpush1.bf16.msra.mxu0 0
    %643 = vmatprep.subr.bf16.mxu0 0
    %644 = vmatpush1.bf16.msra.mxu0 0
    %645 = vmatprep.subr.bf16.mxu0 0
    %646 = vmatpush1.bf16.msra.mxu0 0
    %647 = vmatprep.subr.bf16.mxu0 0
    %648 = vmatpush1.bf16.msra.mxu0 0
    %649 = vmatprep.mubr.bf16.mxu0 0
    %650 = vmatmul.mubr.bf16.gmra.mrb[0].mxu0 %v615
    %v651 = vpop.f32.mrb[0].mxu0
    %v652 = vadd.f32 0.0, %v651
    %v653 = vpop.f32.mrb[0].mxu0
    %v654 = vpop.f32.mrb[0].mxu0
    %v655 = vpop.f32.mrb[0].mxu0
    %656 = vdwg.mxu0
    %v657 = vadd.f32 %v602, %v652
    %v658 = vld [vmem:[%s3 + $0x38] sm:$0xf]
    %v659 = vld [vmem:[%s3 + $0x3c] sm:$0xf]
    %v661 = vshrl.u32 %v603, 16
    %v663 = vrot.slane %v661, 2
    %v664 = vshll.u32 %v603, 16
    %v666 = vrot.slane %v664, 3
    %v667 = vor.u32 %v663, %v666
    %v670 = vunpack.c.l.b16 %v658
    %v671 = vunpack.c.l.b16 %v659
    %v672 = vpack.c.b16 %v671, %v670
    %v675 = vsel %vm283, %v667, 0
    %677 = vmatprep.subr.bf16.mxu0 0
    %678 = vmatpush1.bf16.msra.mxu0 %v672
    %679 = vmatprep.subr.bf16.mxu0 0
    %680 = vmatpush1.bf16.msra.mxu0 0
    %681 = vmatprep.subr.bf16.mxu0 0
    %682 = vmatpush1.bf16.msra.mxu0 0
    %683 = vmatprep.subr.bf16.mxu0 0
    %684 = vmatpush1.bf16.msra.mxu0 0
    %685 = vmatprep.subr.bf16.mxu0 0
    %686 = vmatpush1.bf16.msra.mxu0 0
    %687 = vmatprep.subr.bf16.mxu0 0
    %688 = vmatpush1.bf16.msra.mxu0 0
    %689 = vmatprep.subr.bf16.mxu0 0
    %690 = vmatpush1.bf16.msra.mxu0 0
    %691 = vmatprep.subr.bf16.mxu0 0
    %692 = vmatpush1.bf16.msra.mxu0 0
    %693 = vmatprep.subr.bf16.mxu0 0
    %694 = vmatpush1.bf16.msra.mxu0 0
    %695 = vmatprep.subr.bf16.mxu0 0
    %696 = vmatpush1.bf16.msra.mxu0 0
    %697 = vmatprep.subr.bf16.mxu0 0
    %698 = vmatpush1.bf16.msra.mxu0 0
    %699 = vmatprep.subr.bf16.mxu0 0
    %700 = vmatpush1.bf16.msra.mxu0 0
    %701 = vmatprep.subr.bf16.mxu0 0
    %702 = vmatpush1.bf16.msra.mxu0 0
    %703 = vmatprep.subr.bf16.mxu0 0
    %704 = vmatpush1.bf16.msra.mxu0 0
    %705 = vmatprep.subr.bf16.mxu0 0
    %706 = vmatpush1.bf16.msra.mxu0 0
    %707 = vmatprep.subr.bf16.mxu0 0
    %708 = vmatpush1.bf16.msra.mxu0 0
    %709 = vmatprep.mubr.bf16.mxu0 0
    %710 = vmatmul.mubr.bf16.gmra.mrb[0].mxu0 %v675
    %v711 = vpop.f32.mrb[0].mxu0
    %v712 = vadd.f32 0.0, %v711
    %v713 = vpop.f32.mrb[0].mxu0
    %v714 = vpop.f32.mrb[0].mxu0
    %v715 = vpop.f32.mrb[0].mxu0
    %716 = vdwg.mxu0
    %v717 = vadd.f32 %v657, %v712
    %v718 = vpack.c.bf16 %v251, %v251
    %v719 = vld [vmem:[%s3 + $0x40] sm:$0xf]
    %v720 = vld [vmem:[%s3 + $0x44] sm:$0xf]
    %v723 = vunpack.c.l.b16 %v719
    %v724 = vunpack.c.l.b16 %v720
    %v725 = vpack.c.b16 %v724, %v723
    %v728 = vsel %vm283, %v718, 0
    %730 = vmatprep.subr.bf16.mxu0 0
    %731 = vmatpush1.bf16.msra.mxu0 %v725
    %732 = vmatprep.subr.bf16.mxu0 0
    %733 = vmatpush1.bf16.msra.mxu0 0
    %734 = vmatprep.subr.bf16.mxu0 0
    %735 = vmatpush1.bf16.msra.mxu0 0
    %736 = vmatprep.subr.bf16.mxu0 0
    %737 = vmatpush1.bf16.msra.mxu0 0
    %738 = vmatprep.subr.bf16.mxu0 0
    %739 = vmatpush1.bf16.msra.mxu0 0
    %740 = vmatprep.subr.bf16.mxu0 0
    %741 = vmatpush1.bf16.msra.mxu0 0
    %742 = vmatprep.subr.bf16.mxu0 0
    %743 = vmatpush1.bf16.msra.mxu0 0
    %744 = vmatprep.subr.bf16.mxu0 0
    %745 = vmatpush1.bf16.msra.mxu0 0
    %746 = vmatprep.subr.bf16.mxu0 0
    %747 = vmatpush1.bf16.msra.mxu0 0
    %748 = vmatprep.subr.bf16.mxu0 0
    %749 = vmatpush1.bf16.msra.mxu0 0
    %750 = vmatprep.subr.bf16.mxu0 0
    %751 = vmatpush1.bf16.msra.mxu0 0
    %752 = vmatprep.subr.bf16.mxu0 0
    %753 = vmatpush1.bf16.msra.mxu0 0
    %754 = vmatprep.subr.bf16.mxu0 0
    %755 = vmatpush1.bf16.msra.mxu0 0
    %756 = vmatprep.subr.bf16.mxu0 0
    %757 = vmatpush1.bf16.msra.mxu0 0
    %758 = vmatprep.subr.bf16.mxu0 0
    %759 = vmatpush1.bf16.msra.mxu0 0
    %760 = vmatprep.subr.bf16.mxu0 0
    %761 = vmatpush1.bf16.msra.mxu0 0
    %762 = vmatprep.mubr.bf16.mxu0 0
    %763 = vmatmul.mubr.bf16.gmra.mrb[0].mxu0 %v728
    %v764 = vpop.f32.mrb[0].mxu0
    %v765 = vadd.f32 0.0, %v764
    %v766 = vpop.f32.mrb[0].mxu0
    %v767 = vpop.f32.mrb[0].mxu0
    %v768 = vpop.f32.mrb[0].mxu0
    %769 = vdwg.mxu0
    %v770 = vadd.f32 %v717, %v765
    %v771 = vld [vmem:[%s4] sm:$0x1]
    %v773 = vlaneseq
    %v774 = vshrl.u32 %v773, 7
    %v775 = vsub.s32 0, %v774
    %v776 = vrot.slane %v771, %v775
    %v778 = vadd.f32 %v770, %v776
    %v779 = vmax.f32 %v778, 0.0
    %v780 = vpack.c.bf16 %v779, %v779
    %v781 = vld [vmem:[%s5] sm:$0xf]
    %v782 = vld [vmem:[%s5 + $0x4] sm:$0xf]
    %v783 = vld [vmem:[%s5 + $0x8] sm:$0xf]
    %v784 = vld [vmem:[%s5 + $0xc] sm:$0xf]
    %v785 = vpack.c.bf16 %v246, %v246
    %v787 = vshrl.u32 %v785, 16
    %v789 = vshll.u32 %v785, 16
    %v791 = vrot.slane %v789, 1
    %v792 = vor.u32 %v787, %v791
    %v794 = vsel %vm283, %v792, 0
    %796 = vmatprep.subr.bf16.mxu0 0
    %797 = vmatpush1.bf16.msra.mxu0 %v281
    %798 = vmatprep.subr.bf16.mxu0 0
    %799 = vmatpush1.bf16.msra.mxu0 0
    %800 = vmatprep.subr.bf16.mxu0 0
    %801 = vmatpush1.bf16.msra.mxu0 0
    %802 = vmatprep.subr.bf16.mxu0 0
    %803 = vmatpush1.bf16.msra.mxu0 0
    %804 = vmatprep.subr.bf16.mxu0 0
    %805 = vmatpush1.bf16.msra.mxu0 0
    %806 = vmatprep.subr.bf16.mxu0 0
    %807 = vmatpush1.bf16.msra.mxu0 0
    %808 = vmatprep.subr.bf16.mxu0 0
    %809 = vmatpush1.bf16.msra.mxu0 0
    %810 = vmatprep.subr.bf16.mxu0 0
    %811 = vmatpush1.bf16.msra.mxu0 0
    %812 = vmatprep.subr.bf16.mxu0 0
    %813 = vmatpush1.bf16.msra.mxu0 0
    %814 = vmatprep.subr.bf16.mxu0 0
    %815 = vmatpush1.bf16.msra.mxu0 0
    %816 = vmatprep.subr.bf16.mxu0 0
    %817 = vmatpush1.bf16.msra.mxu0 0
    %818 = vmatprep.subr.bf16.mxu0 0
    %819 = vmatpush1.bf16.msra.mxu0 0
    %820 = vmatprep.subr.bf16.mxu0 0
    %821 = vmatpush1.bf16.msra.mxu0 0
    %822 = vmatprep.subr.bf16.mxu0 0
    %823 = vmatpush1.bf16.msra.mxu0 0
    %824 = vmatprep.subr.bf16.mxu0 0
    %825 = vmatpush1.bf16.msra.mxu0 0
    %826 = vmatprep.subr.bf16.mxu0 0
    %827 = vmatpush1.bf16.msra.mxu0 0
    %828 = vmatprep.mubr.bf16.mxu0 0
    %829 = vmatmul.mubr.bf16.gmra.mrb[0].mxu0 %v794
    %v830 = vpop.f32.mrb[0].mxu0
    %v831 = vadd.f32 0.0, %v830
    %v832 = vpop.f32.mrb[0].mxu0
    %v833 = vpop.f32.mrb[0].mxu0
    %v834 = vpop.f32.mrb[0].mxu0
    %835 = vdwg.mxu0
    %836 = vmatprep.subr.bf16.mxu0 0
    %837 = vmatpush1.bf16.msra.mxu0 %v331
    %838 = vmatprep.subr.bf16.mxu0 0
    %839 = vmatpush1.bf16.msra.mxu0 0
    %840 = vmatprep.subr.bf16.mxu0 0
    %841 = vmatpush1.bf16.msra.mxu0 0
    %842 = vmatprep.subr.bf16.mxu0 0
    %843 = vmatpush1.bf16.msra.mxu0 0
    %844 = vmatprep.subr.bf16.mxu0 0
    %845 = vmatpush1.bf16.msra.mxu0 0
    %846 = vmatprep.subr.bf16.mxu0 0
    %847 = vmatpush1.bf16.msra.mxu0 0
    %848 = vmatprep.subr.bf16.mxu0 0
    %849 = vmatpush1.bf16.msra.mxu0 0
    %850 = vmatprep.subr.bf16.mxu0 0
    %851 = vmatpush1.bf16.msra.mxu0 0
    %852 = vmatprep.subr.bf16.mxu0 0
    %853 = vmatpush1.bf16.msra.mxu0 0
    %854 = vmatprep.subr.bf16.mxu0 0
    %855 = vmatpush1.bf16.msra.mxu0 0
    %856 = vmatprep.subr.bf16.mxu0 0
    %857 = vmatpush1.bf16.msra.mxu0 0
    %858 = vmatprep.subr.bf16.mxu0 0
    %859 = vmatpush1.bf16.msra.mxu0 0
    %860 = vmatprep.subr.bf16.mxu0 0
    %861 = vmatpush1.bf16.msra.mxu0 0
    %862 = vmatprep.subr.bf16.mxu0 0
    %863 = vmatpush1.bf16.msra.mxu0 0
    %864 = vmatprep.subr.bf16.mxu0 0
    %865 = vmatpush1.bf16.msra.mxu0 0
    %866 = vmatprep.subr.bf16.mxu0 0
    %867 = vmatpush1.bf16.msra.mxu0 0
    %868 = vmatprep.mubr.bf16.mxu0 0
    %869 = vmatmul.mubr.bf16.gmra.mrb[0].mxu0 %v387
    %v870 = vpop.f32.mrb[0].mxu0
    %v871 = vadd.f32 %v831, %v870
    %v872 = vpop.f32.mrb[0].mxu0
    %v873 = vpop.f32.mrb[0].mxu0
    %v874 = vpop.f32.mrb[0].mxu0
    %875 = vdwg.mxu0
    %v877 = vrot.slane %v785, 2
    %v879 = vsel %vm283, %v877, 0
    %881 = vmatprep.subr.bf16.mxu0 0
    %882 = vmatpush1.bf16.msra.mxu0 %v384
    %883 = vmatprep.subr.bf16.mxu0 0
    %884 = vmatpush1.bf16.msra.mxu0 0
    %885 = vmatprep.subr.bf16.mxu0 0
    %886 = vmatpush1.bf16.msra.mxu0 0
    %887 = vmatprep.subr.bf16.mxu0 0
    %888 = vmatpush1.bf16.msra.mxu0 0
    %889 = vmatprep.subr.bf16.mxu0 0
    %890 = vmatpush1.bf16.msra.mxu0 0
    %891 = vmatprep.subr.bf16.mxu0 0
    %892 = vmatpush1.bf16.msra.mxu0 0
    %893 = vmatprep.subr.bf16.mxu0 0
    %894 = vmatpush1.bf16.msra.mxu0 0
    %895 = vmatprep.subr.bf16.mxu0 0
    %896 = vmatpush1.bf16.msra.mxu0 0
    %897 = vmatprep.subr.bf16.mxu0 0
    %898 = vmatpush1.bf16.msra.mxu0 0
    %899 = vmatprep.subr.bf16.mxu0 0
    %900 = vmatpush1.bf16.msra.mxu0 0
    %901 = vmatprep.subr.bf16.mxu0 0
    %902 = vmatpush1.bf16.msra.mxu0 0
    %903 = vmatprep.subr.bf16.mxu0 0
    %904 = vmatpush1.bf16.msra.mxu0 0
    %905 = vmatprep.subr.bf16.mxu0 0
    %906 = vmatpush1.bf16.msra.mxu0 0
    %907 = vmatprep.subr.bf16.mxu0 0
    %908 = vmatpush1.bf16.msra.mxu0 0
    %909 = vmatprep.subr.bf16.mxu0 0
    %910 = vmatpush1.bf16.msra.mxu0 0
    %911 = vmatprep.subr.bf16.mxu0 0
    %912 = vmatpush1.bf16.msra.mxu0 0
    %913 = vmatprep.mubr.bf16.mxu0 0
    %914 = vmatmul.mubr.bf16.gmra.mrb[0].mxu0 %v879
    %v915 = vpop.f32.mrb[0].mxu0
    %v916 = vadd.f32 0.0, %v915
    %v917 = vpop.f32.mrb[0].mxu0
    %v918 = vpop.f32.mrb[0].mxu0
    %v919 = vpop.f32.mrb[0].mxu0
    %920 = vdwg.mxu0
    %v921 = vadd.f32 %v871, %v916
    %922 = vmatprep.subr.bf16.mxu0 0
    %923 = vmatpush1.bf16.msra.mxu0 %v445
    %924 = vmatprep.subr.bf16.mxu0 0
    %925 = vmatpush1.bf16.msra.mxu0 0
    %926 = vmatprep.subr.bf16.mxu0 0
    %927 = vmatpush1.bf16.msra.mxu0 0
    %928 = vmatprep.subr.bf16.mxu0 0
    %929 = vmatpush1.bf16.msra.mxu0 0
    %930 = vmatprep.subr.bf16.mxu0 0
    %931 = vmatpush1.bf16.msra.mxu0 0
    %932 = vmatprep.subr.bf16.mxu0 0
    %933 = vmatpush1.bf16.msra.mxu0 0
    %934 = vmatprep.subr.bf16.mxu0 0
    %935 = vmatpush1.bf16.msra.mxu0 0
    %936 = vmatprep.subr.bf16.mxu0 0
    %937 = vmatpush1.bf16.msra.mxu0 0
    %938 = vmatprep.subr.bf16.mxu0 0
    %939 = vmatpush1.bf16.msra.mxu0 0
    %940 = vmatprep.subr.bf16.mxu0 0
    %941 = vmatpush1.bf16.msra.mxu0 0
    %942 = vmatprep.subr.bf16.mxu0 0
    %943 = vmatpush1.bf16.msra.mxu0 0
    %944 = vmatprep.subr.bf16.mxu0 0
    %945 = vmatpush1.bf16.msra.mxu0 0
    %946 = vmatprep.subr.bf16.mxu0 0
    %947 = vmatpush1.bf16.msra.mxu0 0
    %948 = vmatprep.subr.bf16.mxu0 0
    %949 = vmatpush1.bf16.msra.mxu0 0
    %950 = vmatprep.subr.bf16.mxu0 0
    %951 = vmatpush1.bf16.msra.mxu0 0
    %952 = vmatprep.subr.bf16.mxu0 0
    %953 = vmatpush1.bf16.msra.mxu0 0
    %954 = vmatprep.mubr.bf16.mxu0 0
    %955 = vmatmul.mubr.bf16.gmra.mrb[0].mxu0 %v560
    %v956 = vpop.f32.mrb[0].mxu0
    %v957 = vadd.f32 0.0, %v956
    %v958 = vpop.f32.mrb[0].mxu0
    %v959 = vpop.f32.mrb[0].mxu0
    %v960 = vpop.f32.mrb[0].mxu0
    %961 = vdwg.mxu0
    %v962 = vadd.f32 %v921, %v957
    %v963 = vpack.c.bf16 %v249, %v248
    %v965 = vrot.slane %v963, 3
    %v967 = vsel %vm283, %v965, 0
    %969 = vmatprep.subr.bf16.mxu0 0
    %970 = vmatpush1.bf16.msra.mxu0 %v498
    %971 = vmatprep.subr.bf16.mxu0 0
    %972 = vmatpush1.bf16.msra.mxu0 0
    %973 = vmatprep.subr.bf16.mxu0 0
    %974 = vmatpush1.bf16.msra.mxu0 0
    %975 = vmatprep.subr.bf16.mxu0 0
    %976 = vmatpush1.bf16.msra.mxu0 0
    %977 = vmatprep.subr.bf16.mxu0 0
    %978 = vmatpush1.bf16.msra.mxu0 0
    %979 = vmatprep.subr.bf16.mxu0 0
    %980 = vmatpush1.bf16.msra.mxu0 0
    %981 = vmatprep.subr.bf16.mxu0 0
    %982 = vmatpush1.bf16.msra.mxu0 0
    %983 = vmatprep.subr.bf16.mxu0 0
    %984 = vmatpush1.bf16.msra.mxu0 0
    %985 = vmatprep.subr.bf16.mxu0 0
    %986 = vmatpush1.bf16.msra.mxu0 0
    %987 = vmatprep.subr.bf16.mxu0 0
    %988 = vmatpush1.bf16.msra.mxu0 0
    %989 = vmatprep.subr.bf16.mxu0 0
    %990 = vmatpush1.bf16.msra.mxu0 0
    %991 = vmatprep.subr.bf16.mxu0 0
    %992 = vmatpush1.bf16.msra.mxu0 0
    %993 = vmatprep.subr.bf16.mxu0 0
    %994 = vmatpush1.bf16.msra.mxu0 0
    %995 = vmatprep.subr.bf16.mxu0 0
    %996 = vmatpush1.bf16.msra.mxu0 0
    %997 = vmatprep.subr.bf16.mxu0 0
    %998 = vmatpush1.bf16.msra.mxu0 0
    %999 = vmatprep.subr.bf16.mxu0 0
    %1000 = vmatpush1.bf16.msra.mxu0 0
    %1001 = vmatprep.mubr.bf16.mxu0 0
    %1002 = vmatmul.mubr.bf16.gmra.mrb[0].mxu0 %v967
    %v1003 = vpop.f32.mrb[0].mxu0
    %v1004 = vadd.f32 0.0, %v1003
    %v1005 = vpop.f32.mrb[0].mxu0
    %v1006 = vpop.f32.mrb[0].mxu0
    %v1007 = vpop.f32.mrb[0].mxu0
    %1008 = vdwg.mxu0
    %v1009 = vadd.f32 %v962, %v1004
    %v1010 = vpack.c.bf16 %v249, %v249
    %v1012 = vshrl.u32 %v1010, 16
    %v1014 = vshll.u32 %v1010, 16
    %v1016 = vrot.slane %v1014, 1
    %v1017 = vor.u32 %v1012, %v1016
    %v1019 = vsel %vm283, %v1017, 0
    %1021 = vmatprep.subr.bf16.mxu0 0
    %1022 = vmatpush1.bf16.msra.mxu0 %v557
    %1023 = vmatprep.subr.bf16.mxu0 0
    %1024 = vmatpush1.bf16.msra.mxu0 0
    %1025 = vmatprep.subr.bf16.mxu0 0
    %1026 = vmatpush1.bf16.msra.mxu0 0
    %1027 = vmatprep.subr.bf16.mxu0 0
    %1028 = vmatpush1.bf16.msra.mxu0 0
    %1029 = vmatprep.subr.bf16.mxu0 0
    %1030 = vmatpush1.bf16.msra.mxu0 0
    %1031 = vmatprep.subr.bf16.mxu0 0
    %1032 = vmatpush1.bf16.msra.mxu0 0
    %1033 = vmatprep.subr.bf16.mxu0 0
    %1034 = vmatpush1.bf16.msra.mxu0 0
    %1035 = vmatprep.subr.bf16.mxu0 0
    %1036 = vmatpush1.bf16.msra.mxu0 0
    %1037 = vmatprep.subr.bf16.mxu0 0
    %1038 = vmatpush1.bf16.msra.mxu0 0
    %1039 = vmatprep.subr.bf16.mxu0 0
    %1040 = vmatpush1.bf16.msra.mxu0 0
    %1041 = vmatprep.subr.bf16.mxu0 0
    %1042 = vmatpush1.bf16.msra.mxu0 0
    %1043 = vmatprep.subr.bf16.mxu0 0
    %1044 = vmatpush1.bf16.msra.mxu0 0
    %1045 = vmatprep.subr.bf16.mxu0 0
    %1046 = vmatpush1.bf16.msra.mxu0 0
    %1047 = vmatprep.subr.bf16.mxu0 0
    %1048 = vmatpush1.bf16.msra.mxu0 0
    %1049 = vmatprep.subr.bf16.mxu0 0
    %1050 = vmatpush1.bf16.msra.mxu0 0
    %1051 = vmatprep.subr.bf16.mxu0 0
    %1052 = vmatpush1.bf16.msra.mxu0 0
    %1053 = vmatprep.mubr.bf16.mxu0 0
    %1054 = vmatmul.mubr.bf16.gmra.mrb[0].mxu0 %v1019
    %v1055 = vpop.f32.mrb[0].mxu0
    %v1056 = vadd.f32 0.0, %v1055
    %v1057 = vpop.f32.mrb[0].mxu0
    %v1058 = vpop.f32.mrb[0].mxu0
    %v1059 = vpop.f32.mrb[0].mxu0
    %1060 = vdwg.mxu0
    %v1061 = vadd.f32 %v1009, %v1056
    %1062 = vmatprep.subr.bf16.mxu0 0
    %1063 = vmatpush1.bf16.msra.mxu0 %v612
    %1064 = vmatprep.subr.bf16.mxu0 0
    %1065 = vmatpush1.bf16.msra.mxu0 0
    %1066 = vmatprep.subr.bf16.mxu0 0
    %1067 = vmatpush1.bf16.msra.mxu0 0
    %1068 = vmatprep.subr.bf16.mxu0 0
    %1069 = vmatpush1.bf16.msra.mxu0 0
    %1070 = vmatprep.subr.bf16.mxu0 0
    %1071 = vmatpush1.bf16.msra.mxu0 0
    %1072 = vmatprep.subr.bf16.mxu0 0
    %1073 = vmatpush1.bf16.msra.mxu0 0
    %1074 = vmatprep.subr.bf16.mxu0 0
    %1075 = vmatpush1.bf16.msra.mxu0 0
    %1076 = vmatprep.subr.bf16.mxu0 0
    %1077 = vmatpush1.bf16.msra.mxu0 0
    %1078 = vmatprep.subr.bf16.mxu0 0
    %1079 = vmatpush1.bf16.msra.mxu0 0
    %1080 = vmatprep.subr.bf16.mxu0 0
    %1081 = vmatpush1.bf16.msra.mxu0 0
    %1082 = vmatprep.subr.bf16.mxu0 0
    %1083 = vmatpush1.bf16.msra.mxu0 0
    %1084 = vmatprep.subr.bf16.mxu0 0
    %1085 = vmatpush1.bf16.msra.mxu0 0
    %1086 = vmatprep.subr.bf16.mxu0 0
    %1087 = vmatpush1.bf16.msra.mxu0 0
    %1088 = vmatprep.subr.bf16.mxu0 0
    %1089 = vmatpush1.bf16.msra.mxu0 0
    %1090 = vmatprep.subr.bf16.mxu0 0
    %1091 = vmatpush1.bf16.msra.mxu0 0
    %1092 = vmatprep.subr.bf16.mxu0 0
    %1093 = vmatpush1.bf16.msra.mxu0 0
    %1094 = vmatprep.mubr.bf16.mxu0 0
    %1095 = vmatmul.mubr.bf16.gmra.mrb[0].mxu0 %v728
    %v1096 = vpop.f32.mrb[0].mxu0
    %v1097 = vadd.f32 0.0, %v1096
    %v1098 = vpop.f32.mrb[0].mxu0
    %v1099 = vpop.f32.mrb[0].mxu0
    %v1100 = vpop.f32.mrb[0].mxu0
    %1101 = vdwg.mxu0
    %v1102 = vadd.f32 %v1061, %v1097
    %v1103 = vshrl.u32 %v718, 16
    %v1105 = vrot.slane %v1103, 1
    %v1106 = vshll.u32 %v718, 16
    %v1108 = vrot.slane %v1106, 2
    %v1109 = vor.u32 %v1105, %v1108
    %v1111 = vsel %vm283, %v1109, 0
    %1113 = vmatprep.subr.bf16.mxu0 0
    %1114 = vmatpush1.bf16.msra.mxu0 %v672
    %1115 = vmatprep.subr.bf16.mxu0 0
    %1116 = vmatpush1.bf16.msra.mxu0 0
    %1117 = vmatprep.subr.bf16.mxu0 0
    %1118 = vmatpush1.bf16.msra.mxu0 0
    %1119 = vmatprep.subr.bf16.mxu0 0
    %1120 = vmatpush1.bf16.msra.mxu0 0
    %1121 = vmatprep.subr.bf16.mxu0 0
    %1122 = vmatpush1.bf16.msra.mxu0 0
    %1123 = vmatprep.subr.bf16.mxu0 0
    %1124 = vmatpush1.bf16.msra.mxu0 0
    %1125 = vmatprep.subr.bf16.mxu0 0
    %1126 = vmatpush1.bf16.msra.mxu0 0
    %1127 = vmatprep.subr.bf16.mxu0 0
    %1128 = vmatpush1.bf16.msra.mxu0 0
    %1129 = vmatprep.subr.bf16.mxu0 0
    %1130 = vmatpush1.bf16.msra.mxu0 0
    %1131 = vmatprep.subr.bf16.mxu0 0
    %1132 = vmatpush1.bf16.msra.mxu0 0
    %1133 = vmatprep.subr.bf16.mxu0 0
    %1134 = vmatpush1.bf16.msra.mxu0 0
    %1135 = vmatprep.subr.bf16.mxu0 0
    %1136 = vmatpush1.bf16.msra.mxu0 0
    %1137 = vmatprep.subr.bf16.mxu0 0
    %1138 = vmatpush1.bf16.msra.mxu0 0
    %1139 = vmatprep.subr.bf16.mxu0 0
    %1140 = vmatpush1.bf16.msra.mxu0 0
    %1141 = vmatprep.subr.bf16.mxu0 0
    %1142 = vmatpush1.bf16.msra.mxu0 0
    %1143 = vmatprep.subr.bf16.mxu0 0
    %1144 = vmatpush1.bf16.msra.mxu0 0
    %1145 = vmatprep.mubr.bf16.mxu0 0
    %1146 = vmatmul.mubr.bf16.gmra.mrb[0].mxu0 %v1111
    %v1147 = vpop.f32.mrb[0].mxu0
    %v1148 = vadd.f32 0.0, %v1147
    %v1149 = vpop.f32.mrb[0].mxu0
    %v1150 = vpop.f32.mrb[0].mxu0
    %v1151 = vpop.f32.mrb[0].mxu0
    %1152 = vdwg.mxu0
    %v1153 = vadd.f32 %v1102, %v1148
    %v1154 = vpack.c.bf16 %v252, %v251
    %v1156 = vrot.slane %v1154, 3
    %v1158 = vsel %vm283, %v1156, 0
    %1160 = vmatprep.subr.bf16.mxu0 0
    %1161 = vmatpush1.bf16.msra.mxu0 %v725
    %1162 = vmatprep.subr.bf16.mxu0 0
    %1163 = vmatpush1.bf16.msra.mxu0 0
    %1164 = vmatprep.subr.bf16.mxu0 0
    %1165 = vmatpush1.bf16.msra.mxu0 0
    %1166 = vmatprep.subr.bf16.mxu0 0
    %1167 = vmatpush1.bf16.msra.mxu0 0
    %1168 = vmatprep.subr.bf16.mxu0 0
    %1169 = vmatpush1.bf16.msra.mxu0 0
    %1170 = vmatprep.subr.bf16.mxu0 0
    %1171 = vmatpush1.bf16.msra.mxu0 0
    %1172 = vmatprep.subr.bf16.mxu0 0
    %1173 = vmatpush1.bf16.msra.mxu0 0
    %1174 = vmatprep.subr.bf16.mxu0 0
    %1175 = vmatpush1.bf16.msra.mxu0 0
    %1176 = vmatprep.subr.bf16.mxu0 0
    %1177 = vmatpush1.bf16.msra.mxu0 0
    %1178 = vmatprep.subr.bf16.mxu0 0
    %1179 = vmatpush1.bf16.msra.mxu0 0
    %1180 = vmatprep.subr.bf16.mxu0 0
    %1181 = vmatpush1.bf16.msra.mxu0 0
    %1182 = vmatprep.subr.bf16.mxu0 0
    %1183 = vmatpush1.bf16.msra.mxu0 0
    %1184 = vmatprep.subr.bf16.mxu0 0
    %1185 = vmatpush1.bf16.msra.mxu0 0
    %1186 = vmatprep.subr.bf16.mxu0 0
    %1187 = vmatpush1.bf16.msra.mxu0 0
    %1188 = vmatprep.subr.bf16.mxu0 0
    %1189 = vmatpush1.bf16.msra.mxu0 0
    %1190 = vmatprep.subr.bf16.mxu0 0
    %1191 = vmatpush1.bf16.msra.mxu0 0
    %1192 = vmatprep.mubr.bf16.mxu0 0
    %1193 = vmatmul.mubr.bf16.gmra.mrb[0].mxu0 %v1158
    %v1194 = vpop.f32.mrb[0].mxu0
    %v1195 = vadd.f32 0.0, %v1194
    %v1196 = vpop.f32.mrb[0].mxu0
    %v1197 = vpop.f32.mrb[0].mxu0
    %v1198 = vpop.f32.mrb[0].mxu0
    %1199 = vdwg.mxu0
    %v1200 = vadd.f32 %v1153, %v1195
    %v1201 = vadd.f32 %v1200, %v776
    %v1202 = vmax.f32 %v1201, 0.0
    %v1203 = vpack.c.bf16 %v1202, %v1202
    %v1204 = vld [vmem:[%s5 + $0x10] sm:$0xf]
    %v1205 = vld [vmem:[%s5 + $0x14] sm:$0xf]
    %v1206 = vld [vmem:[%s5 + $0x18] sm:$0xf]
    %v1207 = vld [vmem:[%s5 + $0x1c] sm:$0xf]
    %v1212 = vunpack.c.l.b16 %v1204
    %v1213 = vunpack.c.l.b16 %v1205
    %v1214 = vunpack.c.l.b16 %v1206
    %v1215 = vunpack.c.l.b16 %v1207
    %v1216 = vpack.c.b16 %v1213, %v1212
    %v1217 = vpack.c.b16 %v1215, %v1214
    %vm1220 = vcmask 261120
    %v1222 = vsel %vm1220, %v1203, 0
    %1224 = vmatprep.subr.bf16.mxu0 0
    %1225 = vmatpush1.bf16.msra.mxu0 %v1216
    %1226 = vmatprep.subr.bf16.mxu0 0
    %1227 = vmatpush1.bf16.msra.mxu0 %v1217
    %1228 = vmatprep.subr.bf16.mxu0 0
    %1229 = vmatpush1.bf16.msra.mxu0 0
    %1230 = vmatprep.subr.bf16.mxu0 0
    %1231 = vmatpush1.bf16.msra.mxu0 0
    %1232 = vmatprep.subr.bf16.mxu0 0
    %1233 = vmatpush1.bf16.msra.mxu0 0
    %1234 = vmatprep.subr.bf16.mxu0 0
    %1235 = vmatpush1.bf16.msra.mxu0 0
    %1236 = vmatprep.subr.bf16.mxu0 0
    %1237 = vmatpush1.bf16.msra.mxu0 0
    %1238 = vmatprep.subr.bf16.mxu0 0
    %1239 = vmatpush1.bf16.msra.mxu0 0
    %1240 = vmatprep.subr.bf16.mxu0 0
    %1241 = vmatpush1.bf16.msra.mxu0 0
    %1242 = vmatprep.subr.bf16.mxu0 0
    %1243 = vmatpush1.bf16.msra.mxu0 0
    %1244 = vmatprep.subr.bf16.mxu0 0
    %1245 = vmatpush1.bf16.msra.mxu0 0
    %1246 = vmatprep.subr.bf16.mxu0 0
    %1247 = vmatpush1.bf16.msra.mxu0 0
    %1248 = vmatprep.subr.bf16.mxu0 0
    %1249 = vmatpush1.bf16.msra.mxu0 0
    %1250 = vmatprep.subr.bf16.mxu0 0
    %1251 = vmatpush1.bf16.msra.mxu0 0
    %1252 = vmatprep.subr.bf16.mxu0 0
    %1253 = vmatpush1.bf16.msra.mxu0 0
    %1254 = vmatprep.subr.bf16.mxu0 0
    %1255 = vmatpush1.bf16.msra.mxu0 0
    %1256 = vmatprep.mubr.bf16.mxu0 0
    %1257 = vmatmul.mubr.bf16.gmra.mrb[0].mxu0 %v1222
    %v1258 = vpop.f32.mrb[0].mxu0
    %v1259 = vadd.f32 0.0, %v1258
    %v1260 = vpop.f32.mrb[0].mxu0
    %v1261 = vpop.f32.mrb[0].mxu0
    %v1262 = vpop.f32.mrb[0].mxu0
    %1263 = vdwg.mxu0
    %v1268 = vunpack.c.l.b16 %v781
    %v1269 = vunpack.c.l.b16 %v782
    %v1270 = vunpack.c.l.b16 %v783
    %v1271 = vunpack.c.l.b16 %v784
    %v1272 = vpack.c.b16 %v1269, %v1268
    %v1273 = vpack.c.b16 %v1271, %v1270
    %v1277 = vsel %vm1220, %v780, 0
    %1279 = vmatprep.subr.bf16.mxu0 0
    %1280 = vmatpush1.bf16.msra.mxu0 %v1272
    %1281 = vmatprep.subr.bf16.mxu0 0
    %1282 = vmatpush1.bf16.msra.mxu0 %v1273
    %1283 = vmatprep.subr.bf16.mxu0 0
    %1284 = vmatpush1.bf16.msra.mxu0 0
    %1285 = vmatprep.subr.bf16.mxu0 0
    %1286 = vmatpush1.bf16.msra.mxu0 0
    %1287 = vmatprep.subr.bf16.mxu0 0
    %1288 = vmatpush1.bf16.msra.mxu0 0
    %1289 = vmatprep.subr.bf16.mxu0 0
    %1290 = vmatpush1.bf16.msra.mxu0 0
    %1291 = vmatprep.subr.bf16.mxu0 0
    %1292 = vmatpush1.bf16.msra.mxu0 0
    %1293 = vmatprep.subr.bf16.mxu0 0
    %1294 = vmatpush1.bf16.msra.mxu0 0
    %1295 = vmatprep.subr.bf16.mxu0 0
    %1296 = vmatpush1.bf16.msra.mxu0 0
    %1297 = vmatprep.subr.bf16.mxu0 0
    %1298 = vmatpush1.bf16.msra.mxu0 0
    %1299 = vmatprep.subr.bf16.mxu0 0
    %1300 = vmatpush1.bf16.msra.mxu0 0
    %1301 = vmatprep.subr.bf16.mxu0 0
    %1302 = vmatpush1.bf16.msra.mxu0 0
    %1303 = vmatprep.subr.bf16.mxu0 0
    %1304 = vmatpush1.bf16.msra.mxu0 0
    %1305 = vmatprep.subr.bf16.mxu0 0
    %1306 = vmatpush1.bf16.msra.mxu0 0
    %1307 = vmatprep.subr.bf16.mxu0 0
    %1308 = vmatpush1.bf16.msra.mxu0 0
    %1309 = vmatprep.subr.bf16.mxu0 0
    %1310 = vmatpush1.bf16.msra.mxu0 0
    %1311 = vmatprep.mubr.bf16.mxu0 0
    %1312 = vmatmul.mubr.bf16.gmra.mrb[0].mxu0 %v1277
    %v1313 = vpop.f32.mrb[0].mxu0
    %v1314 = vadd.f32 %v1259, %v1313
    %v1315 = vpop.f32.mrb[0].mxu0
    %v1316 = vpop.f32.mrb[0].mxu0
    %v1317 = vpop.f32.mrb[0].mxu0
    %1318 = vdwg.mxu0
    %v1319 = vpack.c.bf16 %v247, %v246
    %v1321 = vshrl.u32 %v1319, 16
    %v1323 = vrot.slane %v1321, 3
    %v1324 = vshll.u32 %v1319, 16
    %v1326 = vrot.slane %v1324, 4
    %v1327 = vor.u32 %v1323, %v1326
    %v1329 = vsel %vm283, %v1327, 0
    %1331 = vmatprep.subr.bf16.mxu0 0
    %1332 = vmatpush1.bf16.msra.mxu0 %v281
    %1333 = vmatprep.subr.bf16.mxu0 0
    %1334 = vmatpush1.bf16.msra.mxu0 0
    %1335 = vmatprep.subr.bf16.mxu0 0
    %1336 = vmatpush1.bf16.msra.mxu0 0
    %1337 = vmatprep.subr.bf16.mxu0 0
    %1338 = vmatpush1.bf16.msra.mxu0 0
    %1339 = vmatprep.subr.bf16.mxu0 0
    %1340 = vmatpush1.bf16.msra.mxu0 0
    %1341 = vmatprep.subr.bf16.mxu0 0
    %1342 = vmatpush1.bf16.msra.mxu0 0
    %1343 = vmatprep.subr.bf16.mxu0 0
    %1344 = vmatpush1.bf16.msra.mxu0 0
    %1345 = vmatprep.subr.bf16.mxu0 0
    %1346 = vmatpush1.bf16.msra.mxu0 0
    %1347 = vmatprep.subr.bf16.mxu0 0
    %1348 = vmatpush1.bf16.msra.mxu0 0
    %1349 = vmatprep.subr.bf16.mxu0 0
    %1350 = vmatpush1.bf16.msra.mxu0 0
    %1351 = vmatprep.subr.bf16.mxu0 0
    %1352 = vmatpush1.bf16.msra.mxu0 0
    %1353 = vmatprep.subr.bf16.mxu0 0
    %1354 = vmatpush1.bf16.msra.mxu0 0
    %1355 = vmatprep.subr.bf16.mxu0 0
    %1356 = vmatpush1.bf16.msra.mxu0 0
    %1357 = vmatprep.subr.bf16.mxu0 0
    %1358 = vmatpush1.bf16.msra.mxu0 0
    %1359 = vmatprep.subr.bf16.mxu0 0
    %1360 = vmatpush1.bf16.msra.mxu0 0
    %1361 = vmatprep.subr.bf16.mxu0 0
    %1362 = vmatpush1.bf16.msra.mxu0 0
    %1363 = vmatprep.mubr.bf16.mxu0 0
    %1364 = vmatmul.mubr.bf16.gmra.mrb[0].mxu0 %v1329
    %v1365 = vpop.f32.mrb[0].mxu0
    %v1366 = vadd.f32 0.0, %v1365
    %v1367 = vpop.f32.mrb[0].mxu0
    %v1368 = vpop.f32.mrb[0].mxu0
    %v1369 = vpop.f32.mrb[0].mxu0
    %1370 = vdwg.mxu0
    %1371 = vmatprep.subr.bf16.mxu0 0
    %1372 = vmatpush1.bf16.msra.mxu0 %v331
    %1373 = vmatprep.subr.bf16.mxu0 0
    %1374 = vmatpush1.bf16.msra.mxu0 0
    %1375 = vmatprep.subr.bf16.mxu0 0
    %1376 = vmatpush1.bf16.msra.mxu0 0
    %1377 = vmatprep.subr.bf16.mxu0 0
    %1378 = vmatpush1.bf16.msra.mxu0 0
    %1379 = vmatprep.subr.bf16.mxu0 0
    %1380 = vmatpush1.bf16.msra.mxu0 0
    %1381 = vmatprep.subr.bf16.mxu0 0
    %1382 = vmatpush1.bf16.msra.mxu0 0
    %1383 = vmatprep.subr.bf16.mxu0 0
    %1384 = vmatpush1.bf16.msra.mxu0 0
    %1385 = vmatprep.subr.bf16.mxu0 0
    %1386 = vmatpush1.bf16.msra.mxu0 0
    %1387 = vmatprep.subr.bf16.mxu0 0
    %1388 = vmatpush1.bf16.msra.mxu0 0
    %1389 = vmatprep.subr.bf16.mxu0 0
    %1390 = vmatpush1.bf16.msra.mxu0 0
    %1391 = vmatprep.subr.bf16.mxu0 0
    %1392 = vmatpush1.bf16.msra.mxu0 0
    %1393 = vmatprep.subr.bf16.mxu0 0
    %1394 = vmatpush1.bf16.msra.mxu0 0
    %1395 = vmatprep.subr.bf16.mxu0 0
    %1396 = vmatpush1.bf16.msra.mxu0 0
    %1397 = vmatprep.subr.bf16.mxu0 0
    %1398 = vmatpush1.bf16.msra.mxu0 0
    %1399 = vmatprep.subr.bf16.mxu0 0
    %1400 = vmatpush1.bf16.msra.mxu0 0
    %1401 = vmatprep.subr.bf16.mxu0 0
    %1402 = vmatpush1.bf16.msra.mxu0 0
    %1403 = vmatprep.mubr.bf16.mxu0 0
    %1404 = vmatmul.mubr.bf16.gmra.mrb[0].mxu0 %v879
    %v1405 = vpop.f32.mrb[0].mxu0
    %v1406 = vadd.f32 %v1366, %v1405
    %v1407 = vpop.f32.mrb[0].mxu0
    %v1408 = vpop.f32.mrb[0].mxu0
    %v1409 = vpop.f32.mrb[0].mxu0
    %1410 = vdwg.mxu0
    %v1412 = vrot.slane %v430, 1
    %v1414 = vsel %vm283, %v1412, 0
    %1416 = vmatprep.subr.bf16.mxu0 0
    %1417 = vmatpush1.bf16.msra.mxu0 %v384
    %1418 = vmatprep.subr.bf16.mxu0 0
    %1419 = vmatpush1.bf16.msra.mxu0 0
    %1420 = vmatprep.subr.bf16.mxu0 0
    %1421 = vmatpush1.bf16.msra.mxu0 0
    %1422 = vmatprep.subr.bf16.mxu0 0
    %1423 = vmatpush1.bf16.msra.mxu0 0
    %1424 = vmatprep.subr.bf16.mxu0 0
    %1425 = vmatpush1.bf16.msra.mxu0 0
    %1426 = vmatprep.subr.bf16.mxu0 0
    %1427 = vmatpush1.bf16.msra.mxu0 0
    %1428 = vmatprep.subr.bf16.mxu0 0
    %1429 = vmatpush1.bf16.msra.mxu0 0
    %1430 = vmatprep.subr.bf16.mxu0 0
    %1431 = vmatpush1.bf16.msra.mxu0 0
    %1432 = vmatprep.subr.bf16.mxu0 0
    %1433 = vmatpush1.bf16.msra.mxu0 0
    %1434 = vmatprep.subr.bf16.mxu0 0
    %1435 = vmatpush1.bf16.msra.mxu0 0
    %1436 = vmatprep.subr.bf16.mxu0 0
    %1437 = vmatpush1.bf16.msra.mxu0 0
    %1438 = vmatprep.subr.bf16.mxu0 0
    %1439 = vmatpush1.bf16.msra.mxu0 0
    %1440 = vmatprep.subr.bf16.mxu0 0
    %1441 = vmatpush1.bf16.msra.mxu0 0
    %1442 = vmatprep.subr.bf16.mxu0 0
    %1443 = vmatpush1.bf16.msra.mxu0 0
    %1444 = vmatprep.subr.bf16.mxu0 0
    %1445 = vmatpush1.bf16.msra.mxu0 0
    %1446 = vmatprep.subr.bf16.mxu0 0
    %1447 = vmatpush1.bf16.msra.mxu0 0
    %1448 = vmatprep.mubr.bf16.mxu0 0
    %1449 = vmatmul.mubr.bf16.gmra.mrb[0].mxu0 %v1414
    %v1450 = vpop.f32.mrb[0].mxu0
    %v1451 = vadd.f32 0.0, %v1450
    %v1452 = vpop.f32.mrb[0].mxu0
    %v1453 = vpop.f32.mrb[0].mxu0
    %v1454 = vpop.f32.mrb[0].mxu0
    %1455 = vdwg.mxu0
    %v1456 = vadd.f32 %v1406, %v1451
    %1457 = vmatprep.subr.bf16.mxu0 0
    %1458 = vmatpush1.bf16.msra.mxu0 %v445
    %1459 = vmatprep.subr.bf16.mxu0 0
    %1460 = vmatpush1.bf16.msra.mxu0 0
    %1461 = vmatprep.subr.bf16.mxu0 0
    %1462 = vmatpush1.bf16.msra.mxu0 0
    %1463 = vmatprep.subr.bf16.mxu0 0
    %1464 = vmatpush1.bf16.msra.mxu0 0
    %1465 = vmatprep.subr.bf16.mxu0 0
    %1466 = vmatpush1.bf16.msra.mxu0 0
    %1467 = vmatprep.subr.bf16.mxu0 0
    %1468 = vmatpush1.bf16.msra.mxu0 0
    %1469 = vmatprep.subr.bf16.mxu0 0
    %1470 = vmatpush1.bf16.msra.mxu0 0
    %1471 = vmatprep.subr.bf16.mxu0 0
    %1472 = vmatpush1.bf16.msra.mxu0 0
    %1473 = vmatprep.subr.bf16.mxu0 0
    %1474 = vmatpush1.bf16.msra.mxu0 0
    %1475 = vmatprep.subr.bf16.mxu0 0
    %1476 = vmatpush1.bf16.msra.mxu0 0
    %1477 = vmatprep.subr.bf16.mxu0 0
    %1478 = vmatpush1.bf16.msra.mxu0 0
    %1479 = vmatprep.subr.bf16.mxu0 0
    %1480 = vmatpush1.bf16.msra.mxu0 0
    %1481 = vmatprep.subr.bf16.mxu0 0
    %1482 = vmatpush1.bf16.msra.mxu0 0
    %1483 = vmatprep.subr.bf16.mxu0 0
    %1484 = vmatpush1.bf16.msra.mxu0 0
    %1485 = vmatprep.subr.bf16.mxu0 0
    %1486 = vmatpush1.bf16.msra.mxu0 0
    %1487 = vmatprep.subr.bf16.mxu0 0
    %1488 = vmatpush1.bf16.msra.mxu0 0
    %1489 = vmatprep.mubr.bf16.mxu0 0
    %1490 = vmatmul.mubr.bf16.gmra.mrb[0].mxu0 %v1019
    %v1491 = vpop.f32.mrb[0].mxu0
    %v1492 = vadd.f32 0.0, %v1491
    %v1493 = vpop.f32.mrb[0].mxu0
    %v1494 = vpop.f32.mrb[0].mxu0
    %v1495 = vpop.f32.mrb[0].mxu0
    %1496 = vdwg.mxu0
    %v1497 = vadd.f32 %v1456, %v1492
    %v1499 = vrot.slane %v1010, 2
    %v1501 = vsel %vm283, %v1499, 0
    %1503 = vmatprep.subr.bf16.mxu0 0
    %1504 = vmatpush1.bf16.msra.mxu0 %v498
    %1505 = vmatprep.subr.bf16.mxu0 0
    %1506 = vmatpush1.bf16.msra.mxu0 0
    %1507 = vmatprep.subr.bf16.mxu0 0
    %1508 = vmatpush1.bf16.msra.mxu0 0
    %1509 = vmatprep.subr.bf16.mxu0 0
    %1510 = vmatpush1.bf16.msra.mxu0 0
    %1511 = vmatprep.subr.bf16.mxu0 0
    %1512 = vmatpush1.bf16.msra.mxu0 0
    %1513 = vmatprep.subr.bf16.mxu0 0
    %1514 = vmatpush1.bf16.msra.mxu0 0
    %1515 = vmatprep.subr.bf16.mxu0 0
    %1516 = vmatpush1.bf16.msra.mxu0 0
    %1517 = vmatprep.subr.bf16.mxu0 0
    %1518 = vmatpush1.bf16.msra.mxu0 0
    %1519 = vmatprep.subr.bf16.mxu0 0
    %1520 = vmatpush1.bf16.msra.mxu0 0
    %1521 = vmatprep.subr.bf16.mxu0 0
    %1522 = vmatpush1.bf16.msra.mxu0 0
    %1523 = vmatprep.subr.bf16.mxu0 0
    %1524 = vmatpush1.bf16.msra.mxu0 0
    %1525 = vmatprep.subr.bf16.mxu0 0
    %1526 = vmatpush1.bf16.msra.mxu0 0
    %1527 = vmatprep.subr.bf16.mxu0 0
    %1528 = vmatpush1.bf16.msra.mxu0 0
    %1529 = vmatprep.subr.bf16.mxu0 0
    %1530 = vmatpush1.bf16.msra.mxu0 0
    %1531 = vmatprep.subr.bf16.mxu0 0
    %1532 = vmatpush1.bf16.msra.mxu0 0
    %1533 = vmatprep.subr.bf16.mxu0 0
    %1534 = vmatpush1.bf16.msra.mxu0 0
    %1535 = vmatprep.mubr.bf16.mxu0 0
    %1536 = vmatmul.mubr.bf16.gmra.mrb[0].mxu0 %v1501
    %v1537 = vpop.f32.mrb[0].mxu0
    %v1538 = vadd.f32 0.0, %v1537
    %v1539 = vpop.f32.mrb[0].mxu0
    %v1540 = vpop.f32.mrb[0].mxu0
    %v1541 = vpop.f32.mrb[0].mxu0
    %1542 = vdwg.mxu0
    %v1543 = vadd.f32 %v1497, %v1538
    %v1544 = vpack.c.bf16 %v250, %v249
    %v1546 = vshrl.u32 %v1544, 16
    %v1548 = vrot.slane %v1546, 3
    %v1549 = vshll.u32 %v1544, 16
    %v1551 = vrot.slane %v1549, 4
    %v1552 = vor.u32 %v1548, %v1551
    %v1554 = vsel %vm283, %v1552, 0
    %1556 = vmatprep.subr.bf16.mxu0 0
    %1557 = vmatpush1.bf16.msra.mxu0 %v557
    %1558 = vmatprep.subr.bf16.mxu0 0
    %1559 = vmatpush1.bf16.msra.mxu0 0
    %1560 = vmatprep.subr.bf16.mxu0 0
    %1561 = vmatpush1.bf16.msra.mxu0 0
    %1562 = vmatprep.subr.bf16.mxu0 0
    %1563 = vmatpush1.bf16.msra.mxu0 0
    %1564 = vmatprep.subr.bf16.mxu0 0
    %1565 = vmatpush1.bf16.msra.mxu0 0
    %1566 = vmatprep.subr.bf16.mxu0 0
    %1567 = vmatpush1.bf16.msra.mxu0 0
    %1568 = vmatprep.subr.bf16.mxu0 0
    %1569 = vmatpush1.bf16.msra.mxu0 0
    %1570 = vmatprep.subr.bf16.mxu0 0
    %1571 = vmatpush1.bf16.msra.mxu0 0
    %1572 = vmatprep.subr.bf16.mxu0 0
    %1573 = vmatpush1.bf16.msra.mxu0 0
    %1574 = vmatprep.subr.bf16.mxu0 0
    %1575 = vmatpush1.bf16.msra.mxu0 0
    %1576 = vmatprep.subr.bf16.mxu0 0
    %1577 = vmatpush1.bf16.msra.mxu0 0
    %1578 = vmatprep.subr.bf16.mxu0 0
    %1579 = vmatpush1.bf16.msra.mxu0 0
    %1580 = vmatprep.subr.bf16.mxu0 0
    %1581 = vmatpush1.bf16.msra.mxu0 0
    %1582 = vmatprep.subr.bf16.mxu0 0
    %1583 = vmatpush1.bf16.msra.mxu0 0
    %1584 = vmatprep.subr.bf16.mxu0 0
    %1585 = vmatpush1.bf16.msra.mxu0 0
    %1586 = vmatprep.subr.bf16.mxu0 0
    %1587 = vmatpush1.bf16.msra.mxu0 0
    %1588 = vmatprep.mubr.bf16.mxu0 0
    %1589 = vmatmul.mubr.bf16.gmra.mrb[0].mxu0 %v1554
    %v1590 = vpop.f32.mrb[0].mxu0
    %v1591 = vadd.f32 0.0, %v1590
    %v1592 = vpop.f32.mrb[0].mxu0
    %v1593 = vpop.f32.mrb[0].mxu0
    %v1594 = vpop.f32.mrb[0].mxu0
    %1595 = vdwg.mxu0
    %v1596 = vadd.f32 %v1543, %v1591
    %1597 = vmatprep.subr.bf16.mxu0 0
    %1598 = vmatpush1.bf16.msra.mxu0 %v612
    %1599 = vmatprep.subr.bf16.mxu0 0
    %1600 = vmatpush1.bf16.msra.mxu0 0
    %1601 = vmatprep.subr.bf16.mxu0 0
    %1602 = vmatpush1.bf16.msra.mxu0 0
    %1603 = vmatprep.subr.bf16.mxu0 0
    %1604 = vmatpush1.bf16.msra.mxu0 0
    %1605 = vmatprep.subr.bf16.mxu0 0
    %1606 = vmatpush1.bf16.msra.mxu0 0
    %1607 = vmatprep.subr.bf16.mxu0 0
    %1608 = vmatpush1.bf16.msra.mxu0 0
    %1609 = vmatprep.subr.bf16.mxu0 0
    %1610 = vmatpush1.bf16.msra.mxu0 0
    %1611 = vmatprep.subr.bf16.mxu0 0
    %1612 = vmatpush1.bf16.msra.mxu0 0
    %1613 = vmatprep.subr.bf16.mxu0 0
    %1614 = vmatpush1.bf16.msra.mxu0 0
    %1615 = vmatprep.subr.bf16.mxu0 0
    %1616 = vmatpush1.bf16.msra.mxu0 0
    %1617 = vmatprep.subr.bf16.mxu0 0
    %1618 = vmatpush1.bf16.msra.mxu0 0
    %1619 = vmatprep.subr.bf16.mxu0 0
    %1620 = vmatpush1.bf16.msra.mxu0 0
    %1621 = vmatprep.subr.bf16.mxu0 0
    %1622 = vmatpush1.bf16.msra.mxu0 0
    %1623 = vmatprep.subr.bf16.mxu0 0
    %1624 = vmatpush1.bf16.msra.mxu0 0
    %1625 = vmatprep.subr.bf16.mxu0 0
    %1626 = vmatpush1.bf16.msra.mxu0 0
    %1627 = vmatprep.subr.bf16.mxu0 0
    %1628 = vmatpush1.bf16.msra.mxu0 0
    %1629 = vmatprep.mubr.bf16.mxu0 0
    %1630 = vmatmul.mubr.bf16.gmra.mrb[0].mxu0 %v1158
    %v1631 = vpop.f32.mrb[0].mxu0
    %v1632 = vadd.f32 0.0, %v1631
    %v1633 = vpop.f32.mrb[0].mxu0
    %v1634 = vpop.f32.mrb[0].mxu0
    %v1635 = vpop.f32.mrb[0].mxu0
    %1636 = vdwg.mxu0
    %v1637 = vadd.f32 %v1596, %v1632
    %v1638 = vpack.c.bf16 %v252, %v252
    %v1640 = vshrl.u32 %v1638, 16
    %v1642 = vshll.u32 %v1638, 16
    %v1644 = vrot.slane %v1642, 1
    %v1645 = vor.u32 %v1640, %v1644
    %v1647 = vsel %vm283, %v1645, 0
    %1649 = vmatprep.subr.bf16.mxu0 0
    %1650 = vmatpush1.bf16.msra.mxu0 %v672
    %1651 = vmatprep.subr.bf16.mxu0 0
    %1652 = vmatpush1.bf16.msra.mxu0 0
    %1653 = vmatprep.subr.bf16.mxu0 0
    %1654 = vmatpush1.bf16.msra.mxu0 0
    %1655 = vmatprep.subr.bf16.mxu0 0
    %1656 = vmatpush1.bf16.msra.mxu0 0
    %1657 = vmatprep.subr.bf16.mxu0 0
    %1658 = vmatpush1.bf16.msra.mxu0 0
    %1659 = vmatprep.subr.bf16.mxu0 0
    %1660 = vmatpush1.bf16.msra.mxu0 0
    %1661 = vmatprep.subr.bf16.mxu0 0
    %1662 = vmatpush1.bf16.msra.mxu0 0
    %1663 = vmatprep.subr.bf16.mxu0 0
    %1664 = vmatpush1.bf16.msra.mxu0 0
    %1665 = vmatprep.subr.bf16.mxu0 0
    %1666 = vmatpush1.bf16.msra.mxu0 0
    %1667 = vmatprep.subr.bf16.mxu0 0
    %1668 = vmatpush1.bf16.msra.mxu0 0
    %1669 = vmatprep.subr.bf16.mxu0 0
    %1670 = vmatpush1.bf16.msra.mxu0 0
    %1671 = vmatprep.subr.bf16.mxu0 0
    %1672 = vmatpush1.bf16.msra.mxu0 0
    %1673 = vmatprep.subr.bf16.mxu0 0
    %1674 = vmatpush1.bf16.msra.mxu0 0
    %1675 = vmatprep.subr.bf16.mxu0 0
    %1676 = vmatpush1.bf16.msra.mxu0 0
    %1677 = vmatprep.subr.bf16.mxu0 0
    %1678 = vmatpush1.bf16.msra.mxu0 0
    %1679 = vmatprep.subr.bf16.mxu0 0
    %1680 = vmatpush1.bf16.msra.mxu0 0
    %1681 = vmatprep.mubr.bf16.mxu0 0
    %1682 = vmatmul.mubr.bf16.gmra.mrb[0].mxu0 %v1647
    %v1683 = vpop.f32.mrb[0].mxu0
    %v1684 = vadd.f32 0.0, %v1683
    %v1685 = vpop.f32.mrb[0].mxu0
    %v1686 = vpop.f32.mrb[0].mxu0
    %v1687 = vpop.f32.mrb[0].mxu0
    %1688 = vdwg.mxu0
    %v1689 = vadd.f32 %v1637, %v1684
    %v1691 = vrot.slane %v1638, 2
    %v1693 = vsel %vm283, %v1691, 0
    %1695 = vmatprep.subr.bf16.mxu0 0
    %1696 = vmatpush1.bf16.msra.mxu0 %v725
    %1697 = vmatprep.subr.bf16.mxu0 0
    %1698 = vmatpush1.bf16.msra.mxu0 0
    %1699 = vmatprep.subr.bf16.mxu0 0
    %1700 = vmatpush1.bf16.msra.mxu0 0
    %1701 = vmatprep.subr.bf16.mxu0 0
    %1702 = vmatpush1.bf16.msra.mxu0 0
    %1703 = vmatprep.subr.bf16.mxu0 0
    %1704 = vmatpush1.bf16.msra.mxu0 0
    %1705 = vmatprep.subr.bf16.mxu0 0
    %1706 = vmatpush1.bf16.msra.mxu0 0
    %1707 = vmatprep.subr.bf16.mxu0 0
    %1708 = vmatpush1.bf16.msra.mxu0 0
    %1709 = vmatprep.subr.bf16.mxu0 0
    %1710 = vmatpush1.bf16.msra.mxu0 0
    %1711 = vmatprep.subr.bf16.mxu0 0
    %1712 = vmatpush1.bf16.msra.mxu0 0
    %1713 = vmatprep.subr.bf16.mxu0 0
    %1714 = vmatpush1.bf16.msra.mxu0 0
    %1715 = vmatprep.subr.bf16.mxu0 0
    %1716 = vmatpush1.bf16.msra.mxu0 0
    %1717 = vmatprep.subr.bf16.mxu0 0
    %1718 = vmatpush1.bf16.msra.mxu0 0
    %1719 = vmatprep.subr.bf16.mxu0 0
    %1720 = vmatpush1.bf16.msra.mxu0 0
    %1721 = vmatprep.subr.bf16.mxu0 0
    %1722 = vmatpush1.bf16.msra.mxu0 0
    %1723 = vmatprep.subr.bf16.mxu0 0
    %1724 = vmatpush1.bf16.msra.mxu0 0
    %1725 = vmatprep.subr.bf16.mxu0 0
    %1726 = vmatpush1.bf16.msra.mxu0 0
    %1727 = vmatprep.mubr.bf16.mxu0 0
    %1728 = vmatmul.mubr.bf16.gmra.mrb[0].mxu0 %v1693
    %v1729 = vpop.f32.mrb[0].mxu0
    %v1730 = vadd.f32 0.0, %v1729
    %v1731 = vpop.f32.mrb[0].mxu0
    %v1732 = vpop.f32.mrb[0].mxu0
    %v1733 = vpop.f32.mrb[0].mxu0
    %1734 = vdwg.mxu0
    %v1735 = vadd.f32 %v1689, %v1730
    %v1736 = vadd.f32 %v1735, %v776
    %v1737 = vmax.f32 %v1736, 0.0
    %v1738 = vpack.c.bf16 %v1737, %v1737
    %v1739 = vld [vmem:[%s5 + $0x20] sm:$0xf]
    %v1740 = vld [vmem:[%s5 + $0x24] sm:$0xf]
    %v1741 = vld [vmem:[%s5 + $0x28] sm:$0xf]
    %v1742 = vld [vmem:[%s5 + $0x2c] sm:$0xf]
    %v1747 = vunpack.c.l.b16 %v1739
    %v1748 = vunpack.c.l.b16 %v1740
    %v1749 = vunpack.c.l.b16 %v1741
    %v1750 = vunpack.c.l.b16 %v1742
    %v1751 = vpack.c.b16 %v1748, %v1747
    %v1752 = vpack.c.b16 %v1750, %v1749
    %v1756 = vsel %vm1220, %v1738, 0
    %1758 = vmatprep.subr.bf16.mxu0 0
    %1759 = vmatpush1.bf16.msra.mxu0 %v1751
    %1760 = vmatprep.subr.bf16.mxu0 0
    %1761 = vmatpush1.bf16.msra.mxu0 %v1752
    %1762 = vmatprep.subr.bf16.mxu0 0
    %1763 = vmatpush1.bf16.msra.mxu0 0
    %1764 = vmatprep.subr.bf16.mxu0 0
    %1765 = vmatpush1.bf16.msra.mxu0 0
    %1766 = vmatprep.subr.bf16.mxu0 0
    %1767 = vmatpush1.bf16.msra.mxu0 0
    %1768 = vmatprep.subr.bf16.mxu0 0
    %1769 = vmatpush1.bf16.msra.mxu0 0
    %1770 = vmatprep.subr.bf16.mxu0 0
    %1771 = vmatpush1.bf16.msra.mxu0 0
    %1772 = vmatprep.subr.bf16.mxu0 0
    %1773 = vmatpush1.bf16.msra.mxu0 0
    %1774 = vmatprep.subr.bf16.mxu0 0
    %1775 = vmatpush1.bf16.msra.mxu0 0
    %1776 = vmatprep.subr.bf16.mxu0 0
    %1777 = vmatpush1.bf16.msra.mxu0 0
    %1778 = vmatprep.subr.bf16.mxu0 0
    %1779 = vmatpush1.bf16.msra.mxu0 0
    %1780 = vmatprep.subr.bf16.mxu0 0
    %1781 = vmatpush1.bf16.msra.mxu0 0
    %1782 = vmatprep.subr.bf16.mxu0 0
    %1783 = vmatpush1.bf16.msra.mxu0 0
    %1784 = vmatprep.subr.bf16.mxu0 0
    %1785 = vmatpush1.bf16.msra.mxu0 0
    %1786 = vmatprep.subr.bf16.mxu0 0
    %1787 = vmatpush1.bf16.msra.mxu0 0
    %1788 = vmatprep.subr.bf16.mxu0 0
    %1789 = vmatpush1.bf16.msra.mxu0 0
    %1790 = vmatprep.mubr.bf16.mxu0 0
    %1791 = vmatmul.mubr.bf16.gmra.mrb[0].mxu0 %v1756
    %v1792 = vpop.f32.mrb[0].mxu0
    %v1793 = vadd.f32 0.0, %v1792
    %v1794 = vpop.f32.mrb[0].mxu0
    %v1795 = vpop.f32.mrb[0].mxu0
    %v1796 = vpop.f32.mrb[0].mxu0
    %1797 = vdwg.mxu0
    %v1798 = vadd.f32 %v1314, %v1793
    %1799 = vmatprep.subr.bf16.mxu0 0
    %1800 = vmatpush1.bf16.msra.mxu0 %v281
    %1801 = vmatprep.subr.bf16.mxu0 0
    %1802 = vmatpush1.bf16.msra.mxu0 0
    %1803 = vmatprep.subr.bf16.mxu0 0
    %1804 = vmatpush1.bf16.msra.mxu0 0
    %1805 = vmatprep.subr.bf16.mxu0 0
    %1806 = vmatpush1.bf16.msra.mxu0 0
    %1807 = vmatprep.subr.bf16.mxu0 0
    %1808 = vmatpush1.bf16.msra.mxu0 0
    %1809 = vmatprep.subr.bf16.mxu0 0
    %1810 = vmatpush1.bf16.msra.mxu0 0
    %1811 = vmatprep.subr.bf16.mxu0 0
    %1812 = vmatpush1.bf16.msra.mxu0 0
    %1813 = vmatprep.subr.bf16.mxu0 0
    %1814 = vmatpush1.bf16.msra.mxu0 0
    %1815 = vmatprep.subr.bf16.mxu0 0
    %1816 = vmatpush1.bf16.msra.mxu0 0
    %1817 = vmatprep.subr.bf16.mxu0 0
    %1818 = vmatpush1.bf16.msra.mxu0 0
    %1819 = vmatprep.subr.bf16.mxu0 0
    %1820 = vmatpush1.bf16.msra.mxu0 0
    %1821 = vmatprep.subr.bf16.mxu0 0
    %1822 = vmatpush1.bf16.msra.mxu0 0
    %1823 = vmatprep.subr.bf16.mxu0 0
    %1824 = vmatpush1.bf16.msra.mxu0 0
    %1825 = vmatprep.subr.bf16.mxu0 0
    %1826 = vmatpush1.bf16.msra.mxu0 0
    %1827 = vmatprep.subr.bf16.mxu0 0
    %1828 = vmatpush1.bf16.msra.mxu0 0
    %1829 = vmatprep.subr.bf16.mxu0 0
    %1830 = vmatpush1.bf16.msra.mxu0 0
    %1831 = vmatprep.mubr.bf16.mxu0 0
    %1832 = vmatmul.mubr.bf16.gmra.mrb[0].mxu0 %v675
    %v1833 = vpop.f32.mrb[0].mxu0
    %v1834 = vadd.f32 0.0, %v1833
    %v1835 = vpop.f32.mrb[0].mxu0
    %v1836 = vpop.f32.mrb[0].mxu0
    %v1837 = vpop.f32.mrb[0].mxu0
    %1838 = vdwg.mxu0
    %1839 = vmatprep.subr.bf16.mxu0 0
    %1840 = vmatpush1.bf16.msra.mxu0 %v331
    %1841 = vmatprep.subr.bf16.mxu0 0
    %1842 = vmatpush1.bf16.msra.mxu0 0
    %1843 = vmatprep.subr.bf16.mxu0 0
    %1844 = vmatpush1.bf16.msra.mxu0 0
    %1845 = vmatprep.subr.bf16.mxu0 0
    %1846 = vmatpush1.bf16.msra.mxu0 0
    %1847 = vmatprep.subr.bf16.mxu0 0
    %1848 = vmatpush1.bf16.msra.mxu0 0
    %1849 = vmatprep.subr.bf16.mxu0 0
    %1850 = vmatpush1.bf16.msra.mxu0 0
    %1851 = vmatprep.subr.bf16.mxu0 0
    %1852 = vmatpush1.bf16.msra.mxu0 0
    %1853 = vmatprep.subr.bf16.mxu0 0
    %1854 = vmatpush1.bf16.msra.mxu0 0
    %1855 = vmatprep.subr.bf16.mxu0 0
    %1856 = vmatpush1.bf16.msra.mxu0 0
    %1857 = vmatprep.subr.bf16.mxu0 0
    %1858 = vmatpush1.bf16.msra.mxu0 0
    %1859 = vmatprep.subr.bf16.mxu0 0
    %1860 = vmatpush1.bf16.msra.mxu0 0
    %1861 = vmatprep.subr.bf16.mxu0 0
    %1862 = vmatpush1.bf16.msra.mxu0 0
    %1863 = vmatprep.subr.bf16.mxu0 0
    %1864 = vmatpush1.bf16.msra.mxu0 0
    %1865 = vmatprep.subr.bf16.mxu0 0
    %1866 = vmatpush1.bf16.msra.mxu0 0
    %1867 = vmatprep.subr.bf16.mxu0 0
    %1868 = vmatpush1.bf16.msra.mxu0 0
    %1869 = vmatprep.subr.bf16.mxu0 0
    %1870 = vmatpush1.bf16.msra.mxu0 0
    %1871 = vmatprep.mubr.bf16.mxu0 0
    %1872 = vmatmul.mubr.bf16.gmra.mrb[0].mxu0 %v615
    %v1873 = vpop.f32.mrb[0].mxu0
    %v1874 = vadd.f32 %v1834, %v1873
    %v1875 = vpop.f32.mrb[0].mxu0
    %v1876 = vpop.f32.mrb[0].mxu0
    %v1877 = vpop.f32.mrb[0].mxu0
    %1878 = vdwg.mxu0
    %1879 = vmatprep.subr.bf16.mxu0 0
    %1880 = vmatpush1.bf16.msra.mxu0 %v384
    %1881 = vmatprep.subr.bf16.mxu0 0
    %1882 = vmatpush1.bf16.msra.mxu0 0
    %1883 = vmatprep.subr.bf16.mxu0 0
    %1884 = vmatpush1.bf16.msra.mxu0 0
    %1885 = vmatprep.subr.bf16.mxu0 0
    %1886 = vmatpush1.bf16.msra.mxu0 0
    %1887 = vmatprep.subr.bf16.mxu0 0
    %1888 = vmatpush1.bf16.msra.mxu0 0
    %1889 = vmatprep.subr.bf16.mxu0 0
    %1890 = vmatpush1.bf16.msra.mxu0 0
    %1891 = vmatprep.subr.bf16.mxu0 0
    %1892 = vmatpush1.bf16.msra.mxu0 0
    %1893 = vmatprep.subr.bf16.mxu0 0
    %1894 = vmatpush1.bf16.msra.mxu0 0
    %1895 = vmatprep.subr.bf16.mxu0 0
    %1896 = vmatpush1.bf16.msra.mxu0 0
    %1897 = vmatprep.subr.bf16.mxu0 0
    %1898 = vmatpush1.bf16.msra.mxu0 0
    %1899 = vmatprep.subr.bf16.mxu0 0
    %1900 = vmatpush1.bf16.msra.mxu0 0
    %1901 = vmatprep.subr.bf16.mxu0 0
    %1902 = vmatpush1.bf16.msra.mxu0 0
    %1903 = vmatprep.subr.bf16.mxu0 0
    %1904 = vmatpush1.bf16.msra.mxu0 0
    %1905 = vmatprep.subr.bf16.mxu0 0
    %1906 = vmatpush1.bf16.msra.mxu0 0
    %1907 = vmatprep.subr.bf16.mxu0 0
    %1908 = vmatpush1.bf16.msra.mxu0 0
    %1909 = vmatprep.subr.bf16.mxu0 0
    %1910 = vmatpush1.bf16.msra.mxu0 0
    %1911 = vmatprep.mubr.bf16.mxu0 0
    %1912 = vmatmul.mubr.bf16.gmra.mrb[0].mxu0 %v728
    %v1913 = vpop.f32.mrb[0].mxu0
    %v1914 = vadd.f32 0.0, %v1913
    %v1915 = vpop.f32.mrb[0].mxu0
    %v1916 = vpop.f32.mrb[0].mxu0
    %v1917 = vpop.f32.mrb[0].mxu0
    %1918 = vdwg.mxu0
    %v1919 = vadd.f32 %v1874, %v1914
    %v1920 = vpack.c.bf16 %v253, %v252
    %v1922 = vshrl.u32 %v1920, 16
    %v1924 = vrot.slane %v1922, 3
    %v1925 = vshll.u32 %v1920, 16
    %v1927 = vrot.slane %v1925, 4
    %v1928 = vor.u32 %v1924, %v1927
    %v1930 = vsel %vm283, %v1928, 0
    %1932 = vmatprep.subr.bf16.mxu0 0
    %1933 = vmatpush1.bf16.msra.mxu0 %v445
    %1934 = vmatprep.subr.bf16.mxu0 0
    %1935 = vmatpush1.bf16.msra.mxu0 0
    %1936 = vmatprep.subr.bf16.mxu0 0
    %1937 = vmatpush1.bf16.msra.mxu0 0
    %1938 = vmatprep.subr.bf16.mxu0 0
    %1939 = vmatpush1.bf16.msra.mxu0 0
    %1940 = vmatprep.subr.bf16.mxu0 0
    %1941 = vmatpush1.bf16.msra.mxu0 0
    %1942 = vmatprep.subr.bf16.mxu0 0
    %1943 = vmatpush1.bf16.msra.mxu0 0
    %1944 = vmatprep.subr.bf16.mxu0 0
    %1945 = vmatpush1.bf16.msra.mxu0 0
    %1946 = vmatprep.subr.bf16.mxu0 0
    %1947 = vmatpush1.bf16.msra.mxu0 0
    %1948 = vmatprep.subr.bf16.mxu0 0
    %1949 = vmatpush1.bf16.msra.mxu0 0
    %1950 = vmatprep.subr.bf16.mxu0 0
    %1951 = vmatpush1.bf16.msra.mxu0 0
    %1952 = vmatprep.subr.bf16.mxu0 0
    %1953 = vmatpush1.bf16.msra.mxu0 0
    %1954 = vmatprep.subr.bf16.mxu0 0
    %1955 = vmatpush1.bf16.msra.mxu0 0
    %1956 = vmatprep.subr.bf16.mxu0 0
    %1957 = vmatpush1.bf16.msra.mxu0 0
    %1958 = vmatprep.subr.bf16.mxu0 0
    %1959 = vmatpush1.bf16.msra.mxu0 0
    %1960 = vmatprep.subr.bf16.mxu0 0
    %1961 = vmatpush1.bf16.msra.mxu0 0
    %1962 = vmatprep.subr.bf16.mxu0 0
    %1963 = vmatpush1.bf16.msra.mxu0 0
    %1964 = vmatprep.mubr.bf16.mxu0 0
    %1965 = vmatmul.mubr.bf16.gmra.mrb[0].mxu0 %v1930
    %v1966 = vpop.f32.mrb[0].mxu0
    %v1967 = vadd.f32 0.0, %v1966
    %v1968 = vpop.f32.mrb[0].mxu0
    %v1969 = vpop.f32.mrb[0].mxu0
    %v1970 = vpop.f32.mrb[0].mxu0
    %1971 = vdwg.mxu0
    %v1972 = vadd.f32 %v1919, %v1967
    %v1973 = vpack.c.bf16 %v253, %v253
    %v1975 = vrot.slane %v1973, 1
    %v1977 = vsel %vm283, %v1975, 0
    %1979 = vmatprep.subr.bf16.mxu0 0
    %1980 = vmatpush1.bf16.msra.mxu0 %v498
    %1981 = vmatprep.subr.bf16.mxu0 0
    %1982 = vmatpush1.bf16.msra.mxu0 0
    %1983 = vmatprep.subr.bf16.mxu0 0
    %1984 = vmatpush1.bf16.msra.mxu0 0
    %1985 = vmatprep.subr.bf16.mxu0 0
    %1986 = vmatpush1.bf16.msra.mxu0 0
    %1987 = vmatprep.subr.bf16.mxu0 0
    %1988 = vmatpush1.bf16.msra.mxu0 0
    %1989 = vmatprep.subr.bf16.mxu0 0
    %1990 = vmatpush1.bf16.msra.mxu0 0
    %1991 = vmatprep.subr.bf16.mxu0 0
    %1992 = vmatpush1.bf16.msra.mxu0 0
    %1993 = vmatprep.subr.bf16.mxu0 0
    %1994 = vmatpush1.bf16.msra.mxu0 0
    %1995 = vmatprep.subr.bf16.mxu0 0
    %1996 = vmatpush1.bf16.msra.mxu0 0
    %1997 = vmatprep.subr.bf16.mxu0 0
    %1998 = vmatpush1.bf16.msra.mxu0 0
    %1999 = vmatprep.subr.bf16.mxu0 0
    %2000 = vmatpush1.bf16.msra.mxu0 0
    %2001 = vmatprep.subr.bf16.mxu0 0
    %2002 = vmatpush1.bf16.msra.mxu0 0
    %2003 = vmatprep.subr.bf16.mxu0 0
    %2004 = vmatpush1.bf16.msra.mxu0 0
    %2005 = vmatprep.subr.bf16.mxu0 0
    %2006 = vmatpush1.bf16.msra.mxu0 0
    %2007 = vmatprep.subr.bf16.mxu0 0
    %2008 = vmatpush1.bf16.msra.mxu0 0
    %2009 = vmatprep.subr.bf16.mxu0 0
    %2010 = vmatpush1.bf16.msra.mxu0 0
    %2011 = vmatprep.mubr.bf16.mxu0 0
    %2012 = vmatmul.mubr.bf16.gmra.mrb[0].mxu0 %v1977
    %v2013 = vpop.f32.mrb[0].mxu0
    %v2014 = vadd.f32 0.0, %v2013
    %v2015 = vpop.f32.mrb[0].mxu0
    %v2016 = vpop.f32.mrb[0].mxu0
    %v2017 = vpop.f32.mrb[0].mxu0
    %2018 = vdwg.mxu0
    %v2019 = vadd.f32 %v1972, %v2014
    %v2021 = vshrl.u32 %v1973, 16
    %v2023 = vrot.slane %v2021, 2
    %v2024 = vshll.u32 %v1973, 16
    %v2026 = vrot.slane %v2024, 3
    %v2027 = vor.u32 %v2023, %v2026
    %v2029 = vsel %vm283, %v2027, 0
    %2031 = vmatprep.subr.bf16.mxu0 0
    %2032 = vmatpush1.bf16.msra.mxu0 %v557
    %2033 = vmatprep.subr.bf16.mxu0 0
    %2034 = vmatpush1.bf16.msra.mxu0 0
    %2035 = vmatprep.subr.bf16.mxu0 0
    %2036 = vmatpush1.bf16.msra.mxu0 0
    %2037 = vmatprep.subr.bf16.mxu0 0
    %2038 = vmatpush1.bf16.msra.mxu0 0
    %2039 = vmatprep.subr.bf16.mxu0 0
    %2040 = vmatpush1.bf16.msra.mxu0 0
    %2041 = vmatprep.subr.bf16.mxu0 0
    %2042 = vmatpush1.bf16.msra.mxu0 0
    %2043 = vmatprep.subr.bf16.mxu0 0
    %2044 = vmatpush1.bf16.msra.mxu0 0
    %2045 = vmatprep.subr.bf16.mxu0 0
    %2046 = vmatpush1.bf16.msra.mxu0 0
    %2047 = vmatprep.subr.bf16.mxu0 0
    %2048 = vmatpush1.bf16.msra.mxu0 0
    %2049 = vmatprep.subr.bf16.mxu0 0
    %2050 = vmatpush1.bf16.msra.mxu0 0
    %2051 = vmatprep.subr.bf16.mxu0 0
    %2052 = vmatpush1.bf16.msra.mxu0 0
    %2053 = vmatprep.subr.bf16.mxu0 0
    %2054 = vmatpush1.bf16.msra.mxu0 0
    %2055 = vmatprep.subr.bf16.mxu0 0
    %2056 = vmatpush1.bf16.msra.mxu0 0
    %2057 = vmatprep.subr.bf16.mxu0 0
    %2058 = vmatpush1.bf16.msra.mxu0 0
    %2059 = vmatprep.subr.bf16.mxu0 0
    %2060 = vmatpush1.bf16.msra.mxu0 0
    %2061 = vmatprep.subr.bf16.mxu0 0
    %2062 = vmatpush1.bf16.msra.mxu0 0
    %2063 = vmatprep.mubr.bf16.mxu0 0
    %2064 = vmatmul.mubr.bf16.gmra.mrb[0].mxu0 %v2029
    %v2065 = vpop.f32.mrb[0].mxu0
    %v2066 = vadd.f32 0.0, %v2065
    %v2067 = vpop.f32.mrb[0].mxu0
    %v2068 = vpop.f32.mrb[0].mxu0
    %v2069 = vpop.f32.mrb[0].mxu0
    %2070 = vdwg.mxu0
    %v2071 = vadd.f32 %v2019, %v2066
    %v2072 = vpack.c.bf16 %v255, %v255
    %v2074 = vrot.slane %v2072, 2
    %v2076 = vsel %vm283, %v2074, 0
    %2078 = vmatprep.subr.bf16.mxu0 0
    %2079 = vmatpush1.bf16.msra.mxu0 %v612
    %2080 = vmatprep.subr.bf16.mxu0 0
    %2081 = vmatpush1.bf16.msra.mxu0 0
    %2082 = vmatprep.subr.bf16.mxu0 0
    %2083 = vmatpush1.bf16.msra.mxu0 0
    %2084 = vmatprep.subr.bf16.mxu0 0
    %2085 = vmatpush1.bf16.msra.mxu0 0
    %2086 = vmatprep.subr.bf16.mxu0 0
    %2087 = vmatpush1.bf16.msra.mxu0 0
    %2088 = vmatprep.subr.bf16.mxu0 0
    %2089 = vmatpush1.bf16.msra.mxu0 0
    %2090 = vmatprep.subr.bf16.mxu0 0
    %2091 = vmatpush1.bf16.msra.mxu0 0
    %2092 = vmatprep.subr.bf16.mxu0 0
    %2093 = vmatpush1.bf16.msra.mxu0 0
    %2094 = vmatprep.subr.bf16.mxu0 0
    %2095 = vmatpush1.bf16.msra.mxu0 0
    %2096 = vmatprep.subr.bf16.mxu0 0
    %2097 = vmatpush1.bf16.msra.mxu0 0
    %2098 = vmatprep.subr.bf16.mxu0 0
    %2099 = vmatpush1.bf16.msra.mxu0 0
    %2100 = vmatprep.subr.bf16.mxu0 0
    %2101 = vmatpush1.bf16.msra.mxu0 0
    %2102 = vmatprep.subr.bf16.mxu0 0
    %2103 = vmatpush1.bf16.msra.mxu0 0
    %2104 = vmatprep.subr.bf16.mxu0 0
    %2105 = vmatpush1.bf16.msra.mxu0 0
    %2106 = vmatprep.subr.bf16.mxu0 0
    %2107 = vmatpush1.bf16.msra.mxu0 0
    %2108 = vmatprep.subr.bf16.mxu0 0
    %2109 = vmatpush1.bf16.msra.mxu0 0
    %2110 = vmatprep.mubr.bf16.mxu0 0
    %2111 = vmatmul.mubr.bf16.gmra.mrb[0].mxu0 %v2076
    %v2112 = vpop.f32.mrb[0].mxu0
    %v2113 = vadd.f32 0.0, %v2112
    %v2114 = vpop.f32.mrb[0].mxu0
    %v2115 = vpop.f32.mrb[0].mxu0
    %v2116 = vpop.f32.mrb[0].mxu0
    %2117 = vdwg.mxu0
    %v2118 = vadd.f32 %v2071, %v2113
    %v2119 = vpack.c.bf16 %v256, %v255
    %v2121 = vshrl.u32 %v2119, 16
    %v2123 = vrot.slane %v2121, 3
    %v2124 = vshll.u32 %v2119, 16
    %v2126 = vrot.slane %v2124, 4
    %v2127 = vor.u32 %v2123, %v2126
    %v2129 = vsel %vm283, %v2127, 0
    %2131 = vmatprep.subr.bf16.mxu0 0
    %2132 = vmatpush1.bf16.msra.mxu0 %v672
    %2133 = vmatprep.subr.bf16.mxu0 0
    %2134 = vmatpush1.bf16.msra.mxu0 0
    %2135 = vmatprep.subr.bf16.mxu0 0
    %2136 = vmatpush1.bf16.msra.mxu0 0
    %2137 = vmatprep.subr.bf16.mxu0 0
    %2138 = vmatpush1.bf16.msra.mxu0 0
    %2139 = vmatprep.subr.bf16.mxu0 0
    %2140 = vmatpush1.bf16.msra.mxu0 0
    %2141 = vmatprep.subr.bf16.mxu0 0
    %2142 = vmatpush1.bf16.msra.mxu0 0
    %2143 = vmatprep.subr.bf16.mxu0 0
    %2144 = vmatpush1.bf16.msra.mxu0 0
    %2145 = vmatprep.subr.bf16.mxu0 0
    %2146 = vmatpush1.bf16.msra.mxu0 0
    %2147 = vmatprep.subr.bf16.mxu0 0
    %2148 = vmatpush1.bf16.msra.mxu0 0
    %2149 = vmatprep.subr.bf16.mxu0 0
    %2150 = vmatpush1.bf16.msra.mxu0 0
    %2151 = vmatprep.subr.bf16.mxu0 0
    %2152 = vmatpush1.bf16.msra.mxu0 0
    %2153 = vmatprep.subr.bf16.mxu0 0
    %2154 = vmatpush1.bf16.msra.mxu0 0
    %2155 = vmatprep.subr.bf16.mxu0 0
    %2156 = vmatpush1.bf16.msra.mxu0 0
    %2157 = vmatprep.subr.bf16.mxu0 0
    %2158 = vmatpush1.bf16.msra.mxu0 0
    %2159 = vmatprep.subr.bf16.mxu0 0
    %2160 = vmatpush1.bf16.msra.mxu0 0
    %2161 = vmatprep.subr.bf16.mxu0 0
    %2162 = vmatpush1.bf16.msra.mxu0 0
    %2163 = vmatprep.mubr.bf16.mxu0 0
    %2164 = vmatmul.mubr.bf16.gmra.mrb[0].mxu0 %v2129
    %v2165 = vpop.f32.mrb[0].mxu0
    %v2166 = vadd.f32 0.0, %v2165
    %v2167 = vpop.f32.mrb[0].mxu0
    %v2168 = vpop.f32.mrb[0].mxu0
    %v2169 = vpop.f32.mrb[0].mxu0
    %2170 = vdwg.mxu0
    %v2171 = vadd.f32 %v2118, %v2166
    %v2172 = vpack.c.bf16 %v256, %v256
    %v2174 = vrot.slane %v2172, 1
    %v2176 = vsel %vm283, %v2174, 0
    %2178 = vmatprep.subr.bf16.mxu0 0
    %2179 = vmatpush1.bf16.msra.mxu0 %v725
    %2180 = vmatprep.subr.bf16.mxu0 0
    %2181 = vmatpush1.bf16.msra.mxu0 0
    %2182 = vmatprep.subr.bf16.mxu0 0
    %2183 = vmatpush1.bf16.msra.mxu0 0
    %2184 = vmatprep.subr.bf16.mxu0 0
    %2185 = vmatpush1.bf16.msra.mxu0 0
    %2186 = vmatprep.subr.bf16.mxu0 0
    %2187 = vmatpush1.bf16.msra.mxu0 0
    %2188 = vmatprep.subr.bf16.mxu0 0
    %2189 = vmatpush1.bf16.msra.mxu0 0
    %2190 = vmatprep.subr.bf16.mxu0 0
    %2191 = vmatpush1.bf16.msra.mxu0 0
    %2192 = vmatprep.subr.bf16.mxu0 0
    %2193 = vmatpush1.bf16.msra.mxu0 0
    %2194 = vmatprep.subr.bf16.mxu0 0
    %2195 = vmatpush1.bf16.msra.mxu0 0
    %2196 = vmatprep.subr.bf16.mxu0 0
    %2197 = vmatpush1.bf16.msra.mxu0 0
    %2198 = vmatprep.subr.bf16.mxu0 0
    %2199 = vmatpush1.bf16.msra.mxu0 0
    %2200 = vmatprep.subr.bf16.mxu0 0
    %2201 = vmatpush1.bf16.msra.mxu0 0
    %2202 = vmatprep.subr.bf16.mxu0 0
    %2203 = vmatpush1.bf16.msra.mxu0 0
    %2204 = vmatprep.subr.bf16.mxu0 0
    %2205 = vmatpush1.bf16.msra.mxu0 0
    %2206 = vmatprep.subr.bf16.mxu0 0
    %2207 = vmatpush1.bf16.msra.mxu0 0
    %2208 = vmatprep.subr.bf16.mxu0 0
    %2209 = vmatpush1.bf16.msra.mxu0 0
    %2210 = vmatprep.mubr.bf16.mxu0 0
    %2211 = vmatmul.mubr.bf16.gmra.mrb[0].mxu0 %v2176
    %v2212 = vpop.f32.mrb[0].mxu0
    %v2213 = vadd.f32 0.0, %v2212
    %v2214 = vpop.f32.mrb[0].mxu0
    %v2215 = vpop.f32.mrb[0].mxu0
    %v2216 = vpop.f32.mrb[0].mxu0
    %2217 = vdwg.mxu0
    %v2218 = vadd.f32 %v2171, %v2213
    %v2219 = vadd.f32 %v2218, %v776
    %v2220 = vmax.f32 %v2219, 0.0
    %v2221 = vpack.c.bf16 %v2220, %v2220
    %v2222 = vld [vmem:[%s5 + $0x30] sm:$0xf]
    %v2223 = vld [vmem:[%s5 + $0x34] sm:$0xf]
    %v2224 = vld [vmem:[%s5 + $0x38] sm:$0xf]
    %v2225 = vld [vmem:[%s5 + $0x3c] sm:$0xf]
    %v2230 = vunpack.c.l.b16 %v2222
    %v2231 = vunpack.c.l.b16 %v2223
    %v2232 = vunpack.c.l.b16 %v2224
    %v2233 = vunpack.c.l.b16 %v2225
    %v2234 = vpack.c.b16 %v2231, %v2230
    %v2235 = vpack.c.b16 %v2233, %v2232
    %v2239 = vsel %vm1220, %v2221, 0
    %2241 = vmatprep.subr.bf16.mxu0 0
    %2242 = vmatpush1.bf16.msra.mxu0 %v2234
    %2243 = vmatprep.subr.bf16.mxu0 0
    %2244 = vmatpush1.bf16.msra.mxu0 %v2235
    %2245 = vmatprep.subr.bf16.mxu0 0
    %2246 = vmatpush1.bf16.msra.mxu0 0
    %2247 = vmatprep.subr.bf16.mxu0 0
    %2248 = vmatpush1.bf16.msra.mxu0 0
    %2249 = vmatprep.subr.bf16.mxu0 0
    %2250 = vmatpush1.bf16.msra.mxu0 0
    %2251 = vmatprep.subr.bf16.mxu0 0
    %2252 = vmatpush1.bf16.msra.mxu0 0
    %2253 = vmatprep.subr.bf16.mxu0 0
    %2254 = vmatpush1.bf16.msra.mxu0 0
    %2255 = vmatprep.subr.bf16.mxu0 0
    %2256 = vmatpush1.bf16.msra.mxu0 0
    %2257 = vmatprep.subr.bf16.mxu0 0
    %2258 = vmatpush1.bf16.msra.mxu0 0
    %2259 = vmatprep.subr.bf16.mxu0 0
    %2260 = vmatpush1.bf16.msra.mxu0 0
    %2261 = vmatprep.subr.bf16.mxu0 0
    %2262 = vmatpush1.bf16.msra.mxu0 0
    %2263 = vmatprep.subr.bf16.mxu0 0
    %2264 = vmatpush1.bf16.msra.mxu0 0
    %2265 = vmatprep.subr.bf16.mxu0 0
    %2266 = vmatpush1.bf16.msra.mxu0 0
    %2267 = vmatprep.subr.bf16.mxu0 0
    %2268 = vmatpush1.bf16.msra.mxu0 0
    %2269 = vmatprep.subr.bf16.mxu0 0
    %2270 = vmatpush1.bf16.msra.mxu0 0
    %2271 = vmatprep.subr.bf16.mxu0 0
    %2272 = vmatpush1.bf16.msra.mxu0 0
    %2273 = vmatprep.mubr.bf16.mxu0 0
    %2274 = vmatmul.mubr.bf16.gmra.mrb[0].mxu0 %v2239
    %v2275 = vpop.f32.mrb[0].mxu0
    %v2276 = vadd.f32 0.0, %v2275
    %v2277 = vpop.f32.mrb[0].mxu0
    %v2278 = vpop.f32.mrb[0].mxu0
    %v2279 = vpop.f32.mrb[0].mxu0
    %2280 = vdwg.mxu0
    %v2281 = vadd.f32 %v1798, %v2276
    %2282 = vmatprep.subr.bf16.mxu0 0
    %2283 = vmatpush1.bf16.msra.mxu0 %v281
    %2284 = vmatprep.subr.bf16.mxu0 0
    %2285 = vmatpush1.bf16.msra.mxu0 0
    %2286 = vmatprep.subr.bf16.mxu0 0
    %2287 = vmatpush1.bf16.msra.mxu0 0
    %2288 = vmatprep.subr.bf16.mxu0 0
    %2289 = vmatpush1.bf16.msra.mxu0 0
    %2290 = vmatprep.subr.bf16.mxu0 0
    %2291 = vmatpush1.bf16.msra.mxu0 0
    %2292 = vmatprep.subr.bf16.mxu0 0
    %2293 = vmatpush1.bf16.msra.mxu0 0
    %2294 = vmatprep.subr.bf16.mxu0 0
    %2295 = vmatpush1.bf16.msra.mxu0 0
    %2296 = vmatprep.subr.bf16.mxu0 0
    %2297 = vmatpush1.bf16.msra.mxu0 0
    %2298 = vmatprep.subr.bf16.mxu0 0
    %2299 = vmatpush1.bf16.msra.mxu0 0
    %2300 = vmatprep.subr.bf16.mxu0 0
    %2301 = vmatpush1.bf16.msra.mxu0 0
    %2302 = vmatprep.subr.bf16.mxu0 0
    %2303 = vmatpush1.bf16.msra.mxu0 0
    %2304 = vmatprep.subr.bf16.mxu0 0
    %2305 = vmatpush1.bf16.msra.mxu0 0
    %2306 = vmatprep.subr.bf16.mxu0 0
    %2307 = vmatpush1.bf16.msra.mxu0 0
    %2308 = vmatprep.subr.bf16.mxu0 0
    %2309 = vmatpush1.bf16.msra.mxu0 0
    %2310 = vmatprep.subr.bf16.mxu0 0
    %2311 = vmatpush1.bf16.msra.mxu0 0
    %2312 = vmatprep.subr.bf16.mxu0 0
    %2313 = vmatpush1.bf16.msra.mxu0 0
    %2314 = vmatprep.mubr.bf16.mxu0 0
    %2315 = vmatmul.mubr.bf16.gmra.mrb[0].mxu0 %v1111
    %v2316 = vpop.f32.mrb[0].mxu0
    %v2317 = vadd.f32 0.0, %v2316
    %v2318 = vpop.f32.mrb[0].mxu0
    %v2319 = vpop.f32.mrb[0].mxu0
    %v2320 = vpop.f32.mrb[0].mxu0
    %2321 = vdwg.mxu0
    %2322 = vmatprep.subr.bf16.mxu0 0
    %2323 = vmatpush1.bf16.msra.mxu0 %v331
    %2324 = vmatprep.subr.bf16.mxu0 0
    %2325 = vmatpush1.bf16.msra.mxu0 0
    %2326 = vmatprep.subr.bf16.mxu0 0
    %2327 = vmatpush1.bf16.msra.mxu0 0
    %2328 = vmatprep.subr.bf16.mxu0 0
    %2329 = vmatpush1.bf16.msra.mxu0 0
    %2330 = vmatprep.subr.bf16.mxu0 0
    %2331 = vmatpush1.bf16.msra.mxu0 0
    %2332 = vmatprep.subr.bf16.mxu0 0
    %2333 = vmatpush1.bf16.msra.mxu0 0
    %2334 = vmatprep.subr.bf16.mxu0 0
    %2335 = vmatpush1.bf16.msra.mxu0 0
    %2336 = vmatprep.subr.bf16.mxu0 0
    %2337 = vmatpush1.bf16.msra.mxu0 0
    %2338 = vmatprep.subr.bf16.mxu0 0
    %2339 = vmatpush1.bf16.msra.mxu0 0
    %2340 = vmatprep.subr.bf16.mxu0 0
    %2341 = vmatpush1.bf16.msra.mxu0 0
    %2342 = vmatprep.subr.bf16.mxu0 0
    %2343 = vmatpush1.bf16.msra.mxu0 0
    %2344 = vmatprep.subr.bf16.mxu0 0
    %2345 = vmatpush1.bf16.msra.mxu0 0
    %2346 = vmatprep.subr.bf16.mxu0 0
    %2347 = vmatpush1.bf16.msra.mxu0 0
    %2348 = vmatprep.subr.bf16.mxu0 0
    %2349 = vmatpush1.bf16.msra.mxu0 0
    %2350 = vmatprep.subr.bf16.mxu0 0
    %2351 = vmatpush1.bf16.msra.mxu0 0
    %2352 = vmatprep.subr.bf16.mxu0 0
    %2353 = vmatpush1.bf16.msra.mxu0 0
    %2354 = vmatprep.mubr.bf16.mxu0 0
    %2355 = vmatmul.mubr.bf16.gmra.mrb[0].mxu0 %v728
    %v2356 = vpop.f32.mrb[0].mxu0
    %v2357 = vadd.f32 %v2317, %v2356
    %v2358 = vpop.f32.mrb[0].mxu0
    %v2359 = vpop.f32.mrb[0].mxu0
    %v2360 = vpop.f32.mrb[0].mxu0
    %2361 = vdwg.mxu0
    %2362 = vmatprep.subr.bf16.mxu0 0
    %2363 = vmatpush1.bf16.msra.mxu0 %v384
    %2364 = vmatprep.subr.bf16.mxu0 0
    %2365 = vmatpush1.bf16.msra.mxu0 0
    %2366 = vmatprep.subr.bf16.mxu0 0
    %2367 = vmatpush1.bf16.msra.mxu0 0
    %2368 = vmatprep.subr.bf16.mxu0 0
    %2369 = vmatpush1.bf16.msra.mxu0 0
    %2370 = vmatprep.subr.bf16.mxu0 0
    %2371 = vmatpush1.bf16.msra.mxu0 0
    %2372 = vmatprep.subr.bf16.mxu0 0
    %2373 = vmatpush1.bf16.msra.mxu0 0
    %2374 = vmatprep.subr.bf16.mxu0 0
    %2375 = vmatpush1.bf16.msra.mxu0 0
    %2376 = vmatprep.subr.bf16.mxu0 0
    %2377 = vmatpush1.bf16.msra.mxu0 0
    %2378 = vmatprep.subr.bf16.mxu0 0
    %2379 = vmatpush1.bf16.msra.mxu0 0
    %2380 = vmatprep.subr.bf16.mxu0 0
    %2381 = vmatpush1.bf16.msra.mxu0 0
    %2382 = vmatprep.subr.bf16.mxu0 0
    %2383 = vmatpush1.bf16.msra.mxu0 0
    %2384 = vmatprep.subr.bf16.mxu0 0
    %2385 = vmatpush1.bf16.msra.mxu0 0
    %2386 = vmatprep.subr.bf16.mxu0 0
    %2387 = vmatpush1.bf16.msra.mxu0 0
    %2388 = vmatprep.subr.bf16.mxu0 0
    %2389 = vmatpush1.bf16.msra.mxu0 0
    %2390 = vmatprep.subr.bf16.mxu0 0
    %2391 = vmatpush1.bf16.msra.mxu0 0
    %2392 = vmatprep.subr.bf16.mxu0 0
    %2393 = vmatpush1.bf16.msra.mxu0 0
    %2394 = vmatprep.mubr.bf16.mxu0 0
    %2395 = vmatmul.mubr.bf16.gmra.mrb[0].mxu0 %v1158
    %v2396 = vpop.f32.mrb[0].mxu0
    %v2397 = vadd.f32 0.0, %v2396
    %v2398 = vpop.f32.mrb[0].mxu0
    %v2399 = vpop.f32.mrb[0].mxu0
    %v2400 = vpop.f32.mrb[0].mxu0
    %2401 = vdwg.mxu0
    %v2402 = vadd.f32 %v2357, %v2397
    %2403 = vmatprep.subr.bf16.mxu0 0
    %2404 = vmatpush1.bf16.msra.mxu0 %v445
    %2405 = vmatprep.subr.bf16.mxu0 0
    %2406 = vmatpush1.bf16.msra.mxu0 0
    %2407 = vmatprep.subr.bf16.mxu0 0
    %2408 = vmatpush1.bf16.msra.mxu0 0
    %2409 = vmatprep.subr.bf16.mxu0 0
    %2410 = vmatpush1.bf16.msra.mxu0 0
    %2411 = vmatprep.subr.bf16.mxu0 0
    %2412 = vmatpush1.bf16.msra.mxu0 0
    %2413 = vmatprep.subr.bf16.mxu0 0
    %2414 = vmatpush1.bf16.msra.mxu0 0
    %2415 = vmatprep.subr.bf16.mxu0 0
    %2416 = vmatpush1.bf16.msra.mxu0 0
    %2417 = vmatprep.subr.bf16.mxu0 0
    %2418 = vmatpush1.bf16.msra.mxu0 0
    %2419 = vmatprep.subr.bf16.mxu0 0
    %2420 = vmatpush1.bf16.msra.mxu0 0
    %2421 = vmatprep.subr.bf16.mxu0 0
    %2422 = vmatpush1.bf16.msra.mxu0 0
    %2423 = vmatprep.subr.bf16.mxu0 0
    %2424 = vmatpush1.bf16.msra.mxu0 0
    %2425 = vmatprep.subr.bf16.mxu0 0
    %2426 = vmatpush1.bf16.msra.mxu0 0
    %2427 = vmatprep.subr.bf16.mxu0 0
    %2428 = vmatpush1.bf16.msra.mxu0 0
    %2429 = vmatprep.subr.bf16.mxu0 0
    %2430 = vmatpush1.bf16.msra.mxu0 0
    %2431 = vmatprep.subr.bf16.mxu0 0
    %2432 = vmatpush1.bf16.msra.mxu0 0
    %2433 = vmatprep.subr.bf16.mxu0 0
    %2434 = vmatpush1.bf16.msra.mxu0 0
    %2435 = vmatprep.mubr.bf16.mxu0 0
    %2436 = vmatmul.mubr.bf16.gmra.mrb[0].mxu0 %v2029
    %v2437 = vpop.f32.mrb[0].mxu0
    %v2438 = vadd.f32 0.0, %v2437
    %v2439 = vpop.f32.mrb[0].mxu0
    %v2440 = vpop.f32.mrb[0].mxu0
    %v2441 = vpop.f32.mrb[0].mxu0
    %2442 = vdwg.mxu0
    %v2443 = vadd.f32 %v2402, %v2438
    %v2444 = vpack.c.bf16 %v254, %v254
    %v2446 = vsel %vm283, %v2444, 0
    %2448 = vmatprep.subr.bf16.mxu0 0
    %2449 = vmatpush1.bf16.msra.mxu0 %v498
    %2450 = vmatprep.subr.bf16.mxu0 0
    %2451 = vmatpush1.bf16.msra.mxu0 0
    %2452 = vmatprep.subr.bf16.mxu0 0
    %2453 = vmatpush1.bf16.msra.mxu0 0
    %2454 = vmatprep.subr.bf16.mxu0 0
    %2455 = vmatpush1.bf16.msra.mxu0 0
    %2456 = vmatprep.subr.bf16.mxu0 0
    %2457 = vmatpush1.bf16.msra.mxu0 0
    %2458 = vmatprep.subr.bf16.mxu0 0
    %2459 = vmatpush1.bf16.msra.mxu0 0
    %2460 = vmatprep.subr.bf16.mxu0 0
    %2461 = vmatpush1.bf16.msra.mxu0 0
    %2462 = vmatprep.subr.bf16.mxu0 0
    %2463 = vmatpush1.bf16.msra.mxu0 0
    %2464 = vmatprep.subr.bf16.mxu0 0
    %2465 = vmatpush1.bf16.msra.mxu0 0
    %2466 = vmatprep.subr.bf16.mxu0 0
    %2467 = vmatpush1.bf16.msra.mxu0 0
    %2468 = vmatprep.subr.bf16.mxu0 0
    %2469 = vmatpush1.bf16.msra.mxu0 0
    %2470 = vmatprep.subr.bf16.mxu0 0
    %2471 = vmatpush1.bf16.msra.mxu0 0
    %2472 = vmatprep.subr.bf16.mxu0 0
    %2473 = vmatpush1.bf16.msra.mxu0 0
    %2474 = vmatprep.subr.bf16.mxu0 0
    %2475 = vmatpush1.bf16.msra.mxu0 0
    %2476 = vmatprep.subr.bf16.mxu0 0
    %2477 = vmatpush1.bf16.msra.mxu0 0
    %2478 = vmatprep.subr.bf16.mxu0 0
    %2479 = vmatpush1.bf16.msra.mxu0 0
    %2480 = vmatprep.mubr.bf16.mxu0 0
    %2481 = vmatmul.mubr.bf16.gmra.mrb[0].mxu0 %v2446
    %v2482 = vpop.f32.mrb[0].mxu0
    %v2483 = vadd.f32 0.0, %v2482
    %v2484 = vpop.f32.mrb[0].mxu0
    %v2485 = vpop.f32.mrb[0].mxu0
    %v2486 = vpop.f32.mrb[0].mxu0
    %2487 = vdwg.mxu0
    %v2488 = vadd.f32 %v2443, %v2483
    %v2489 = vshrl.u32 %v2444, 16
    %v2491 = vrot.slane %v2489, 1
    %v2492 = vshll.u32 %v2444, 16
    %v2494 = vrot.slane %v2492, 2
    %v2495 = vor.u32 %v2491, %v2494
    %v2497 = vsel %vm283, %v2495, 0
    %2499 = vmatprep.subr.bf16.mxu0 0
    %2500 = vmatpush1.bf16.msra.mxu0 %v557
    %2501 = vmatprep.subr.bf16.mxu0 0
    %2502 = vmatpush1.bf16.msra.mxu0 0
    %2503 = vmatprep.subr.bf16.mxu0 0
    %2504 = vmatpush1.bf16.msra.mxu0 0
    %2505 = vmatprep.subr.bf16.mxu0 0
    %2506 = vmatpush1.bf16.msra.mxu0 0
    %2507 = vmatprep.subr.bf16.mxu0 0
    %2508 = vmatpush1.bf16.msra.mxu0 0
    %2509 = vmatprep.subr.bf16.mxu0 0
    %2510 = vmatpush1.bf16.msra.mxu0 0
    %2511 = vmatprep.subr.bf16.mxu0 0
    %2512 = vmatpush1.bf16.msra.mxu0 0
    %2513 = vmatprep.subr.bf16.mxu0 0
    %2514 = vmatpush1.bf16.msra.mxu0 0
    %2515 = vmatprep.subr.bf16.mxu0 0
    %2516 = vmatpush1.bf16.msra.mxu0 0
    %2517 = vmatprep.subr.bf16.mxu0 0
    %2518 = vmatpush1.bf16.msra.mxu0 0
    %2519 = vmatprep.subr.bf16.mxu0 0
    %2520 = vmatpush1.bf16.msra.mxu0 0
    %2521 = vmatprep.subr.bf16.mxu0 0
    %2522 = vmatpush1.bf16.msra.mxu0 0
    %2523 = vmatprep.subr.bf16.mxu0 0
    %2524 = vmatpush1.bf16.msra.mxu0 0
    %2525 = vmatprep.subr.bf16.mxu0 0
    %2526 = vmatpush1.bf16.msra.mxu0 0
    %2527 = vmatprep.subr.bf16.mxu0 0
    %2528 = vmatpush1.bf16.msra.mxu0 0
    %2529 = vmatprep.subr.bf16.mxu0 0
    %2530 = vmatpush1.bf16.msra.mxu0 0
    %2531 = vmatprep.mubr.bf16.mxu0 0
    %2532 = vmatmul.mubr.bf16.gmra.mrb[0].mxu0 %v2497
    %v2533 = vpop.f32.mrb[0].mxu0
    %v2534 = vadd.f32 0.0, %v2533
    %v2535 = vpop.f32.mrb[0].mxu0
    %v2536 = vpop.f32.mrb[0].mxu0
    %v2537 = vpop.f32.mrb[0].mxu0
    %2538 = vdwg.mxu0
    %v2539 = vadd.f32 %v2488, %v2534
    %2540 = vmatprep.subr.bf16.mxu0 0
    %2541 = vmatpush1.bf16.msra.mxu0 %v612
    %2542 = vmatprep.subr.bf16.mxu0 0
    %2543 = vmatpush1.bf16.msra.mxu0 0
    %2544 = vmatprep.subr.bf16.mxu0 0
    %2545 = vmatpush1.bf16.msra.mxu0 0
    %2546 = vmatprep.subr.bf16.mxu0 0
    %2547 = vmatpush1.bf16.msra.mxu0 0
    %2548 = vmatprep.subr.bf16.mxu0 0
    %2549 = vmatpush1.bf16.msra.mxu0 0
    %2550 = vmatprep.subr.bf16.mxu0 0
    %2551 = vmatpush1.bf16.msra.mxu0 0
    %2552 = vmatprep.subr.bf16.mxu0 0
    %2553 = vmatpush1.bf16.msra.mxu0 0
    %2554 = vmatprep.subr.bf16.mxu0 0
    %2555 = vmatpush1.bf16.msra.mxu0 0
    %2556 = vmatprep.subr.bf16.mxu0 0
    %2557 = vmatpush1.bf16.msra.mxu0 0
    %2558 = vmatprep.subr.bf16.mxu0 0
    %2559 = vmatpush1.bf16.msra.mxu0 0
    %2560 = vmatprep.subr.bf16.mxu0 0
    %2561 = vmatpush1.bf16.msra.mxu0 0
    %2562 = vmatprep.subr.bf16.mxu0 0
    %2563 = vmatpush1.bf16.msra.mxu0 0
    %2564 = vmatprep.subr.bf16.mxu0 0
    %2565 = vmatpush1.bf16.msra.mxu0 0
    %2566 = vmatprep.subr.bf16.mxu0 0
    %2567 = vmatpush1.bf16.msra.mxu0 0
    %2568 = vmatprep.subr.bf16.mxu0 0
    %2569 = vmatpush1.bf16.msra.mxu0 0
    %2570 = vmatprep.subr.bf16.mxu0 0
    %2571 = vmatpush1.bf16.msra.mxu0 0
    %2572 = vmatprep.mubr.bf16.mxu0 0
    %2573 = vmatmul.mubr.bf16.gmra.mrb[0].mxu0 %v2176
    %v2574 = vpop.f32.mrb[0].mxu0
    %v2575 = vadd.f32 0.0, %v2574
    %v2576 = vpop.f32.mrb[0].mxu0
    %v2577 = vpop.f32.mrb[0].mxu0
    %v2578 = vpop.f32.mrb[0].mxu0
    %2579 = vdwg.mxu0
    %v2580 = vadd.f32 %v2539, %v2575
    %v2582 = vshrl.u32 %v2172, 16
    %v2584 = vrot.slane %v2582, 2
    %v2585 = vshll.u32 %v2172, 16
    %v2587 = vrot.slane %v2585, 3
    %v2588 = vor.u32 %v2584, %v2587
    %v2590 = vsel %vm283, %v2588, 0
    %2592 = vmatprep.subr.bf16.mxu0 0
    %2593 = vmatpush1.bf16.msra.mxu0 %v672
    %2594 = vmatprep.subr.bf16.mxu0 0
    %2595 = vmatpush1.bf16.msra.mxu0 0
    %2596 = vmatprep.subr.bf16.mxu0 0
    %2597 = vmatpush1.bf16.msra.mxu0 0
    %2598 = vmatprep.subr.bf16.mxu0 0
    %2599 = vmatpush1.bf16.msra.mxu0 0
    %2600 = vmatprep.subr.bf16.mxu0 0
    %2601 = vmatpush1.bf16.msra.mxu0 0
    %2602 = vmatprep.subr.bf16.mxu0 0
    %2603 = vmatpush1.bf16.msra.mxu0 0
    %2604 = vmatprep.subr.bf16.mxu0 0
    %2605 = vmatpush1.bf16.msra.mxu0 0
    %2606 = vmatprep.subr.bf16.mxu0 0
    %2607 = vmatpush1.bf16.msra.mxu0 0
    %2608 = vmatprep.subr.bf16.mxu0 0
    %2609 = vmatpush1.bf16.msra.mxu0 0
    %2610 = vmatprep.subr.bf16.mxu0 0
    %2611 = vmatpush1.bf16.msra.mxu0 0
    %2612 = vmatprep.subr.bf16.mxu0 0
    %2613 = vmatpush1.bf16.msra.mxu0 0
    %2614 = vmatprep.subr.bf16.mxu0 0
    %2615 = vmatpush1.bf16.msra.mxu0 0
    %2616 = vmatprep.subr.bf16.mxu0 0
    %2617 = vmatpush1.bf16.msra.mxu0 0
    %2618 = vmatprep.subr.bf16.mxu0 0
    %2619 = vmatpush1.bf16.msra.mxu0 0
    %2620 = vmatprep.subr.bf16.mxu0 0
    %2621 = vmatpush1.bf16.msra.mxu0 0
    %2622 = vmatprep.subr.bf16.mxu0 0
    %2623 = vmatpush1.bf16.msra.mxu0 0
    %2624 = vmatprep.mubr.bf16.mxu0 0
    %2625 = vmatmul.mubr.bf16.gmra.mrb[0].mxu0 %v2590
    %v2626 = vpop.f32.mrb[0].mxu0
    %v2627 = vadd.f32 0.0, %v2626
    %v2628 = vpop.f32.mrb[0].mxu0
    %v2629 = vpop.f32.mrb[0].mxu0
    %v2630 = vpop.f32.mrb[0].mxu0
    %2631 = vdwg.mxu0
    %v2632 = vadd.f32 %v2580, %v2627
    %v2633 = vpack.c.bf16 %v257, %v257
    %v2635 = vsel %vm283, %v2633, 0
    %2637 = vmatprep.subr.bf16.mxu0 0
    %2638 = vmatpush1.bf16.msra.mxu0 %v725
    %2639 = vmatprep.subr.bf16.mxu0 0
    %2640 = vmatpush1.bf16.msra.mxu0 0
    %2641 = vmatprep.subr.bf16.mxu0 0
    %2642 = vmatpush1.bf16.msra.mxu0 0
    %2643 = vmatprep.subr.bf16.mxu0 0
    %2644 = vmatpush1.bf16.msra.mxu0 0
    %2645 = vmatprep.subr.bf16.mxu0 0
    %2646 = vmatpush1.bf16.msra.mxu0 0
    %2647 = vmatprep.subr.bf16.mxu0 0
    %2648 = vmatpush1.bf16.msra.mxu0 0
    %2649 = vmatprep.subr.bf16.mxu0 0
    %2650 = vmatpush1.bf16.msra.mxu0 0
    %2651 = vmatprep.subr.bf16.mxu0 0
    %2652 = vmatpush1.bf16.msra.mxu0 0
    %2653 = vmatprep.subr.bf16.mxu0 0
    %2654 = vmatpush1.bf16.msra.mxu0 0
    %2655 = vmatprep.subr.bf16.mxu0 0
    %2656 = vmatpush1.bf16.msra.mxu0 0
    %2657 = vmatprep.subr.bf16.mxu0 0
    %2658 = vmatpush1.bf16.msra.mxu0 0
    %2659 = vmatprep.subr.bf16.mxu0 0
    %2660 = vmatpush1.bf16.msra.mxu0 0
    %2661 = vmatprep.subr.bf16.mxu0 0
    %2662 = vmatpush1.bf16.msra.mxu0 0
    %2663 = vmatprep.subr.bf16.mxu0 0
    %2664 = vmatpush1.bf16.msra.mxu0 0
    %2665 = vmatprep.subr.bf16.mxu0 0
    %2666 = vmatpush1.bf16.msra.mxu0 0
    %2667 = vmatprep.subr.bf16.mxu0 0
    %2668 = vmatpush1.bf16.msra.mxu0 0
    %2669 = vmatprep.mubr.bf16.mxu0 0
    %2670 = vmatmul.mubr.bf16.gmra.mrb[0].mxu0 %v2635
    %v2671 = vpop.f32.mrb[0].mxu0
    %v2672 = vadd.f32 0.0, %v2671
    %v2673 = vpop.f32.mrb[0].mxu0
    %v2674 = vpop.f32.mrb[0].mxu0
    %v2675 = vpop.f32.mrb[0].mxu0
    %2676 = vdwg.mxu0
    %v2677 = vadd.f32 %v2632, %v2672
    %v2678 = vadd.f32 %v2677, %v776
    %v2679 = vmax.f32 %v2678, 0.0
    %v2680 = vpack.c.bf16 %v2679, %v2679
    %v2681 = vld [vmem:[%s5 + $0x40] sm:$0xf]
    %v2682 = vld [vmem:[%s5 + $0x44] sm:$0xf]
    %v2683 = vld [vmem:[%s5 + $0x48] sm:$0xf]
    %v2684 = vld [vmem:[%s5 + $0x4c] sm:$0xf]
    %v2689 = vunpack.c.l.b16 %v2681
    %v2690 = vunpack.c.l.b16 %v2682
    %v2691 = vunpack.c.l.b16 %v2683
    %v2692 = vunpack.c.l.b16 %v2684
    %v2693 = vpack.c.b16 %v2690, %v2689
    %v2694 = vpack.c.b16 %v2692, %v2691
    %v2698 = vsel %vm1220, %v2680, 0
    %2700 = vmatprep.subr.bf16.mxu0 0
    %2701 = vmatpush1.bf16.msra.mxu0 %v2693
    %2702 = vmatprep.subr.bf16.mxu0 0
    %2703 = vmatpush1.bf16.msra.mxu0 %v2694
    %2704 = vmatprep.subr.bf16.mxu0 0
    %2705 = vmatpush1.bf16.msra.mxu0 0
    %2706 = vmatprep.subr.bf16.mxu0 0
    %2707 = vmatpush1.bf16.msra.mxu0 0
    %2708 = vmatprep.subr.bf16.mxu0 0
    %2709 = vmatpush1.bf16.msra.mxu0 0
    %2710 = vmatprep.subr.bf16.mxu0 0
    %2711 = vmatpush1.bf16.msra.mxu0 0
    %2712 = vmatprep.subr.bf16.mxu0 0
    %2713 = vmatpush1.bf16.msra.mxu0 0
    %2714 = vmatprep.subr.bf16.mxu0 0
    %2715 = vmatpush1.bf16.msra.mxu0 0
    %2716 = vmatprep.subr.bf16.mxu0 0
    %2717 = vmatpush1.bf16.msra.mxu0 0
    %2718 = vmatprep.subr.bf16.mxu0 0
    %2719 = vmatpush1.bf16.msra.mxu0 0
    %2720 = vmatprep.subr.bf16.mxu0 0
    %2721 = vmatpush1.bf16.msra.mxu0 0
    %2722 = vmatprep.subr.bf16.mxu0 0
    %2723 = vmatpush1.bf16.msra.mxu0 0
    %2724 = vmatprep.subr.bf16.mxu0 0
    %2725 = vmatpush1.bf16.msra.mxu0 0
    %2726 = vmatprep.subr.bf16.mxu0 0
    %2727 = vmatpush1.bf16.msra.mxu0 0
    %2728 = vmatprep.subr.bf16.mxu0 0
    %2729 = vmatpush1.bf16.msra.mxu0 0
    %2730 = vmatprep.subr.bf16.mxu0 0
    %2731 = vmatpush1.bf16.msra.mxu0 0
    %2732 = vmatprep.mubr.bf16.mxu0 0
    %2733 = vmatmul.mubr.bf16.gmra.mrb[0].mxu0 %v2698
    %v2734 = vpop.f32.mrb[0].mxu0
    %v2735 = vadd.f32 0.0, %v2734
    %v2736 = vpop.f32.mrb[0].mxu0
    %v2737 = vpop.f32.mrb[0].mxu0
    %v2738 = vpop.f32.mrb[0].mxu0
    %2739 = vdwg.mxu0
    %v2740 = vadd.f32 %v2281, %v2735
    %2741 = vmatprep.subr.bf16.mxu0 0
    %2742 = vmatpush1.bf16.msra.mxu0 %v281
    %2743 = vmatprep.subr.bf16.mxu0 0
    %2744 = vmatpush1.bf16.msra.mxu0 0
    %2745 = vmatprep.subr.bf16.mxu0 0
    %2746 = vmatpush1.bf16.msra.mxu0 0
    %2747 = vmatprep.subr.bf16.mxu0 0
    %2748 = vmatpush1.bf16.msra.mxu0 0
    %2749 = vmatprep.subr.bf16.mxu0 0
    %2750 = vmatpush1.bf16.msra.mxu0 0
    %2751 = vmatprep.subr.bf16.mxu0 0
    %2752 = vmatpush1.bf16.msra.mxu0 0
    %2753 = vmatprep.subr.bf16.mxu0 0
    %2754 = vmatpush1.bf16.msra.mxu0 0
    %2755 = vmatprep.subr.bf16.mxu0 0
    %2756 = vmatpush1.bf16.msra.mxu0 0
    %2757 = vmatprep.subr.bf16.mxu0 0
    %2758 = vmatpush1.bf16.msra.mxu0 0
    %2759 = vmatprep.subr.bf16.mxu0 0
    %2760 = vmatpush1.bf16.msra.mxu0 0
    %2761 = vmatprep.subr.bf16.mxu0 0
    %2762 = vmatpush1.bf16.msra.mxu0 0
    %2763 = vmatprep.subr.bf16.mxu0 0
    %2764 = vmatpush1.bf16.msra.mxu0 0
    %2765 = vmatprep.subr.bf16.mxu0 0
    %2766 = vmatpush1.bf16.msra.mxu0 0
    %2767 = vmatprep.subr.bf16.mxu0 0
    %2768 = vmatpush1.bf16.msra.mxu0 0
    %2769 = vmatprep.subr.bf16.mxu0 0
    %2770 = vmatpush1.bf16.msra.mxu0 0
    %2771 = vmatprep.subr.bf16.mxu0 0
    %2772 = vmatpush1.bf16.msra.mxu0 0
    %2773 = vmatprep.mubr.bf16.mxu0 0
    %2774 = vmatmul.mubr.bf16.gmra.mrb[0].mxu0 %v1647
    %v2775 = vpop.f32.mrb[0].mxu0
    %v2776 = vadd.f32 0.0, %v2775
    %v2777 = vpop.f32.mrb[0].mxu0
    %v2778 = vpop.f32.mrb[0].mxu0
    %v2779 = vpop.f32.mrb[0].mxu0
    %2780 = vdwg.mxu0
    %2781 = vmatprep.subr.bf16.mxu0 0
    %2782 = vmatpush1.bf16.msra.mxu0 %v331
    %2783 = vmatprep.subr.bf16.mxu0 0
    %2784 = vmatpush1.bf16.msra.mxu0 0
    %2785 = vmatprep.subr.bf16.mxu0 0
    %2786 = vmatpush1.bf16.msra.mxu0 0
    %2787 = vmatprep.subr.bf16.mxu0 0
    %2788 = vmatpush1.bf16.msra.mxu0 0
    %2789 = vmatprep.subr.bf16.mxu0 0
    %2790 = vmatpush1.bf16.msra.mxu0 0
    %2791 = vmatprep.subr.bf16.mxu0 0
    %2792 = vmatpush1.bf16.msra.mxu0 0
    %2793 = vmatprep.subr.bf16.mxu0 0
    %2794 = vmatpush1.bf16.msra.mxu0 0
    %2795 = vmatprep.subr.bf16.mxu0 0
    %2796 = vmatpush1.bf16.msra.mxu0 0
    %2797 = vmatprep.subr.bf16.mxu0 0
    %2798 = vmatpush1.bf16.msra.mxu0 0
    %2799 = vmatprep.subr.bf16.mxu0 0
    %2800 = vmatpush1.bf16.msra.mxu0 0
    %2801 = vmatprep.subr.bf16.mxu0 0
    %2802 = vmatpush1.bf16.msra.mxu0 0
    %2803 = vmatprep.subr.bf16.mxu0 0
    %2804 = vmatpush1.bf16.msra.mxu0 0
    %2805 = vmatprep.subr.bf16.mxu0 0
    %2806 = vmatpush1.bf16.msra.mxu0 0
    %2807 = vmatprep.subr.bf16.mxu0 0
    %2808 = vmatpush1.bf16.msra.mxu0 0
    %2809 = vmatprep.subr.bf16.mxu0 0
    %2810 = vmatpush1.bf16.msra.mxu0 0
    %2811 = vmatprep.subr.bf16.mxu0 0
    %2812 = vmatpush1.bf16.msra.mxu0 0
    %2813 = vmatprep.mubr.bf16.mxu0 0
    %2814 = vmatmul.mubr.bf16.gmra.mrb[0].mxu0 %v1158
    %v2815 = vpop.f32.mrb[0].mxu0
    %v2816 = vadd.f32 %v2776, %v2815
    %v2817 = vpop.f32.mrb[0].mxu0
    %v2818 = vpop.f32.mrb[0].mxu0
    %v2819 = vpop.f32.mrb[0].mxu0
    %2820 = vdwg.mxu0
    %2821 = vmatprep.subr.bf16.mxu0 0
    %2822 = vmatpush1.bf16.msra.mxu0 %v384
    %2823 = vmatprep.subr.bf16.mxu0 0
    %2824 = vmatpush1.bf16.msra.mxu0 0
    %2825 = vmatprep.subr.bf16.mxu0 0
    %2826 = vmatpush1.bf16.msra.mxu0 0
    %2827 = vmatprep.subr.bf16.mxu0 0
    %2828 = vmatpush1.bf16.msra.mxu0 0
    %2829 = vmatprep.subr.bf16.mxu0 0
    %2830 = vmatpush1.bf16.msra.mxu0 0
    %2831 = vmatprep.subr.bf16.mxu0 0
    %2832 = vmatpush1.bf16.msra.mxu0 0
    %2833 = vmatprep.subr.bf16.mxu0 0
    %2834 = vmatpush1.bf16.msra.mxu0 0
    %2835 = vmatprep.subr.bf16.mxu0 0
    %2836 = vmatpush1.bf16.msra.mxu0 0
    %2837 = vmatprep.subr.bf16.mxu0 0
    %2838 = vmatpush1.bf16.msra.mxu0 0
    %2839 = vmatprep.subr.bf16.mxu0 0
    %2840 = vmatpush1.bf16.msra.mxu0 0
    %2841 = vmatprep.subr.bf16.mxu0 0
    %2842 = vmatpush1.bf16.msra.mxu0 0
    %2843 = vmatprep.subr.bf16.mxu0 0
    %2844 = vmatpush1.bf16.msra.mxu0 0
    %2845 = vmatprep.subr.bf16.mxu0 0
    %2846 = vmatpush1.bf16.msra.mxu0 0
    %2847 = vmatprep.subr.bf16.mxu0 0
    %2848 = vmatpush1.bf16.msra.mxu0 0
    %2849 = vmatprep.subr.bf16.mxu0 0
    %2850 = vmatpush1.bf16.msra.mxu0 0
    %2851 = vmatprep.subr.bf16.mxu0 0
    %2852 = vmatpush1.bf16.msra.mxu0 0
    %2853 = vmatprep.mubr.bf16.mxu0 0
    %2854 = vmatmul.mubr.bf16.gmra.mrb[0].mxu0 %v1693
    %v2855 = vpop.f32.mrb[0].mxu0
    %v2856 = vadd.f32 0.0, %v2855
    %v2857 = vpop.f32.mrb[0].mxu0
    %v2858 = vpop.f32.mrb[0].mxu0
    %v2859 = vpop.f32.mrb[0].mxu0
    %2860 = vdwg.mxu0
    %v2861 = vadd.f32 %v2816, %v2856
    %2862 = vmatprep.subr.bf16.mxu0 0
    %2863 = vmatpush1.bf16.msra.mxu0 %v445
    %2864 = vmatprep.subr.bf16.mxu0 0
    %2865 = vmatpush1.bf16.msra.mxu0 0
    %2866 = vmatprep.subr.bf16.mxu0 0
    %2867 = vmatpush1.bf16.msra.mxu0 0
    %2868 = vmatprep.subr.bf16.mxu0 0
    %2869 = vmatpush1.bf16.msra.mxu0 0
    %2870 = vmatprep.subr.bf16.mxu0 0
    %2871 = vmatpush1.bf16.msra.mxu0 0
    %2872 = vmatprep.subr.bf16.mxu0 0
    %2873 = vmatpush1.bf16.msra.mxu0 0
    %2874 = vmatprep.subr.bf16.mxu0 0
    %2875 = vmatpush1.bf16.msra.mxu0 0
    %2876 = vmatprep.subr.bf16.mxu0 0
    %2877 = vmatpush1.bf16.msra.mxu0 0
    %2878 = vmatprep.subr.bf16.mxu0 0
    %2879 = vmatpush1.bf16.msra.mxu0 0
    %2880 = vmatprep.subr.bf16.mxu0 0
    %2881 = vmatpush1.bf16.msra.mxu0 0
    %2882 = vmatprep.subr.bf16.mxu0 0
    %2883 = vmatpush1.bf16.msra.mxu0 0
    %2884 = vmatprep.subr.bf16.mxu0 0
    %2885 = vmatpush1.bf16.msra.mxu0 0
    %2886 = vmatprep.subr.bf16.mxu0 0
    %2887 = vmatpush1.bf16.msra.mxu0 0
    %2888 = vmatprep.subr.bf16.mxu0 0
    %2889 = vmatpush1.bf16.msra.mxu0 0
    %2890 = vmatprep.subr.bf16.mxu0 0
    %2891 = vmatpush1.bf16.msra.mxu0 0
    %2892 = vmatprep.subr.bf16.mxu0 0
    %2893 = vmatpush1.bf16.msra.mxu0 0
    %2894 = vmatprep.mubr.bf16.mxu0 0
    %2895 = vmatmul.mubr.bf16.gmra.mrb[0].mxu0 %v2497
    %v2896 = vpop.f32.mrb[0].mxu0
    %v2897 = vadd.f32 0.0, %v2896
    %v2898 = vpop.f32.mrb[0].mxu0
    %v2899 = vpop.f32.mrb[0].mxu0
    %v2900 = vpop.f32.mrb[0].mxu0
    %2901 = vdwg.mxu0
    %v2902 = vadd.f32 %v2861, %v2897
    %v2903 = vpack.c.bf16 %v255, %v254
    %v2905 = vrot.slane %v2903, 3
    %v2907 = vsel %vm283, %v2905, 0
    %2909 = vmatprep.subr.bf16.mxu0 0
    %2910 = vmatpush1.bf16.msra.mxu0 %v498
    %2911 = vmatprep.subr.bf16.mxu0 0
    %2912 = vmatpush1.bf16.msra.mxu0 0
    %2913 = vmatprep.subr.bf16.mxu0 0
    %2914 = vmatpush1.bf16.msra.mxu0 0
    %2915 = vmatprep.subr.bf16.mxu0 0
    %2916 = vmatpush1.bf16.msra.mxu0 0
    %2917 = vmatprep.subr.bf16.mxu0 0
    %2918 = vmatpush1.bf16.msra.mxu0 0
    %2919 = vmatprep.subr.bf16.mxu0 0
    %2920 = vmatpush1.bf16.msra.mxu0 0
    %2921 = vmatprep.subr.bf16.mxu0 0
    %2922 = vmatpush1.bf16.msra.mxu0 0
    %2923 = vmatprep.subr.bf16.mxu0 0
    %2924 = vmatpush1.bf16.msra.mxu0 0
    %2925 = vmatprep.subr.bf16.mxu0 0
    %2926 = vmatpush1.bf16.msra.mxu0 0
    %2927 = vmatprep.subr.bf16.mxu0 0
    %2928 = vmatpush1.bf16.msra.mxu0 0
    %2929 = vmatprep.subr.bf16.mxu0 0
    %2930 = vmatpush1.bf16.msra.mxu0 0
    %2931 = vmatprep.subr.bf16.mxu0 0
    %2932 = vmatpush1.bf16.msra.mxu0 0
    %2933 = vmatprep.subr.bf16.mxu0 0
    %2934 = vmatpush1.bf16.msra.mxu0 0
    %2935 = vmatprep.subr.bf16.mxu0 0
    %2936 = vmatpush1.bf16.msra.mxu0 0
    %2937 = vmatprep.subr.bf16.mxu0 0
    %2938 = vmatpush1.bf16.msra.mxu0 0
    %2939 = vmatprep.subr.bf16.mxu0 0
    %2940 = vmatpush1.bf16.msra.mxu0 0
    %2941 = vmatprep.mubr.bf16.mxu0 0
    %2942 = vmatmul.mubr.bf16.gmra.mrb[0].mxu0 %v2907
    %v2943 = vpop.f32.mrb[0].mxu0
    %v2944 = vadd.f32 0.0, %v2943
    %v2945 = vpop.f32.mrb[0].mxu0
    %v2946 = vpop.f32.mrb[0].mxu0
    %v2947 = vpop.f32.mrb[0].mxu0
    %2948 = vdwg.mxu0
    %v2949 = vadd.f32 %v2902, %v2944
    %v2951 = vshrl.u32 %v2072, 16
    %v2953 = vshll.u32 %v2072, 16
    %v2955 = vrot.slane %v2953, 1
    %v2956 = vor.u32 %v2951, %v2955
    %v2958 = vsel %vm283, %v2956, 0
    %2960 = vmatprep.subr.bf16.mxu0 0
    %2961 = vmatpush1.bf16.msra.mxu0 %v557
    %2962 = vmatprep.subr.bf16.mxu0 0
    %2963 = vmatpush1.bf16.msra.mxu0 0
    %2964 = vmatprep.subr.bf16.mxu0 0
    %2965 = vmatpush1.bf16.msra.mxu0 0
    %2966 = vmatprep.subr.bf16.mxu0 0
    %2967 = vmatpush1.bf16.msra.mxu0 0
    %2968 = vmatprep.subr.bf16.mxu0 0
    %2969 = vmatpush1.bf16.msra.mxu0 0
    %2970 = vmatprep.subr.bf16.mxu0 0
    %2971 = vmatpush1.bf16.msra.mxu0 0
    %2972 = vmatprep.subr.bf16.mxu0 0
    %2973 = vmatpush1.bf16.msra.mxu0 0
    %2974 = vmatprep.subr.bf16.mxu0 0
    %2975 = vmatpush1.bf16.msra.mxu0 0
    %2976 = vmatprep.subr.bf16.mxu0 0
    %2977 = vmatpush1.bf16.msra.mxu0 0
    %2978 = vmatprep.subr.bf16.mxu0 0
    %2979 = vmatpush1.bf16.msra.mxu0 0
    %2980 = vmatprep.subr.bf16.mxu0 0
    %2981 = vmatpush1.bf16.msra.mxu0 0
    %2982 = vmatprep.subr.bf16.mxu0 0
    %2983 = vmatpush1.bf16.msra.mxu0 0
    %2984 = vmatprep.subr.bf16.mxu0 0
    %2985 = vmatpush1.bf16.msra.mxu0 0
    %2986 = vmatprep.subr.bf16.mxu0 0
    %2987 = vmatpush1.bf16.msra.mxu0 0
    %2988 = vmatprep.subr.bf16.mxu0 0
    %2989 = vmatpush1.bf16.msra.mxu0 0
    %2990 = vmatprep.subr.bf16.mxu0 0
    %2991 = vmatpush1.bf16.msra.mxu0 0
    %2992 = vmatprep.mubr.bf16.mxu0 0
    %2993 = vmatmul.mubr.bf16.gmra.mrb[0].mxu0 %v2958
    %v2994 = vpop.f32.mrb[0].mxu0
    %v2995 = vadd.f32 0.0, %v2994
    %v2996 = vpop.f32.mrb[0].mxu0
    %v2997 = vpop.f32.mrb[0].mxu0
    %v2998 = vpop.f32.mrb[0].mxu0
    %2999 = vdwg.mxu0
    %v3000 = vadd.f32 %v2949, %v2995
    %3001 = vmatprep.subr.bf16.mxu0 0
    %3002 = vmatpush1.bf16.msra.mxu0 %v612
    %3003 = vmatprep.subr.bf16.mxu0 0
    %3004 = vmatpush1.bf16.msra.mxu0 0
    %3005 = vmatprep.subr.bf16.mxu0 0
    %3006 = vmatpush1.bf16.msra.mxu0 0
    %3007 = vmatprep.subr.bf16.mxu0 0
    %3008 = vmatpush1.bf16.msra.mxu0 0
    %3009 = vmatprep.subr.bf16.mxu0 0
    %3010 = vmatpush1.bf16.msra.mxu0 0
    %3011 = vmatprep.subr.bf16.mxu0 0
    %3012 = vmatpush1.bf16.msra.mxu0 0
    %3013 = vmatprep.subr.bf16.mxu0 0
    %3014 = vmatpush1.bf16.msra.mxu0 0
    %3015 = vmatprep.subr.bf16.mxu0 0
    %3016 = vmatpush1.bf16.msra.mxu0 0
    %3017 = vmatprep.subr.bf16.mxu0 0
    %3018 = vmatpush1.bf16.msra.mxu0 0
    %3019 = vmatprep.subr.bf16.mxu0 0
    %3020 = vmatpush1.bf16.msra.mxu0 0
    %3021 = vmatprep.subr.bf16.mxu0 0
    %3022 = vmatpush1.bf16.msra.mxu0 0
    %3023 = vmatprep.subr.bf16.mxu0 0
    %3024 = vmatpush1.bf16.msra.mxu0 0
    %3025 = vmatprep.subr.bf16.mxu0 0
    %3026 = vmatpush1.bf16.msra.mxu0 0
    %3027 = vmatprep.subr.bf16.mxu0 0
    %3028 = vmatpush1.bf16.msra.mxu0 0
    %3029 = vmatprep.subr.bf16.mxu0 0
    %3030 = vmatpush1.bf16.msra.mxu0 0
    %3031 = vmatprep.subr.bf16.mxu0 0
    %3032 = vmatpush1.bf16.msra.mxu0 0
    %3033 = vmatprep.mubr.bf16.mxu0 0
    %3034 = vmatmul.mubr.bf16.gmra.mrb[0].mxu0 %v2635
    %v3035 = vpop.f32.mrb[0].mxu0
    %v3036 = vadd.f32 0.0, %v3035
    %v3037 = vpop.f32.mrb[0].mxu0
    %v3038 = vpop.f32.mrb[0].mxu0
    %v3039 = vpop.f32.mrb[0].mxu0
    %3040 = vdwg.mxu0
    %v3041 = vadd.f32 %v3000, %v3036
    %v3042 = vshrl.u32 %v2633, 16
    %v3044 = vrot.slane %v3042, 1
    %v3045 = vshll.u32 %v2633, 16
    %v3047 = vrot.slane %v3045, 2
    %v3048 = vor.u32 %v3044, %v3047
    %v3050 = vsel %vm283, %v3048, 0
    %3052 = vmatprep.subr.bf16.mxu0 0
    %3053 = vmatpush1.bf16.msra.mxu0 %v672
    %3054 = vmatprep.subr.bf16.mxu0 0
    %3055 = vmatpush1.bf16.msra.mxu0 0
    %3056 = vmatprep.subr.bf16.mxu0 0
    %3057 = vmatpush1.bf16.msra.mxu0 0
    %3058 = vmatprep.subr.bf16.mxu0 0
    %3059 = vmatpush1.bf16.msra.mxu0 0
    %3060 = vmatprep.subr.bf16.mxu0 0
    %3061 = vmatpush1.bf16.msra.mxu0 0
    %3062 = vmatprep.subr.bf16.mxu0 0
    %3063 = vmatpush1.bf16.msra.mxu0 0
    %3064 = vmatprep.subr.bf16.mxu0 0
    %3065 = vmatpush1.bf16.msra.mxu0 0
    %3066 = vmatprep.subr.bf16.mxu0 0
    %3067 = vmatpush1.bf16.msra.mxu0 0
    %3068 = vmatprep.subr.bf16.mxu0 0
    %3069 = vmatpush1.bf16.msra.mxu0 0
    %3070 = vmatprep.subr.bf16.mxu0 0
    %3071 = vmatpush1.bf16.msra.mxu0 0
    %3072 = vmatprep.subr.bf16.mxu0 0
    %3073 = vmatpush1.bf16.msra.mxu0 0
    %3074 = vmatprep.subr.bf16.mxu0 0
    %3075 = vmatpush1.bf16.msra.mxu0 0
    %3076 = vmatprep.subr.bf16.mxu0 0
    %3077 = vmatpush1.bf16.msra.mxu0 0
    %3078 = vmatprep.subr.bf16.mxu0 0
    %3079 = vmatpush1.bf16.msra.mxu0 0
    %3080 = vmatprep.subr.bf16.mxu0 0
    %3081 = vmatpush1.bf16.msra.mxu0 0
    %3082 = vmatprep.subr.bf16.mxu0 0
    %3083 = vmatpush1.bf16.msra.mxu0 0
    %3084 = vmatprep.mubr.bf16.mxu0 0
    %3085 = vmatmul.mubr.bf16.gmra.mrb[0].mxu0 %v3050
    %v3086 = vpop.f32.mrb[0].mxu0
    %v3087 = vadd.f32 0.0, %v3086
    %v3088 = vpop.f32.mrb[0].mxu0
    %v3089 = vpop.f32.mrb[0].mxu0
    %v3090 = vpop.f32.mrb[0].mxu0
    %3091 = vdwg.mxu0
    %v3092 = vadd.f32 %v3041, %v3087
    %v3093 = vpack.c.bf16 %v258, %v257
    %v3095 = vrot.slane %v3093, 3
    %v3097 = vsel %vm283, %v3095, 0
    %3099 = vmatprep.subr.bf16.mxu0 0
    %3100 = vmatpush1.bf16.msra.mxu0 %v725
    %3101 = vmatprep.subr.bf16.mxu0 0
    %3102 = vmatpush1.bf16.msra.mxu0 0
    %3103 = vmatprep.subr.bf16.mxu0 0
    %3104 = vmatpush1.bf16.msra.mxu0 0
    %3105 = vmatprep.subr.bf16.mxu0 0
    %3106 = vmatpush1.bf16.msra.mxu0 0
    %3107 = vmatprep.subr.bf16.mxu0 0
    %3108 = vmatpush1.bf16.msra.mxu0 0
    %3109 = vmatprep.subr.bf16.mxu0 0
    %3110 = vmatpush1.bf16.msra.mxu0 0
    %3111 = vmatprep.subr.bf16.mxu0 0
    %3112 = vmatpush1.bf16.msra.mxu0 0
    %3113 = vmatprep.subr.bf16.mxu0 0
    %3114 = vmatpush1.bf16.msra.mxu0 0
    %3115 = vmatprep.subr.bf16.mxu0 0
    %3116 = vmatpush1.bf16.msra.mxu0 0
    %3117 = vmatprep.subr.bf16.mxu0 0
    %3118 = vmatpush1.bf16.msra.mxu0 0
    %3119 = vmatprep.subr.bf16.mxu0 0
    %3120 = vmatpush1.bf16.msra.mxu0 0
    %3121 = vmatprep.subr.bf16.mxu0 0
    %3122 = vmatpush1.bf16.msra.mxu0 0
    %3123 = vmatprep.subr.bf16.mxu0 0
    %3124 = vmatpush1.bf16.msra.mxu0 0
    %3125 = vmatprep.subr.bf16.mxu0 0
    %3126 = vmatpush1.bf16.msra.mxu0 0
    %3127 = vmatprep.subr.bf16.mxu0 0
    %3128 = vmatpush1.bf16.msra.mxu0 0
    %3129 = vmatprep.subr.bf16.mxu0 0
    %3130 = vmatpush1.bf16.msra.mxu0 0
    %3131 = vmatprep.mubr.bf16.mxu0 0
    %3132 = vmatmul.mubr.bf16.gmra.mrb[0].mxu0 %v3097
    %v3133 = vpop.f32.mrb[0].mxu0
    %v3134 = vadd.f32 0.0, %v3133
    %v3135 = vpop.f32.mrb[0].mxu0
    %v3136 = vpop.f32.mrb[0].mxu0
    %v3137 = vpop.f32.mrb[0].mxu0
    %3138 = vdwg.mxu0
    %v3139 = vadd.f32 %v3092, %v3134
    %v3140 = vadd.f32 %v3139, %v776
    %v3141 = vmax.f32 %v3140, 0.0
    %v3142 = vpack.c.bf16 %v3141, %v3141
    %v3143 = vld [vmem:[%s5 + $0x50] sm:$0xf]
    %v3144 = vld [vmem:[%s5 + $0x54] sm:$0xf]
    %v3145 = vld [vmem:[%s5 + $0x58] sm:$0xf]
    %v3146 = vld [vmem:[%s5 + $0x5c] sm:$0xf]
    %v3151 = vunpack.c.l.b16 %v3143
    %v3152 = vunpack.c.l.b16 %v3144
    %v3153 = vunpack.c.l.b16 %v3145
    %v3154 = vunpack.c.l.b16 %v3146
    %v3155 = vpack.c.b16 %v3152, %v3151
    %v3156 = vpack.c.b16 %v3154, %v3153
    %v3160 = vsel %vm1220, %v3142, 0
    %3162 = vmatprep.subr.bf16.mxu0 0
    %3163 = vmatpush1.bf16.msra.mxu0 %v3155
    %3164 = vmatprep.subr.bf16.mxu0 0
    %3165 = vmatpush1.bf16.msra.mxu0 %v3156
    %3166 = vmatprep.subr.bf16.mxu0 0
    %3167 = vmatpush1.bf16.msra.mxu0 0
    %3168 = vmatprep.subr.bf16.mxu0 0
    %3169 = vmatpush1.bf16.msra.mxu0 0
    %3170 = vmatprep.subr.bf16.mxu0 0
    %3171 = vmatpush1.bf16.msra.mxu0 0
    %3172 = vmatprep.subr.bf16.mxu0 0
    %3173 = vmatpush1.bf16.msra.mxu0 0
    %3174 = vmatprep.subr.bf16.mxu0 0
    %3175 = vmatpush1.bf16.msra.mxu0 0
    %3176 = vmatprep.subr.bf16.mxu0 0
    %3177 = vmatpush1.bf16.msra.mxu0 0
    %3178 = vmatprep.subr.bf16.mxu0 0
    %3179 = vmatpush1.bf16.msra.mxu0 0
    %3180 = vmatprep.subr.bf16.mxu0 0
    %3181 = vmatpush1.bf16.msra.mxu0 0
    %3182 = vmatprep.subr.bf16.mxu0 0
    %3183 = vmatpush1.bf16.msra.mxu0 0
    %3184 = vmatprep.subr.bf16.mxu0 0
    %3185 = vmatpush1.bf16.msra.mxu0 0
    %3186 = vmatprep.subr.bf16.mxu0 0
    %3187 = vmatpush1.bf16.msra.mxu0 0
    %3188 = vmatprep.subr.bf16.mxu0 0
    %3189 = vmatpush1.bf16.msra.mxu0 0
    %3190 = vmatprep.subr.bf16.mxu0 0
    %3191 = vmatpush1.bf16.msra.mxu0 0
    %3192 = vmatprep.subr.bf16.mxu0 0
    %3193 = vmatpush1.bf16.msra.mxu0 0
    %3194 = vmatprep.mubr.bf16.mxu0 0
    %3195 = vmatmul.mubr.bf16.gmra.mrb[0].mxu0 %v3160
    %v3196 = vpop.f32.mrb[0].mxu0
    %v3197 = vadd.f32 0.0, %v3196
    %v3198 = vpop.f32.mrb[0].mxu0
    %v3199 = vpop.f32.mrb[0].mxu0
    %v3200 = vpop.f32.mrb[0].mxu0
    %3201 = vdwg.mxu0
    %v3202 = vadd.f32 %v2740, %v3197
    %3203 = vmatprep.subr.bf16.mxu0 0
    %3204 = vmatpush1.bf16.msra.mxu0 %v281
    %3205 = vmatprep.subr.bf16.mxu0 0
    %3206 = vmatpush1.bf16.msra.mxu0 0
    %3207 = vmatprep.subr.bf16.mxu0 0
    %3208 = vmatpush1.bf16.msra.mxu0 0
    %3209 = vmatprep.subr.bf16.mxu0 0
    %3210 = vmatpush1.bf16.msra.mxu0 0
    %3211 = vmatprep.subr.bf16.mxu0 0
    %3212 = vmatpush1.bf16.msra.mxu0 0
    %3213 = vmatprep.subr.bf16.mxu0 0
    %3214 = vmatpush1.bf16.msra.mxu0 0
    %3215 = vmatprep.subr.bf16.mxu0 0
    %3216 = vmatpush1.bf16.msra.mxu0 0
    %3217 = vmatprep.subr.bf16.mxu0 0
    %3218 = vmatpush1.bf16.msra.mxu0 0
    %3219 = vmatprep.subr.bf16.mxu0 0
    %3220 = vmatpush1.bf16.msra.mxu0 0
    %3221 = vmatprep.subr.bf16.mxu0 0
    %3222 = vmatpush1.bf16.msra.mxu0 0
    %3223 = vmatprep.subr.bf16.mxu0 0
    %3224 = vmatpush1.bf16.msra.mxu0 0
    %3225 = vmatprep.subr.bf16.mxu0 0
    %3226 = vmatpush1.bf16.msra.mxu0 0
    %3227 = vmatprep.subr.bf16.mxu0 0
    %3228 = vmatpush1.bf16.msra.mxu0 0
    %3229 = vmatprep.subr.bf16.mxu0 0
    %3230 = vmatpush1.bf16.msra.mxu0 0
    %3231 = vmatprep.subr.bf16.mxu0 0
    %3232 = vmatpush1.bf16.msra.mxu0 0
    %3233 = vmatprep.subr.bf16.mxu0 0
    %3234 = vmatpush1.bf16.msra.mxu0 0
    %3235 = vmatprep.mubr.bf16.mxu0 0
    %3236 = vmatmul.mubr.bf16.gmra.mrb[0].mxu0 %v2129
    %v3237 = vpop.f32.mrb[0].mxu0
    %v3238 = vadd.f32 0.0, %v3237
    %v3239 = vpop.f32.mrb[0].mxu0
    %v3240 = vpop.f32.mrb[0].mxu0
    %v3241 = vpop.f32.mrb[0].mxu0
    %3242 = vdwg.mxu0
    %3243 = vmatprep.subr.bf16.mxu0 0
    %3244 = vmatpush1.bf16.msra.mxu0 %v331
    %3245 = vmatprep.subr.bf16.mxu0 0
    %3246 = vmatpush1.bf16.msra.mxu0 0
    %3247 = vmatprep.subr.bf16.mxu0 0
    %3248 = vmatpush1.bf16.msra.mxu0 0
    %3249 = vmatprep.subr.bf16.mxu0 0
    %3250 = vmatpush1.bf16.msra.mxu0 0
    %3251 = vmatprep.subr.bf16.mxu0 0
    %3252 = vmatpush1.bf16.msra.mxu0 0
    %3253 = vmatprep.subr.bf16.mxu0 0
    %3254 = vmatpush1.bf16.msra.mxu0 0
    %3255 = vmatprep.subr.bf16.mxu0 0
    %3256 = vmatpush1.bf16.msra.mxu0 0
    %3257 = vmatprep.subr.bf16.mxu0 0
    %3258 = vmatpush1.bf16.msra.mxu0 0
    %3259 = vmatprep.subr.bf16.mxu0 0
    %3260 = vmatpush1.bf16.msra.mxu0 0
    %3261 = vmatprep.subr.bf16.mxu0 0
    %3262 = vmatpush1.bf16.msra.mxu0 0
    %3263 = vmatprep.subr.bf16.mxu0 0
    %3264 = vmatpush1.bf16.msra.mxu0 0
    %3265 = vmatprep.subr.bf16.mxu0 0
    %3266 = vmatpush1.bf16.msra.mxu0 0
    %3267 = vmatprep.subr.bf16.mxu0 0
    %3268 = vmatpush1.bf16.msra.mxu0 0
    %3269 = vmatprep.subr.bf16.mxu0 0
    %3270 = vmatpush1.bf16.msra.mxu0 0
    %3271 = vmatprep.subr.bf16.mxu0 0
    %3272 = vmatpush1.bf16.msra.mxu0 0
    %3273 = vmatprep.subr.bf16.mxu0 0
    %3274 = vmatpush1.bf16.msra.mxu0 0
    %3275 = vmatprep.mubr.bf16.mxu0 0
    %3276 = vmatmul.mubr.bf16.gmra.mrb[0].mxu0 %v2076
    %v3277 = vpop.f32.mrb[0].mxu0
    %v3278 = vadd.f32 %v3238, %v3277
    %v3279 = vpop.f32.mrb[0].mxu0
    %v3280 = vpop.f32.mrb[0].mxu0
    %v3281 = vpop.f32.mrb[0].mxu0
    %3282 = vdwg.mxu0
    %3283 = vmatprep.subr.bf16.mxu0 0
    %3284 = vmatpush1.bf16.msra.mxu0 %v384
    %3285 = vmatprep.subr.bf16.mxu0 0
    %3286 = vmatpush1.bf16.msra.mxu0 0
    %3287 = vmatprep.subr.bf16.mxu0 0
    %3288 = vmatpush1.bf16.msra.mxu0 0
    %3289 = vmatprep.subr.bf16.mxu0 0
    %3290 = vmatpush1.bf16.msra.mxu0 0
    %3291 = vmatprep.subr.bf16.mxu0 0
    %3292 = vmatpush1.bf16.msra.mxu0 0
    %3293 = vmatprep.subr.bf16.mxu0 0
    %3294 = vmatpush1.bf16.msra.mxu0 0
    %3295 = vmatprep.subr.bf16.mxu0 0
    %3296 = vmatpush1.bf16.msra.mxu0 0
    %3297 = vmatprep.subr.bf16.mxu0 0
    %3298 = vmatpush1.bf16.msra.mxu0 0
    %3299 = vmatprep.subr.bf16.mxu0 0
    %3300 = vmatpush1.bf16.msra.mxu0 0
    %3301 = vmatprep.subr.bf16.mxu0 0
    %3302 = vmatpush1.bf16.msra.mxu0 0
    %3303 = vmatprep.subr.bf16.mxu0 0
    %3304 = vmatpush1.bf16.msra.mxu0 0
    %3305 = vmatprep.subr.bf16.mxu0 0
    %3306 = vmatpush1.bf16.msra.mxu0 0
    %3307 = vmatprep.subr.bf16.mxu0 0
    %3308 = vmatpush1.bf16.msra.mxu0 0
    %3309 = vmatprep.subr.bf16.mxu0 0
    %3310 = vmatpush1.bf16.msra.mxu0 0
    %3311 = vmatprep.subr.bf16.mxu0 0
    %3312 = vmatpush1.bf16.msra.mxu0 0
    %3313 = vmatprep.subr.bf16.mxu0 0
    %3314 = vmatpush1.bf16.msra.mxu0 0
    %3315 = vmatprep.mubr.bf16.mxu0 0
    %3316 = vmatmul.mubr.bf16.gmra.mrb[0].mxu0 %v2176
    %v3317 = vpop.f32.mrb[0].mxu0
    %v3318 = vadd.f32 0.0, %v3317
    %v3319 = vpop.f32.mrb[0].mxu0
    %v3320 = vpop.f32.mrb[0].mxu0
    %v3321 = vpop.f32.mrb[0].mxu0
    %3322 = vdwg.mxu0
    %v3323 = vadd.f32 %v3278, %v3318
    %v3324 = vpack.c.bf16 %v258, %v258
    %v3326 = vshrl.u32 %v3324, 16
    %v3328 = vshll.u32 %v3324, 16
    %v3330 = vrot.slane %v3328, 1
    %v3331 = vor.u32 %v3326, %v3330
    %v3333 = vsel %vm283, %v3331, 0
    %3335 = vmatprep.subr.bf16.mxu0 0
    %3336 = vmatpush1.bf16.msra.mxu0 %v445
    %3337 = vmatprep.subr.bf16.mxu0 0
    %3338 = vmatpush1.bf16.msra.mxu0 0
    %3339 = vmatprep.subr.bf16.mxu0 0
    %3340 = vmatpush1.bf16.msra.mxu0 0
    %3341 = vmatprep.subr.bf16.mxu0 0
    %3342 = vmatpush1.bf16.msra.mxu0 0
    %3343 = vmatprep.subr.bf16.mxu0 0
    %3344 = vmatpush1.bf16.msra.mxu0 0
    %3345 = vmatprep.subr.bf16.mxu0 0
    %3346 = vmatpush1.bf16.msra.mxu0 0
    %3347 = vmatprep.subr.bf16.mxu0 0
    %3348 = vmatpush1.bf16.msra.mxu0 0
    %3349 = vmatprep.subr.bf16.mxu0 0
    %3350 = vmatpush1.bf16.msra.mxu0 0
    %3351 = vmatprep.subr.bf16.mxu0 0
    %3352 = vmatpush1.bf16.msra.mxu0 0
    %3353 = vmatprep.subr.bf16.mxu0 0
    %3354 = vmatpush1.bf16.msra.mxu0 0
    %3355 = vmatprep.subr.bf16.mxu0 0
    %3356 = vmatpush1.bf16.msra.mxu0 0
    %3357 = vmatprep.subr.bf16.mxu0 0
    %3358 = vmatpush1.bf16.msra.mxu0 0
    %3359 = vmatprep.subr.bf16.mxu0 0
    %3360 = vmatpush1.bf16.msra.mxu0 0
    %3361 = vmatprep.subr.bf16.mxu0 0
    %3362 = vmatpush1.bf16.msra.mxu0 0
    %3363 = vmatprep.subr.bf16.mxu0 0
    %3364 = vmatpush1.bf16.msra.mxu0 0
    %3365 = vmatprep.subr.bf16.mxu0 0
    %3366 = vmatpush1.bf16.msra.mxu0 0
    %3367 = vmatprep.mubr.bf16.mxu0 0
    %3368 = vmatmul.mubr.bf16.gmra.mrb[0].mxu0 %v3333
    %v3369 = vpop.f32.mrb[0].mxu0
    %v3370 = vadd.f32 0.0, %v3369
    %v3371 = vpop.f32.mrb[0].mxu0
    %v3372 = vpop.f32.mrb[0].mxu0
    %v3373 = vpop.f32.mrb[0].mxu0
    %3374 = vdwg.mxu0
    %v3375 = vadd.f32 %v3323, %v3370
    %v3377 = vrot.slane %v3324, 2
    %v3379 = vsel %vm283, %v3377, 0
    %3381 = vmatprep.subr.bf16.mxu0 0
    %3382 = vmatpush1.bf16.msra.mxu0 %v498
    %3383 = vmatprep.subr.bf16.mxu0 0
    %3384 = vmatpush1.bf16.msra.mxu0 0
    %3385 = vmatprep.subr.bf16.mxu0 0
    %3386 = vmatpush1.bf16.msra.mxu0 0
    %3387 = vmatprep.subr.bf16.mxu0 0
    %3388 = vmatpush1.bf16.msra.mxu0 0
    %3389 = vmatprep.subr.bf16.mxu0 0
    %3390 = vmatpush1.bf16.msra.mxu0 0
    %3391 = vmatprep.subr.bf16.mxu0 0
    %3392 = vmatpush1.bf16.msra.mxu0 0
    %3393 = vmatprep.subr.bf16.mxu0 0
    %3394 = vmatpush1.bf16.msra.mxu0 0
    %3395 = vmatprep.subr.bf16.mxu0 0
    %3396 = vmatpush1.bf16.msra.mxu0 0
    %3397 = vmatprep.subr.bf16.mxu0 0
    %3398 = vmatpush1.bf16.msra.mxu0 0
    %3399 = vmatprep.subr.bf16.mxu0 0
    %3400 = vmatpush1.bf16.msra.mxu0 0
    %3401 = vmatprep.subr.bf16.mxu0 0
    %3402 = vmatpush1.bf16.msra.mxu0 0
    %3403 = vmatprep.subr.bf16.mxu0 0
    %3404 = vmatpush1.bf16.msra.mxu0 0
    %3405 = vmatprep.subr.bf16.mxu0 0
    %3406 = vmatpush1.bf16.msra.mxu0 0
    %3407 = vmatprep.subr.bf16.mxu0 0
    %3408 = vmatpush1.bf16.msra.mxu0 0
    %3409 = vmatprep.subr.bf16.mxu0 0
    %3410 = vmatpush1.bf16.msra.mxu0 0
    %3411 = vmatprep.subr.bf16.mxu0 0
    %3412 = vmatpush1.bf16.msra.mxu0 0
    %3413 = vmatprep.mubr.bf16.mxu0 0
    %3414 = vmatmul.mubr.bf16.gmra.mrb[0].mxu0 %v3379
    %v3415 = vpop.f32.mrb[0].mxu0
    %v3416 = vadd.f32 0.0, %v3415
    %v3417 = vpop.f32.mrb[0].mxu0
    %v3418 = vpop.f32.mrb[0].mxu0
    %v3419 = vpop.f32.mrb[0].mxu0
    %3420 = vdwg.mxu0
    %v3421 = vadd.f32 %v3375, %v3416
    %v3422 = vpack.c.bf16 %v259, %v258
    %v3424 = vshrl.u32 %v3422, 16
    %v3426 = vrot.slane %v3424, 3
    %v3427 = vshll.u32 %v3422, 16
    %v3429 = vrot.slane %v3427, 4
    %v3430 = vor.u32 %v3426, %v3429
    %v3432 = vsel %vm283, %v3430, 0
    %3434 = vmatprep.subr.bf16.mxu0 0
    %3435 = vmatpush1.bf16.msra.mxu0 %v557
    %3436 = vmatprep.subr.bf16.mxu0 0
    %3437 = vmatpush1.bf16.msra.mxu0 0
    %3438 = vmatprep.subr.bf16.mxu0 0
    %3439 = vmatpush1.bf16.msra.mxu0 0
    %3440 = vmatprep.subr.bf16.mxu0 0
    %3441 = vmatpush1.bf16.msra.mxu0 0
    %3442 = vmatprep.subr.bf16.mxu0 0
    %3443 = vmatpush1.bf16.msra.mxu0 0
    %3444 = vmatprep.subr.bf16.mxu0 0
    %3445 = vmatpush1.bf16.msra.mxu0 0
    %3446 = vmatprep.subr.bf16.mxu0 0
    %3447 = vmatpush1.bf16.msra.mxu0 0
    %3448 = vmatprep.subr.bf16.mxu0 0
    %3449 = vmatpush1.bf16.msra.mxu0 0
    %3450 = vmatprep.subr.bf16.mxu0 0
    %3451 = vmatpush1.bf16.msra.mxu0 0
    %3452 = vmatprep.subr.bf16.mxu0 0
    %3453 = vmatpush1.bf16.msra.mxu0 0
    %3454 = vmatprep.subr.bf16.mxu0 0
    %3455 = vmatpush1.bf16.msra.mxu0 0
    %3456 = vmatprep.subr.bf16.mxu0 0
    %3457 = vmatpush1.bf16.msra.mxu0 0
    %3458 = vmatprep.subr.bf16.mxu0 0
    %3459 = vmatpush1.bf16.msra.mxu0 0
    %3460 = vmatprep.subr.bf16.mxu0 0
    %3461 = vmatpush1.bf16.msra.mxu0 0
    %3462 = vmatprep.subr.bf16.mxu0 0
    %3463 = vmatpush1.bf16.msra.mxu0 0
    %3464 = vmatprep.subr.bf16.mxu0 0
    %3465 = vmatpush1.bf16.msra.mxu0 0
    %3466 = vmatprep.mubr.bf16.mxu0 0
    %3467 = vmatmul.mubr.bf16.gmra.mrb[0].mxu0 %v3432
    %v3468 = vpop.f32.mrb[0].mxu0
    %v3469 = vadd.f32 0.0, %v3468
    %v3470 = vpop.f32.mrb[0].mxu0
    %v3471 = vpop.f32.mrb[0].mxu0
    %v3472 = vpop.f32.mrb[0].mxu0
    %3473 = vdwg.mxu0
    %v3474 = vadd.f32 %v3421, %v3469
    %v3475 = vpack.c.bf16 %v261, %v260
    %v3477 = vrot.slane %v3475, 3
    %v3479 = vsel %vm283, %v3477, 0
    %3481 = vmatprep.subr.bf16.mxu0 0
    %3482 = vmatpush1.bf16.msra.mxu0 %v612
    %3483 = vmatprep.subr.bf16.mxu0 0
    %3484 = vmatpush1.bf16.msra.mxu0 0
    %3485 = vmatprep.subr.bf16.mxu0 0
    %3486 = vmatpush1.bf16.msra.mxu0 0
    %3487 = vmatprep.subr.bf16.mxu0 0
    %3488 = vmatpush1.bf16.msra.mxu0 0
    %3489 = vmatprep.subr.bf16.mxu0 0
    %3490 = vmatpush1.bf16.msra.mxu0 0
    %3491 = vmatprep.subr.bf16.mxu0 0
    %3492 = vmatpush1.bf16.msra.mxu0 0
    %3493 = vmatprep.subr.bf16.mxu0 0
    %3494 = vmatpush1.bf16.msra.mxu0 0
    %3495 = vmatprep.subr.bf16.mxu0 0
    %3496 = vmatpush1.bf16.msra.mxu0 0
    %3497 = vmatprep.subr.bf16.mxu0 0
    %3498 = vmatpush1.bf16.msra.mxu0 0
    %3499 = vmatprep.subr.bf16.mxu0 0
    %3500 = vmatpush1.bf16.msra.mxu0 0
    %3501 = vmatprep.subr.bf16.mxu0 0
    %3502 = vmatpush1.bf16.msra.mxu0 0
    %3503 = vmatprep.subr.bf16.mxu0 0
    %3504 = vmatpush1.bf16.msra.mxu0 0
    %3505 = vmatprep.subr.bf16.mxu0 0
    %3506 = vmatpush1.bf16.msra.mxu0 0
    %3507 = vmatprep.subr.bf16.mxu0 0
    %3508 = vmatpush1.bf16.msra.mxu0 0
    %3509 = vmatprep.subr.bf16.mxu0 0
    %3510 = vmatpush1.bf16.msra.mxu0 0
    %3511 = vmatprep.subr.bf16.mxu0 0
    %3512 = vmatpush1.bf16.msra.mxu0 0
    %3513 = vmatprep.mubr.bf16.mxu0 0
    %3514 = vmatmul.mubr.bf16.gmra.mrb[0].mxu0 %v3479
    %v3515 = vpop.f32.mrb[0].mxu0
    %v3516 = vadd.f32 0.0, %v3515
    %v3517 = vpop.f32.mrb[0].mxu0
    %v3518 = vpop.f32.mrb[0].mxu0
    %v3519 = vpop.f32.mrb[0].mxu0
    %3520 = vdwg.mxu0
    %v3521 = vadd.f32 %v3474, %v3516
    %v3522 = vpack.c.bf16 %v261, %v261
    %v3524 = vshrl.u32 %v3522, 16
    %v3526 = vshll.u32 %v3522, 16
    %v3528 = vrot.slane %v3526, 1
    %v3529 = vor.u32 %v3524, %v3528
    %v3531 = vsel %vm283, %v3529, 0
    %3533 = vmatprep.subr.bf16.mxu0 0
    %3534 = vmatpush1.bf16.msra.mxu0 %v672
    %3535 = vmatprep.subr.bf16.mxu0 0
    %3536 = vmatpush1.bf16.msra.mxu0 0
    %3537 = vmatprep.subr.bf16.mxu0 0
    %3538 = vmatpush1.bf16.msra.mxu0 0
    %3539 = vmatprep.subr.bf16.mxu0 0
    %3540 = vmatpush1.bf16.msra.mxu0 0
    %3541 = vmatprep.subr.bf16.mxu0 0
    %3542 = vmatpush1.bf16.msra.mxu0 0
    %3543 = vmatprep.subr.bf16.mxu0 0
    %3544 = vmatpush1.bf16.msra.mxu0 0
    %3545 = vmatprep.subr.bf16.mxu0 0
    %3546 = vmatpush1.bf16.msra.mxu0 0
    %3547 = vmatprep.subr.bf16.mxu0 0
    %3548 = vmatpush1.bf16.msra.mxu0 0
    %3549 = vmatprep.subr.bf16.mxu0 0
    %3550 = vmatpush1.bf16.msra.mxu0 0
    %3551 = vmatprep.subr.bf16.mxu0 0
    %3552 = vmatpush1.bf16.msra.mxu0 0
    %3553 = vmatprep.subr.bf16.mxu0 0
    %3554 = vmatpush1.bf16.msra.mxu0 0
    %3555 = vmatprep.subr.bf16.mxu0 0
    %3556 = vmatpush1.bf16.msra.mxu0 0
    %3557 = vmatprep.subr.bf16.mxu0 0
    %3558 = vmatpush1.bf16.msra.mxu0 0
    %3559 = vmatprep.subr.bf16.mxu0 0
    %3560 = vmatpush1.bf16.msra.mxu0 0
    %3561 = vmatprep.subr.bf16.mxu0 0
    %3562 = vmatpush1.bf16.msra.mxu0 0
    %3563 = vmatprep.subr.bf16.mxu0 0
    %3564 = vmatpush1.bf16.msra.mxu0 0
    %3565 = vmatprep.mubr.bf16.mxu0 0
    %3566 = vmatmul.mubr.bf16.gmra.mrb[0].mxu0 %v3531
    %v3567 = vpop.f32.mrb[0].mxu0
    %v3568 = vadd.f32 0.0, %v3567
    %v3569 = vpop.f32.mrb[0].mxu0
    %v3570 = vpop.f32.mrb[0].mxu0
    %v3571 = vpop.f32.mrb[0].mxu0
    %3572 = vdwg.mxu0
    %v3573 = vadd.f32 %v3521, %v3568
    %v3575 = vrot.slane %v3522, 2
    %v3577 = vsel %vm283, %v3575, 0
    %3579 = vmatprep.subr.bf16.mxu0 0
    %3580 = vmatpush1.bf16.msra.mxu0 %v725
    %3581 = vmatprep.subr.bf16.mxu0 0
    %3582 = vmatpush1.bf16.msra.mxu0 0
    %3583 = vmatprep.subr.bf16.mxu0 0
    %3584 = vmatpush1.bf16.msra.mxu0 0
    %3585 = vmatprep.subr.bf16.mxu0 0
    %3586 = vmatpush1.bf16.msra.mxu0 0
    %3587 = vmatprep.subr.bf16.mxu0 0
    %3588 = vmatpush1.bf16.msra.mxu0 0
    %3589 = vmatprep.subr.bf16.mxu0 0
    %3590 = vmatpush1.bf16.msra.mxu0 0
    %3591 = vmatprep.subr.bf16.mxu0 0
    %3592 = vmatpush1.bf16.msra.mxu0 0
    %3593 = vmatprep.subr.bf16.mxu0 0
    %3594 = vmatpush1.bf16.msra.mxu0 0
    %3595 = vmatprep.subr.bf16.mxu0 0
    %3596 = vmatpush1.bf16.msra.mxu0 0
    %3597 = vmatprep.subr.bf16.mxu0 0
    %3598 = vmatpush1.bf16.msra.mxu0 0
    %3599 = vmatprep.subr.bf16.mxu0 0
    %3600 = vmatpush1.bf16.msra.mxu0 0
    %3601 = vmatprep.subr.bf16.mxu0 0
    %3602 = vmatpush1.bf16.msra.mxu0 0
    %3603 = vmatprep.subr.bf16.mxu0 0
    %3604 = vmatpush1.bf16.msra.mxu0 0
    %3605 = vmatprep.subr.bf16.mxu0 0
    %3606 = vmatpush1.bf16.msra.mxu0 0
    %3607 = vmatprep.subr.bf16.mxu0 0
    %3608 = vmatpush1.bf16.msra.mxu0 0
    %3609 = vmatprep.subr.bf16.mxu0 0
    %3610 = vmatpush1.bf16.msra.mxu0 0
    %3611 = vmatprep.mubr.bf16.mxu0 0
    %3612 = vmatmul.mubr.bf16.gmra.mrb[0].mxu0 %v3577
    %v3613 = vpop.f32.mrb[0].mxu0
    %v3614 = vadd.f32 0.0, %v3613
    %v3615 = vpop.f32.mrb[0].mxu0
    %v3616 = vpop.f32.mrb[0].mxu0
    %v3617 = vpop.f32.mrb[0].mxu0
    %3618 = vdwg.mxu0
    %v3619 = vadd.f32 %v3573, %v3614
    %v3620 = vadd.f32 %v3619, %v776
    %v3621 = vmax.f32 %v3620, 0.0
    %v3622 = vpack.c.bf16 %v3621, %v3621
    %v3623 = vld [vmem:[%s5 + $0x60] sm:$0xf]
    %v3624 = vld [vmem:[%s5 + $0x64] sm:$0xf]
    %v3625 = vld [vmem:[%s5 + $0x68] sm:$0xf]
    %v3626 = vld [vmem:[%s5 + $0x6c] sm:$0xf]
    %v3631 = vunpack.c.l.b16 %v3623
    %v3632 = vunpack.c.l.b16 %v3624
    %v3633 = vunpack.c.l.b16 %v3625
    %v3634 = vunpack.c.l.b16 %v3626
    %v3635 = vpack.c.b16 %v3632, %v3631
    %v3636 = vpack.c.b16 %v3634, %v3633
    %v3640 = vsel %vm1220, %v3622, 0
    %3642 = vmatprep.subr.bf16.mxu0 0
    %3643 = vmatpush1.bf16.msra.mxu0 %v3635
    %3644 = vmatprep.subr.bf16.mxu0 0
    %3645 = vmatpush1.bf16.msra.mxu0 %v3636
    %3646 = vmatprep.subr.bf16.mxu0 0
    %3647 = vmatpush1.bf16.msra.mxu0 0
    %3648 = vmatprep.subr.bf16.mxu0 0
    %3649 = vmatpush1.bf16.msra.mxu0 0
    %3650 = vmatprep.subr.bf16.mxu0 0
    %3651 = vmatpush1.bf16.msra.mxu0 0
    %3652 = vmatprep.subr.bf16.mxu0 0
    %3653 = vmatpush1.bf16.msra.mxu0 0
    %3654 = vmatprep.subr.bf16.mxu0 0
    %3655 = vmatpush1.bf16.msra.mxu0 0
    %3656 = vmatprep.subr.bf16.mxu0 0
    %3657 = vmatpush1.bf16.msra.mxu0 0
    %3658 = vmatprep.subr.bf16.mxu0 0
    %3659 = vmatpush1.bf16.msra.mxu0 0
    %3660 = vmatprep.subr.bf16.mxu0 0
    %3661 = vmatpush1.bf16.msra.mxu0 0
    %3662 = vmatprep.subr.bf16.mxu0 0
    %3663 = vmatpush1.bf16.msra.mxu0 0
    %3664 = vmatprep.subr.bf16.mxu0 0
    %3665 = vmatpush1.bf16.msra.mxu0 0
    %3666 = vmatprep.subr.bf16.mxu0 0
    %3667 = vmatpush1.bf16.msra.mxu0 0
    %3668 = vmatprep.subr.bf16.mxu0 0
    %3669 = vmatpush1.bf16.msra.mxu0 0
    %3670 = vmatprep.subr.bf16.mxu0 0
    %3671 = vmatpush1.bf16.msra.mxu0 0
    %3672 = vmatprep.subr.bf16.mxu0 0
    %3673 = vmatpush1.bf16.msra.mxu0 0
    %3674 = vmatprep.mubr.bf16.mxu0 0
    %3675 = vmatmul.mubr.bf16.gmra.mrb[0].mxu0 %v3640
    %v3676 = vpop.f32.mrb[0].mxu0
    %v3677 = vadd.f32 0.0, %v3676
    %v3678 = vpop.f32.mrb[0].mxu0
    %v3679 = vpop.f32.mrb[0].mxu0
    %v3680 = vpop.f32.mrb[0].mxu0
    %3681 = vdwg.mxu0
    %v3682 = vadd.f32 %v3202, %v3677
    %3683 = vmatprep.subr.bf16.mxu0 0
    %3684 = vmatpush1.bf16.msra.mxu0 %v281
    %3685 = vmatprep.subr.bf16.mxu0 0
    %3686 = vmatpush1.bf16.msra.mxu0 0
    %3687 = vmatprep.subr.bf16.mxu0 0
    %3688 = vmatpush1.bf16.msra.mxu0 0
    %3689 = vmatprep.subr.bf16.mxu0 0
    %3690 = vmatpush1.bf16.msra.mxu0 0
    %3691 = vmatprep.subr.bf16.mxu0 0
    %3692 = vmatpush1.bf16.msra.mxu0 0
    %3693 = vmatprep.subr.bf16.mxu0 0
    %3694 = vmatpush1.bf16.msra.mxu0 0
    %3695 = vmatprep.subr.bf16.mxu0 0
    %3696 = vmatpush1.bf16.msra.mxu0 0
    %3697 = vmatprep.subr.bf16.mxu0 0
    %3698 = vmatpush1.bf16.msra.mxu0 0
    %3699 = vmatprep.subr.bf16.mxu0 0
    %3700 = vmatpush1.bf16.msra.mxu0 0
    %3701 = vmatprep.subr.bf16.mxu0 0
    %3702 = vmatpush1.bf16.msra.mxu0 0
    %3703 = vmatprep.subr.bf16.mxu0 0
    %3704 = vmatpush1.bf16.msra.mxu0 0
    %3705 = vmatprep.subr.bf16.mxu0 0
    %3706 = vmatpush1.bf16.msra.mxu0 0
    %3707 = vmatprep.subr.bf16.mxu0 0
    %3708 = vmatpush1.bf16.msra.mxu0 0
    %3709 = vmatprep.subr.bf16.mxu0 0
    %3710 = vmatpush1.bf16.msra.mxu0 0
    %3711 = vmatprep.subr.bf16.mxu0 0
    %3712 = vmatpush1.bf16.msra.mxu0 0
    %3713 = vmatprep.subr.bf16.mxu0 0
    %3714 = vmatpush1.bf16.msra.mxu0 0
    %3715 = vmatprep.mubr.bf16.mxu0 0
    %3716 = vmatmul.mubr.bf16.gmra.mrb[0].mxu0 %v2590
    %v3717 = vpop.f32.mrb[0].mxu0
    %v3718 = vadd.f32 0.0, %v3717
    %v3719 = vpop.f32.mrb[0].mxu0
    %v3720 = vpop.f32.mrb[0].mxu0
    %v3721 = vpop.f32.mrb[0].mxu0
    %3722 = vdwg.mxu0
    %3723 = vmatprep.subr.bf16.mxu0 0
    %3724 = vmatpush1.bf16.msra.mxu0 %v331
    %3725 = vmatprep.subr.bf16.mxu0 0
    %3726 = vmatpush1.bf16.msra.mxu0 0
    %3727 = vmatprep.subr.bf16.mxu0 0
    %3728 = vmatpush1.bf16.msra.mxu0 0
    %3729 = vmatprep.subr.bf16.mxu0 0
    %3730 = vmatpush1.bf16.msra.mxu0 0
    %3731 = vmatprep.subr.bf16.mxu0 0
    %3732 = vmatpush1.bf16.msra.mxu0 0
    %3733 = vmatprep.subr.bf16.mxu0 0
    %3734 = vmatpush1.bf16.msra.mxu0 0
    %3735 = vmatprep.subr.bf16.mxu0 0
    %3736 = vmatpush1.bf16.msra.mxu0 0
    %3737 = vmatprep.subr.bf16.mxu0 0
    %3738 = vmatpush1.bf16.msra.mxu0 0
    %3739 = vmatprep.subr.bf16.mxu0 0
    %3740 = vmatpush1.bf16.msra.mxu0 0
    %3741 = vmatprep.subr.bf16.mxu0 0
    %3742 = vmatpush1.bf16.msra.mxu0 0
    %3743 = vmatprep.subr.bf16.mxu0 0
    %3744 = vmatpush1.bf16.msra.mxu0 0
    %3745 = vmatprep.subr.bf16.mxu0 0
    %3746 = vmatpush1.bf16.msra.mxu0 0
    %3747 = vmatprep.subr.bf16.mxu0 0
    %3748 = vmatpush1.bf16.msra.mxu0 0
    %3749 = vmatprep.subr.bf16.mxu0 0
    %3750 = vmatpush1.bf16.msra.mxu0 0
    %3751 = vmatprep.subr.bf16.mxu0 0
    %3752 = vmatpush1.bf16.msra.mxu0 0
    %3753 = vmatprep.subr.bf16.mxu0 0
    %3754 = vmatpush1.bf16.msra.mxu0 0
    %3755 = vmatprep.mubr.bf16.mxu0 0
    %3756 = vmatmul.mubr.bf16.gmra.mrb[0].mxu0 %v2176
    %v3757 = vpop.f32.mrb[0].mxu0
    %v3758 = vadd.f32 %v3718, %v3757
    %v3759 = vpop.f32.mrb[0].mxu0
    %v3760 = vpop.f32.mrb[0].mxu0
    %v3761 = vpop.f32.mrb[0].mxu0
    %3762 = vdwg.mxu0
    %3763 = vmatprep.subr.bf16.mxu0 0
    %3764 = vmatpush1.bf16.msra.mxu0 %v384
    %3765 = vmatprep.subr.bf16.mxu0 0
    %3766 = vmatpush1.bf16.msra.mxu0 0
    %3767 = vmatprep.subr.bf16.mxu0 0
    %3768 = vmatpush1.bf16.msra.mxu0 0
    %3769 = vmatprep.subr.bf16.mxu0 0
    %3770 = vmatpush1.bf16.msra.mxu0 0
    %3771 = vmatprep.subr.bf16.mxu0 0
    %3772 = vmatpush1.bf16.msra.mxu0 0
    %3773 = vmatprep.subr.bf16.mxu0 0
    %3774 = vmatpush1.bf16.msra.mxu0 0
    %3775 = vmatprep.subr.bf16.mxu0 0
    %3776 = vmatpush1.bf16.msra.mxu0 0
    %3777 = vmatprep.subr.bf16.mxu0 0
    %3778 = vmatpush1.bf16.msra.mxu0 0
    %3779 = vmatprep.subr.bf16.mxu0 0
    %3780 = vmatpush1.bf16.msra.mxu0 0
    %3781 = vmatprep.subr.bf16.mxu0 0
    %3782 = vmatpush1.bf16.msra.mxu0 0
    %3783 = vmatprep.subr.bf16.mxu0 0
    %3784 = vmatpush1.bf16.msra.mxu0 0
    %3785 = vmatprep.subr.bf16.mxu0 0
    %3786 = vmatpush1.bf16.msra.mxu0 0
    %3787 = vmatprep.subr.bf16.mxu0 0
    %3788 = vmatpush1.bf16.msra.mxu0 0
    %3789 = vmatprep.subr.bf16.mxu0 0
    %3790 = vmatpush1.bf16.msra.mxu0 0
    %3791 = vmatprep.subr.bf16.mxu0 0
    %3792 = vmatpush1.bf16.msra.mxu0 0
    %3793 = vmatprep.subr.bf16.mxu0 0
    %3794 = vmatpush1.bf16.msra.mxu0 0
    %3795 = vmatprep.mubr.bf16.mxu0 0
    %3796 = vmatmul.mubr.bf16.gmra.mrb[0].mxu0 %v2635
    %v3797 = vpop.f32.mrb[0].mxu0
    %v3798 = vadd.f32 0.0, %v3797
    %v3799 = vpop.f32.mrb[0].mxu0
    %v3800 = vpop.f32.mrb[0].mxu0
    %v3801 = vpop.f32.mrb[0].mxu0
    %3802 = vdwg.mxu0
    %v3803 = vadd.f32 %v3758, %v3798
    %3804 = vmatprep.subr.bf16.mxu0 0
    %3805 = vmatpush1.bf16.msra.mxu0 %v445
    %3806 = vmatprep.subr.bf16.mxu0 0
    %3807 = vmatpush1.bf16.msra.mxu0 0
    %3808 = vmatprep.subr.bf16.mxu0 0
    %3809 = vmatpush1.bf16.msra.mxu0 0
    %3810 = vmatprep.subr.bf16.mxu0 0
    %3811 = vmatpush1.bf16.msra.mxu0 0
    %3812 = vmatprep.subr.bf16.mxu0 0
    %3813 = vmatpush1.bf16.msra.mxu0 0
    %3814 = vmatprep.subr.bf16.mxu0 0
    %3815 = vmatpush1.bf16.msra.mxu0 0
    %3816 = vmatprep.subr.bf16.mxu0 0
    %3817 = vmatpush1.bf16.msra.mxu0 0
    %3818 = vmatprep.subr.bf16.mxu0 0
    %3819 = vmatpush1.bf16.msra.mxu0 0
    %3820 = vmatprep.subr.bf16.mxu0 0
    %3821 = vmatpush1.bf16.msra.mxu0 0
    %3822 = vmatprep.subr.bf16.mxu0 0
    %3823 = vmatpush1.bf16.msra.mxu0 0
    %3824 = vmatprep.subr.bf16.mxu0 0
    %3825 = vmatpush1.bf16.msra.mxu0 0
    %3826 = vmatprep.subr.bf16.mxu0 0
    %3827 = vmatpush1.bf16.msra.mxu0 0
    %3828 = vmatprep.subr.bf16.mxu0 0
    %3829 = vmatpush1.bf16.msra.mxu0 0
    %3830 = vmatprep.subr.bf16.mxu0 0
    %3831 = vmatpush1.bf16.msra.mxu0 0
    %3832 = vmatprep.subr.bf16.mxu0 0
    %3833 = vmatpush1.bf16.msra.mxu0 0
    %3834 = vmatprep.subr.bf16.mxu0 0
    %3835 = vmatpush1.bf16.msra.mxu0 0
    %3836 = vmatprep.mubr.bf16.mxu0 0
    %3837 = vmatmul.mubr.bf16.gmra.mrb[0].mxu0 %v3432
    %v3838 = vpop.f32.mrb[0].mxu0
    %v3839 = vadd.f32 0.0, %v3838
    %v3840 = vpop.f32.mrb[0].mxu0
    %v3841 = vpop.f32.mrb[0].mxu0
    %v3842 = vpop.f32.mrb[0].mxu0
    %3843 = vdwg.mxu0
    %v3844 = vadd.f32 %v3803, %v3839
    %v3845 = vpack.c.bf16 %v259, %v259
    %v3847 = vrot.slane %v3845, 1
    %v3849 = vsel %vm283, %v3847, 0
    %3851 = vmatprep.subr.bf16.mxu0 0
    %3852 = vmatpush1.bf16.msra.mxu0 %v498
    %3853 = vmatprep.subr.bf16.mxu0 0
    %3854 = vmatpush1.bf16.msra.mxu0 0
    %3855 = vmatprep.subr.bf16.mxu0 0
    %3856 = vmatpush1.bf16.msra.mxu0 0
    %3857 = vmatprep.subr.bf16.mxu0 0
    %3858 = vmatpush1.bf16.msra.mxu0 0
    %3859 = vmatprep.subr.bf16.mxu0 0
    %3860 = vmatpush1.bf16.msra.mxu0 0
    %3861 = vmatprep.subr.bf16.mxu0 0
    %3862 = vmatpush1.bf16.msra.mxu0 0
    %3863 = vmatprep.subr.bf16.mxu0 0
    %3864 = vmatpush1.bf16.msra.mxu0 0
    %3865 = vmatprep.subr.bf16.mxu0 0
    %3866 = vmatpush1.bf16.msra.mxu0 0
    %3867 = vmatprep.subr.bf16.mxu0 0
    %3868 = vmatpush1.bf16.msra.mxu0 0
    %3869 = vmatprep.subr.bf16.mxu0 0
    %3870 = vmatpush1.bf16.msra.mxu0 0
    %3871 = vmatprep.subr.bf16.mxu0 0
    %3872 = vmatpush1.bf16.msra.mxu0 0
    %3873 = vmatprep.subr.bf16.mxu0 0
    %3874 = vmatpush1.bf16.msra.mxu0 0
    %3875 = vmatprep.subr.bf16.mxu0 0
    %3876 = vmatpush1.bf16.msra.mxu0 0
    %3877 = vmatprep.subr.bf16.mxu0 0
    %3878 = vmatpush1.bf16.msra.mxu0 0
    %3879 = vmatprep.subr.bf16.mxu0 0
    %3880 = vmatpush1.bf16.msra.mxu0 0
    %3881 = vmatprep.subr.bf16.mxu0 0
    %3882 = vmatpush1.bf16.msra.mxu0 0
    %3883 = vmatprep.mubr.bf16.mxu0 0
    %3884 = vmatmul.mubr.bf16.gmra.mrb[0].mxu0 %v3849
    %v3885 = vpop.f32.mrb[0].mxu0
    %v3886 = vadd.f32 0.0, %v3885
    %v3887 = vpop.f32.mrb[0].mxu0
    %v3888 = vpop.f32.mrb[0].mxu0
    %v3889 = vpop.f32.mrb[0].mxu0
    %3890 = vdwg.mxu0
    %v3891 = vadd.f32 %v3844, %v3886
    %v3893 = vshrl.u32 %v3845, 16
    %v3895 = vrot.slane %v3893, 2
    %v3896 = vshll.u32 %v3845, 16
    %v3898 = vrot.slane %v3896, 3
    %v3899 = vor.u32 %v3895, %v3898
    %v3901 = vsel %vm283, %v3899, 0
    %3903 = vmatprep.subr.bf16.mxu0 0
    %3904 = vmatpush1.bf16.msra.mxu0 %v557
    %3905 = vmatprep.subr.bf16.mxu0 0
    %3906 = vmatpush1.bf16.msra.mxu0 0
    %3907 = vmatprep.subr.bf16.mxu0 0
    %3908 = vmatpush1.bf16.msra.mxu0 0
    %3909 = vmatprep.subr.bf16.mxu0 0
    %3910 = vmatpush1.bf16.msra.mxu0 0
    %3911 = vmatprep.subr.bf16.mxu0 0
    %3912 = vmatpush1.bf16.msra.mxu0 0
    %3913 = vmatprep.subr.bf16.mxu0 0
    %3914 = vmatpush1.bf16.msra.mxu0 0
    %3915 = vmatprep.subr.bf16.mxu0 0
    %3916 = vmatpush1.bf16.msra.mxu0 0
    %3917 = vmatprep.subr.bf16.mxu0 0
    %3918 = vmatpush1.bf16.msra.mxu0 0
    %3919 = vmatprep.subr.bf16.mxu0 0
    %3920 = vmatpush1.bf16.msra.mxu0 0
    %3921 = vmatprep.subr.bf16.mxu0 0
    %3922 = vmatpush1.bf16.msra.mxu0 0
    %3923 = vmatprep.subr.bf16.mxu0 0
    %3924 = vmatpush1.bf16.msra.mxu0 0
    %3925 = vmatprep.subr.bf16.mxu0 0
    %3926 = vmatpush1.bf16.msra.mxu0 0
    %3927 = vmatprep.subr.bf16.mxu0 0
    %3928 = vmatpush1.bf16.msra.mxu0 0
    %3929 = vmatprep.subr.bf16.mxu0 0
    %3930 = vmatpush1.bf16.msra.mxu0 0
    %3931 = vmatprep.subr.bf16.mxu0 0
    %3932 = vmatpush1.bf16.msra.mxu0 0
    %3933 = vmatprep.subr.bf16.mxu0 0
    %3934 = vmatpush1.bf16.msra.mxu0 0
    %3935 = vmatprep.mubr.bf16.mxu0 0
    %3936 = vmatmul.mubr.bf16.gmra.mrb[0].mxu0 %v3901
    %v3937 = vpop.f32.mrb[0].mxu0
    %v3938 = vadd.f32 0.0, %v3937
    %v3939 = vpop.f32.mrb[0].mxu0
    %v3940 = vpop.f32.mrb[0].mxu0
    %v3941 = vpop.f32.mrb[0].mxu0
    %3942 = vdwg.mxu0
    %v3943 = vadd.f32 %v3891, %v3938
    %3944 = vmatprep.subr.bf16.mxu0 0
    %3945 = vmatpush1.bf16.msra.mxu0 %v612
    %3946 = vmatprep.subr.bf16.mxu0 0
    %3947 = vmatpush1.bf16.msra.mxu0 0
    %3948 = vmatprep.subr.bf16.mxu0 0
    %3949 = vmatpush1.bf16.msra.mxu0 0
    %3950 = vmatprep.subr.bf16.mxu0 0
    %3951 = vmatpush1.bf16.msra.mxu0 0
    %3952 = vmatprep.subr.bf16.mxu0 0
    %3953 = vmatpush1.bf16.msra.mxu0 0
    %3954 = vmatprep.subr.bf16.mxu0 0
    %3955 = vmatpush1.bf16.msra.mxu0 0
    %3956 = vmatprep.subr.bf16.mxu0 0
    %3957 = vmatpush1.bf16.msra.mxu0 0
    %3958 = vmatprep.subr.bf16.mxu0 0
    %3959 = vmatpush1.bf16.msra.mxu0 0
    %3960 = vmatprep.subr.bf16.mxu0 0
    %3961 = vmatpush1.bf16.msra.mxu0 0
    %3962 = vmatprep.subr.bf16.mxu0 0
    %3963 = vmatpush1.bf16.msra.mxu0 0
    %3964 = vmatprep.subr.bf16.mxu0 0
    %3965 = vmatpush1.bf16.msra.mxu0 0
    %3966 = vmatprep.subr.bf16.mxu0 0
    %3967 = vmatpush1.bf16.msra.mxu0 0
    %3968 = vmatprep.subr.bf16.mxu0 0
    %3969 = vmatpush1.bf16.msra.mxu0 0
    %3970 = vmatprep.subr.bf16.mxu0 0
    %3971 = vmatpush1.bf16.msra.mxu0 0
    %3972 = vmatprep.subr.bf16.mxu0 0
    %3973 = vmatpush1.bf16.msra.mxu0 0
    %3974 = vmatprep.subr.bf16.mxu0 0
    %3975 = vmatpush1.bf16.msra.mxu0 0
    %3976 = vmatprep.mubr.bf16.mxu0 0
    %3977 = vmatmul.mubr.bf16.gmra.mrb[0].mxu0 %v3577
    %v3978 = vpop.f32.mrb[0].mxu0
    %v3979 = vadd.f32 0.0, %v3978
    %v3980 = vpop.f32.mrb[0].mxu0
    %v3981 = vpop.f32.mrb[0].mxu0
    %v3982 = vpop.f32.mrb[0].mxu0
    %3983 = vdwg.mxu0
    %v3984 = vadd.f32 %v3943, %v3979
    %v3985 = vpack.c.bf16 %v262, %v261
    %v3987 = vshrl.u32 %v3985, 16
    %v3989 = vrot.slane %v3987, 3
    %v3990 = vshll.u32 %v3985, 16
    %v3992 = vrot.slane %v3990, 4
    %v3993 = vor.u32 %v3989, %v3992
    %v3995 = vsel %vm283, %v3993, 0
    %3997 = vmatprep.subr.bf16.mxu0 0
    %3998 = vmatpush1.bf16.msra.mxu0 %v672
    %3999 = vmatprep.subr.bf16.mxu0 0
    %4000 = vmatpush1.bf16.msra.mxu0 0
    %4001 = vmatprep.subr.bf16.mxu0 0
    %4002 = vmatpush1.bf16.msra.mxu0 0
    %4003 = vmatprep.subr.bf16.mxu0 0
    %4004 = vmatpush1.bf16.msra.mxu0 0
    %4005 = vmatprep.subr.bf16.mxu0 0
    %4006 = vmatpush1.bf16.msra.mxu0 0
    %4007 = vmatprep.subr.bf16.mxu0 0
    %4008 = vmatpush1.bf16.msra.mxu0 0
    %4009 = vmatprep.subr.bf16.mxu0 0
    %4010 = vmatpush1.bf16.msra.mxu0 0
    %4011 = vmatprep.subr.bf16.mxu0 0
    %4012 = vmatpush1.bf16.msra.mxu0 0
    %4013 = vmatprep.subr.bf16.mxu0 0
    %4014 = vmatpush1.bf16.msra.mxu0 0
    %4015 = vmatprep.subr.bf16.mxu0 0
    %4016 = vmatpush1.bf16.msra.mxu0 0
    %4017 = vmatprep.subr.bf16.mxu0 0
    %4018 = vmatpush1.bf16.msra.mxu0 0
    %4019 = vmatprep.subr.bf16.mxu0 0
    %4020 = vmatpush1.bf16.msra.mxu0 0
    %4021 = vmatprep.subr.bf16.mxu0 0
    %4022 = vmatpush1.bf16.msra.mxu0 0
    %4023 = vmatprep.subr.bf16.mxu0 0
    %4024 = vmatpush1.bf16.msra.mxu0 0
    %4025 = vmatprep.subr.bf16.mxu0 0
    %4026 = vmatpush1.bf16.msra.mxu0 0
    %4027 = vmatprep.subr.bf16.mxu0 0
    %4028 = vmatpush1.bf16.msra.mxu0 0
    %4029 = vmatprep.mubr.bf16.mxu0 0
    %4030 = vmatmul.mubr.bf16.gmra.mrb[0].mxu0 %v3995
    %v4031 = vpop.f32.mrb[0].mxu0
    %v4032 = vadd.f32 0.0, %v4031
    %v4033 = vpop.f32.mrb[0].mxu0
    %v4034 = vpop.f32.mrb[0].mxu0
    %v4035 = vpop.f32.mrb[0].mxu0
    %4036 = vdwg.mxu0
    %v4037 = vadd.f32 %v3984, %v4032
    %v4038 = vpack.c.bf16 %v262, %v262
    %v4040 = vrot.slane %v4038, 1
    %v4042 = vsel %vm283, %v4040, 0
    %4044 = vmatprep.subr.bf16.mxu0 0
    %4045 = vmatpush1.bf16.msra.mxu0 %v725
    %4046 = vmatprep.subr.bf16.mxu0 0
    %4047 = vmatpush1.bf16.msra.mxu0 0
    %4048 = vmatprep.subr.bf16.mxu0 0
    %4049 = vmatpush1.bf16.msra.mxu0 0
    %4050 = vmatprep.subr.bf16.mxu0 0
    %4051 = vmatpush1.bf16.msra.mxu0 0
    %4052 = vmatprep.subr.bf16.mxu0 0
    %4053 = vmatpush1.bf16.msra.mxu0 0
    %4054 = vmatprep.subr.bf16.mxu0 0
    %4055 = vmatpush1.bf16.msra.mxu0 0
    %4056 = vmatprep.subr.bf16.mxu0 0
    %4057 = vmatpush1.bf16.msra.mxu0 0
    %4058 = vmatprep.subr.bf16.mxu0 0
    %4059 = vmatpush1.bf16.msra.mxu0 0
    %4060 = vmatprep.subr.bf16.mxu0 0
    %4061 = vmatpush1.bf16.msra.mxu0 0
    %4062 = vmatprep.subr.bf16.mxu0 0
    %4063 = vmatpush1.bf16.msra.mxu0 0
    %4064 = vmatprep.subr.bf16.mxu0 0
    %4065 = vmatpush1.bf16.msra.mxu0 0
    %4066 = vmatprep.subr.bf16.mxu0 0
    %4067 = vmatpush1.bf16.msra.mxu0 0
    %4068 = vmatprep.subr.bf16.mxu0 0
    %4069 = vmatpush1.bf16.msra.mxu0 0
    %4070 = vmatprep.subr.bf16.mxu0 0
    %4071 = vmatpush1.bf16.msra.mxu0 0
    %4072 = vmatprep.subr.bf16.mxu0 0
    %4073 = vmatpush1.bf16.msra.mxu0 0
    %4074 = vmatprep.subr.bf16.mxu0 0
    %4075 = vmatpush1.bf16.msra.mxu0 0
    %4076 = vmatprep.mubr.bf16.mxu0 0
    %4077 = vmatmul.mubr.bf16.gmra.mrb[0].mxu0 %v4042
    %v4078 = vpop.f32.mrb[0].mxu0
    %v4079 = vadd.f32 0.0, %v4078
    %v4080 = vpop.f32.mrb[0].mxu0
    %v4081 = vpop.f32.mrb[0].mxu0
    %v4082 = vpop.f32.mrb[0].mxu0
    %4083 = vdwg.mxu0
    %v4084 = vadd.f32 %v4037, %v4079
    %v4085 = vadd.f32 %v4084, %v776
    %v4086 = vmax.f32 %v4085, 0.0
    %v4087 = vpack.c.bf16 %v4086, %v4086
    %v4088 = vld [vmem:[%s5 + $0x70] sm:$0xf]
    %v4089 = vld [vmem:[%s5 + $0x74] sm:$0xf]
    %v4090 = vld [vmem:[%s5 + $0x78] sm:$0xf]
    %v4091 = vld [vmem:[%s5 + $0x7c] sm:$0xf]
    %v4096 = vunpack.c.l.b16 %v4088
    %v4097 = vunpack.c.l.b16 %v4089
    %v4098 = vunpack.c.l.b16 %v4090
    %v4099 = vunpack.c.l.b16 %v4091
    %v4100 = vpack.c.b16 %v4097, %v4096
    %v4101 = vpack.c.b16 %v4099, %v4098
    %v4105 = vsel %vm1220, %v4087, 0
    %4107 = vmatprep.subr.bf16.mxu0 0
    %4108 = vmatpush1.bf16.msra.mxu0 %v4100
    %4109 = vmatprep.subr.bf16.mxu0 0
    %4110 = vmatpush1.bf16.msra.mxu0 %v4101
    %4111 = vmatprep.subr.bf16.mxu0 0
    %4112 = vmatpush1.bf16.msra.mxu0 0
    %4113 = vmatprep.subr.bf16.mxu0 0
    %4114 = vmatpush1.bf16.msra.mxu0 0
    %4115 = vmatprep.subr.bf16.mxu0 0
    %4116 = vmatpush1.bf16.msra.mxu0 0
    %4117 = vmatprep.subr.bf16.mxu0 0
    %4118 = vmatpush1.bf16.msra.mxu0 0
    %4119 = vmatprep.subr.bf16.mxu0 0
    %4120 = vmatpush1.bf16.msra.mxu0 0
    %4121 = vmatprep.subr.bf16.mxu0 0
    %4122 = vmatpush1.bf16.msra.mxu0 0
    %4123 = vmatprep.subr.bf16.mxu0 0
    %4124 = vmatpush1.bf16.msra.mxu0 0
    %4125 = vmatprep.subr.bf16.mxu0 0
    %4126 = vmatpush1.bf16.msra.mxu0 0
    %4127 = vmatprep.subr.bf16.mxu0 0
    %4128 = vmatpush1.bf16.msra.mxu0 0
    %4129 = vmatprep.subr.bf16.mxu0 0
    %4130 = vmatpush1.bf16.msra.mxu0 0
    %4131 = vmatprep.subr.bf16.mxu0 0
    %4132 = vmatpush1.bf16.msra.mxu0 0
    %4133 = vmatprep.subr.bf16.mxu0 0
    %4134 = vmatpush1.bf16.msra.mxu0 0
    %4135 = vmatprep.subr.bf16.mxu0 0
    %4136 = vmatpush1.bf16.msra.mxu0 0
    %4137 = vmatprep.subr.bf16.mxu0 0
    %4138 = vmatpush1.bf16.msra.mxu0 0
    %4139 = vmatprep.mubr.bf16.mxu0 0
    %4140 = vmatmul.mubr.bf16.gmra.mrb[0].mxu0 %v4105
    %v4141 = vpop.f32.mrb[0].mxu0
    %v4142 = vadd.f32 0.0, %v4141
    %v4143 = vpop.f32.mrb[0].mxu0
    %v4144 = vpop.f32.mrb[0].mxu0
    %v4145 = vpop.f32.mrb[0].mxu0
    %4146 = vdwg.mxu0
    %v4147 = vadd.f32 %v3682, %v4142
    %4148 = vmatprep.subr.bf16.mxu0 0
    %4149 = vmatpush1.bf16.msra.mxu0 %v281
    %4150 = vmatprep.subr.bf16.mxu0 0
    %4151 = vmatpush1.bf16.msra.mxu0 0
    %4152 = vmatprep.subr.bf16.mxu0 0
    %4153 = vmatpush1.bf16.msra.mxu0 0
    %4154 = vmatprep.subr.bf16.mxu0 0
    %4155 = vmatpush1.bf16.msra.mxu0 0
    %4156 = vmatprep.subr.bf16.mxu0 0
    %4157 = vmatpush1.bf16.msra.mxu0 0
    %4158 = vmatprep.subr.bf16.mxu0 0
    %4159 = vmatpush1.bf16.msra.mxu0 0
    %4160 = vmatprep.subr.bf16.mxu0 0
    %4161 = vmatpush1.bf16.msra.mxu0 0
    %4162 = vmatprep.subr.bf16.mxu0 0
    %4163 = vmatpush1.bf16.msra.mxu0 0
    %4164 = vmatprep.subr.bf16.mxu0 0
    %4165 = vmatpush1.bf16.msra.mxu0 0
    %4166 = vmatprep.subr.bf16.mxu0 0
    %4167 = vmatpush1.bf16.msra.mxu0 0
    %4168 = vmatprep.subr.bf16.mxu0 0
    %4169 = vmatpush1.bf16.msra.mxu0 0
    %4170 = vmatprep.subr.bf16.mxu0 0
    %4171 = vmatpush1.bf16.msra.mxu0 0
    %4172 = vmatprep.subr.bf16.mxu0 0
    %4173 = vmatpush1.bf16.msra.mxu0 0
    %4174 = vmatprep.subr.bf16.mxu0 0
    %4175 = vmatpush1.bf16.msra.mxu0 0
    %4176 = vmatprep.subr.bf16.mxu0 0
    %4177 = vmatpush1.bf16.msra.mxu0 0
    %4178 = vmatprep.subr.bf16.mxu0 0
    %4179 = vmatpush1.bf16.msra.mxu0 0
    %4180 = vmatprep.mubr.bf16.mxu0 0
    %4181 = vmatmul.mubr.bf16.gmra.mrb[0].mxu0 %v3050
    %v4182 = vpop.f32.mrb[0].mxu0
    %v4183 = vadd.f32 0.0, %v4182
    %v4184 = vpop.f32.mrb[0].mxu0
    %v4185 = vpop.f32.mrb[0].mxu0
    %v4186 = vpop.f32.mrb[0].mxu0
    %4187 = vdwg.mxu0
    %4188 = vmatprep.subr.bf16.mxu0 0
    %4189 = vmatpush1.bf16.msra.mxu0 %v331
    %4190 = vmatprep.subr.bf16.mxu0 0
    %4191 = vmatpush1.bf16.msra.mxu0 0
    %4192 = vmatprep.subr.bf16.mxu0 0
    %4193 = vmatpush1.bf16.msra.mxu0 0
    %4194 = vmatprep.subr.bf16.mxu0 0
    %4195 = vmatpush1.bf16.msra.mxu0 0
    %4196 = vmatprep.subr.bf16.mxu0 0
    %4197 = vmatpush1.bf16.msra.mxu0 0
    %4198 = vmatprep.subr.bf16.mxu0 0
    %4199 = vmatpush1.bf16.msra.mxu0 0
    %4200 = vmatprep.subr.bf16.mxu0 0
    %4201 = vmatpush1.bf16.msra.mxu0 0
    %4202 = vmatprep.subr.bf16.mxu0 0
    %4203 = vmatpush1.bf16.msra.mxu0 0
    %4204 = vmatprep.subr.bf16.mxu0 0
    %4205 = vmatpush1.bf16.msra.mxu0 0
    %4206 = vmatprep.subr.bf16.mxu0 0
    %4207 = vmatpush1.bf16.msra.mxu0 0
    %4208 = vmatprep.subr.bf16.mxu0 0
    %4209 = vmatpush1.bf16.msra.mxu0 0
    %4210 = vmatprep.subr.bf16.mxu0 0
    %4211 = vmatpush1.bf16.msra.mxu0 0
    %4212 = vmatprep.subr.bf16.mxu0 0
    %4213 = vmatpush1.bf16.msra.mxu0 0
    %4214 = vmatprep.subr.bf16.mxu0 0
    %4215 = vmatpush1.bf16.msra.mxu0 0
    %4216 = vmatprep.subr.bf16.mxu0 0
    %4217 = vmatpush1.bf16.msra.mxu0 0
    %4218 = vmatprep.subr.bf16.mxu0 0
    %4219 = vmatpush1.bf16.msra.mxu0 0
    %4220 = vmatprep.mubr.bf16.mxu0 0
    %4221 = vmatmul.mubr.bf16.gmra.mrb[0].mxu0 %v2635
    %v4222 = vpop.f32.mrb[0].mxu0
    %v4223 = vadd.f32 %v4183, %v4222
    %v4224 = vpop.f32.mrb[0].mxu0
    %v4225 = vpop.f32.mrb[0].mxu0
    %v4226 = vpop.f32.mrb[0].mxu0
    %4227 = vdwg.mxu0
    %4228 = vmatprep.subr.bf16.mxu0 0
    %4229 = vmatpush1.bf16.msra.mxu0 %v384
    %4230 = vmatprep.subr.bf16.mxu0 0
    %4231 = vmatpush1.bf16.msra.mxu0 0
    %4232 = vmatprep.subr.bf16.mxu0 0
    %4233 = vmatpush1.bf16.msra.mxu0 0
    %4234 = vmatprep.subr.bf16.mxu0 0
    %4235 = vmatpush1.bf16.msra.mxu0 0
    %4236 = vmatprep.subr.bf16.mxu0 0
    %4237 = vmatpush1.bf16.msra.mxu0 0
    %4238 = vmatprep.subr.bf16.mxu0 0
    %4239 = vmatpush1.bf16.msra.mxu0 0
    %4240 = vmatprep.subr.bf16.mxu0 0
    %4241 = vmatpush1.bf16.msra.mxu0 0
    %4242 = vmatprep.subr.bf16.mxu0 0
    %4243 = vmatpush1.bf16.msra.mxu0 0
    %4244 = vmatprep.subr.bf16.mxu0 0
    %4245 = vmatpush1.bf16.msra.mxu0 0
    %4246 = vmatprep.subr.bf16.mxu0 0
    %4247 = vmatpush1.bf16.msra.mxu0 0
    %4248 = vmatprep.subr.bf16.mxu0 0
    %4249 = vmatpush1.bf16.msra.mxu0 0
    %4250 = vmatprep.subr.bf16.mxu0 0
    %4251 = vmatpush1.bf16.msra.mxu0 0
    %4252 = vmatprep.subr.bf16.mxu0 0
    %4253 = vmatpush1.bf16.msra.mxu0 0
    %4254 = vmatprep.subr.bf16.mxu0 0
    %4255 = vmatpush1.bf16.msra.mxu0 0
    %4256 = vmatprep.subr.bf16.mxu0 0
    %4257 = vmatpush1.bf16.msra.mxu0 0
    %4258 = vmatprep.subr.bf16.mxu0 0
    %4259 = vmatpush1.bf16.msra.mxu0 0
    %4260 = vmatprep.mubr.bf16.mxu0 0
    %4261 = vmatmul.mubr.bf16.gmra.mrb[0].mxu0 %v3097
    %v4262 = vpop.f32.mrb[0].mxu0
    %v4263 = vadd.f32 0.0, %v4262
    %v4264 = vpop.f32.mrb[0].mxu0
    %v4265 = vpop.f32.mrb[0].mxu0
    %v4266 = vpop.f32.mrb[0].mxu0
    %4267 = vdwg.mxu0
    %v4268 = vadd.f32 %v4223, %v4263
    %4269 = vmatprep.subr.bf16.mxu0 0
    %4270 = vmatpush1.bf16.msra.mxu0 %v445
    %4271 = vmatprep.subr.bf16.mxu0 0
    %4272 = vmatpush1.bf16.msra.mxu0 0
    %4273 = vmatprep.subr.bf16.mxu0 0
    %4274 = vmatpush1.bf16.msra.mxu0 0
    %4275 = vmatprep.subr.bf16.mxu0 0
    %4276 = vmatpush1.bf16.msra.mxu0 0
    %4277 = vmatprep.subr.bf16.mxu0 0
    %4278 = vmatpush1.bf16.msra.mxu0 0
    %4279 = vmatprep.subr.bf16.mxu0 0
    %4280 = vmatpush1.bf16.msra.mxu0 0
    %4281 = vmatprep.subr.bf16.mxu0 0
    %4282 = vmatpush1.bf16.msra.mxu0 0
    %4283 = vmatprep.subr.bf16.mxu0 0
    %4284 = vmatpush1.bf16.msra.mxu0 0
    %4285 = vmatprep.subr.bf16.mxu0 0
    %4286 = vmatpush1.bf16.msra.mxu0 0
    %4287 = vmatprep.subr.bf16.mxu0 0
    %4288 = vmatpush1.bf16.msra.mxu0 0
    %4289 = vmatprep.subr.bf16.mxu0 0
    %4290 = vmatpush1.bf16.msra.mxu0 0
    %4291 = vmatprep.subr.bf16.mxu0 0
    %4292 = vmatpush1.bf16.msra.mxu0 0
    %4293 = vmatprep.subr.bf16.mxu0 0
    %4294 = vmatpush1.bf16.msra.mxu0 0
    %4295 = vmatprep.subr.bf16.mxu0 0
    %4296 = vmatpush1.bf16.msra.mxu0 0
    %4297 = vmatprep.subr.bf16.mxu0 0
    %4298 = vmatpush1.bf16.msra.mxu0 0
    %4299 = vmatprep.subr.bf16.mxu0 0
    %4300 = vmatpush1.bf16.msra.mxu0 0
    %4301 = vmatprep.mubr.bf16.mxu0 0
    %4302 = vmatmul.mubr.bf16.gmra.mrb[0].mxu0 %v3901
    %v4303 = vpop.f32.mrb[0].mxu0
    %v4304 = vadd.f32 0.0, %v4303
    %v4305 = vpop.f32.mrb[0].mxu0
    %v4306 = vpop.f32.mrb[0].mxu0
    %v4307 = vpop.f32.mrb[0].mxu0
    %4308 = vdwg.mxu0
    %v4309 = vadd.f32 %v4268, %v4304
    %v4310 = vpack.c.bf16 %v260, %v260
    %v4312 = vsel %vm283, %v4310, 0
    %4314 = vmatprep.subr.bf16.mxu0 0
    %4315 = vmatpush1.bf16.msra.mxu0 %v498
    %4316 = vmatprep.subr.bf16.mxu0 0
    %4317 = vmatpush1.bf16.msra.mxu0 0
    %4318 = vmatprep.subr.bf16.mxu0 0
    %4319 = vmatpush1.bf16.msra.mxu0 0
    %4320 = vmatprep.subr.bf16.mxu0 0
    %4321 = vmatpush1.bf16.msra.mxu0 0
    %4322 = vmatprep.subr.bf16.mxu0 0
    %4323 = vmatpush1.bf16.msra.mxu0 0
    %4324 = vmatprep.subr.bf16.mxu0 0
    %4325 = vmatpush1.bf16.msra.mxu0 0
    %4326 = vmatprep.subr.bf16.mxu0 0
    %4327 = vmatpush1.bf16.msra.mxu0 0
    %4328 = vmatprep.subr.bf16.mxu0 0
    %4329 = vmatpush1.bf16.msra.mxu0 0
    %4330 = vmatprep.subr.bf16.mxu0 0
    %4331 = vmatpush1.bf16.msra.mxu0 0
    %4332 = vmatprep.subr.bf16.mxu0 0
    %4333 = vmatpush1.bf16.msra.mxu0 0
    %4334 = vmatprep.subr.bf16.mxu0 0
    %4335 = vmatpush1.bf16.msra.mxu0 0
    %4336 = vmatprep.subr.bf16.mxu0 0
    %4337 = vmatpush1.bf16.msra.mxu0 0
    %4338 = vmatprep.subr.bf16.mxu0 0
    %4339 = vmatpush1.bf16.msra.mxu0 0
    %4340 = vmatprep.subr.bf16.mxu0 0
    %4341 = vmatpush1.bf16.msra.mxu0 0
    %4342 = vmatprep.subr.bf16.mxu0 0
    %4343 = vmatpush1.bf16.msra.mxu0 0
    %4344 = vmatprep.subr.bf16.mxu0 0
    %4345 = vmatpush1.bf16.msra.mxu0 0
    %4346 = vmatprep.mubr.bf16.mxu0 0
    %4347 = vmatmul.mubr.bf16.gmra.mrb[0].mxu0 %v4312
    %v4348 = vpop.f32.mrb[0].mxu0
    %v4349 = vadd.f32 0.0, %v4348
    %v4350 = vpop.f32.mrb[0].mxu0
    %v4351 = vpop.f32.mrb[0].mxu0
    %v4352 = vpop.f32.mrb[0].mxu0
    %4353 = vdwg.mxu0
    %v4354 = vadd.f32 %v4309, %v4349
    %v4355 = vshrl.u32 %v4310, 16
    %v4357 = vrot.slane %v4355, 1
    %v4358 = vshll.u32 %v4310, 16
    %v4360 = vrot.slane %v4358, 2
    %v4361 = vor.u32 %v4357, %v4360
    %v4363 = vsel %vm283, %v4361, 0
    %4365 = vmatprep.subr.bf16.mxu0 0
    %4366 = vmatpush1.bf16.msra.mxu0 %v557
    %4367 = vmatprep.subr.bf16.mxu0 0
    %4368 = vmatpush1.bf16.msra.mxu0 0
    %4369 = vmatprep.subr.bf16.mxu0 0
    %4370 = vmatpush1.bf16.msra.mxu0 0
    %4371 = vmatprep.subr.bf16.mxu0 0
    %4372 = vmatpush1.bf16.msra.mxu0 0
    %4373 = vmatprep.subr.bf16.mxu0 0
    %4374 = vmatpush1.bf16.msra.mxu0 0
    %4375 = vmatprep.subr.bf16.mxu0 0
    %4376 = vmatpush1.bf16.msra.mxu0 0
    %4377 = vmatprep.subr.bf16.mxu0 0
    %4378 = vmatpush1.bf16.msra.mxu0 0
    %4379 = vmatprep.subr.bf16.mxu0 0
    %4380 = vmatpush1.bf16.msra.mxu0 0
    %4381 = vmatprep.subr.bf16.mxu0 0
    %4382 = vmatpush1.bf16.msra.mxu0 0
    %4383 = vmatprep.subr.bf16.mxu0 0
    %4384 = vmatpush1.bf16.msra.mxu0 0
    %4385 = vmatprep.subr.bf16.mxu0 0
    %4386 = vmatpush1.bf16.msra.mxu0 0
    %4387 = vmatprep.subr.bf16.mxu0 0
    %4388 = vmatpush1.bf16.msra.mxu0 0
    %4389 = vmatprep.subr.bf16.mxu0 0
    %4390 = vmatpush1.bf16.msra.mxu0 0
    %4391 = vmatprep.subr.bf16.mxu0 0
    %4392 = vmatpush1.bf16.msra.mxu0 0
    %4393 = vmatprep.subr.bf16.mxu0 0
    %4394 = vmatpush1.bf16.msra.mxu0 0
    %4395 = vmatprep.subr.bf16.mxu0 0
    %4396 = vmatpush1.bf16.msra.mxu0 0
    %4397 = vmatprep.mubr.bf16.mxu0 0
    %4398 = vmatmul.mubr.bf16.gmra.mrb[0].mxu0 %v4363
    %v4399 = vpop.f32.mrb[0].mxu0
    %v4400 = vadd.f32 0.0, %v4399
    %v4401 = vpop.f32.mrb[0].mxu0
    %v4402 = vpop.f32.mrb[0].mxu0
    %v4403 = vpop.f32.mrb[0].mxu0
    %4404 = vdwg.mxu0
    %v4405 = vadd.f32 %v4354, %v4400
    %4406 = vmatprep.subr.bf16.mxu0 0
    %4407 = vmatpush1.bf16.msra.mxu0 %v612
    %4408 = vmatprep.subr.bf16.mxu0 0
    %4409 = vmatpush1.bf16.msra.mxu0 0
    %4410 = vmatprep.subr.bf16.mxu0 0
    %4411 = vmatpush1.bf16.msra.mxu0 0
    %4412 = vmatprep.subr.bf16.mxu0 0
    %4413 = vmatpush1.bf16.msra.mxu0 0
    %4414 = vmatprep.subr.bf16.mxu0 0
    %4415 = vmatpush1.bf16.msra.mxu0 0
    %4416 = vmatprep.subr.bf16.mxu0 0
    %4417 = vmatpush1.bf16.msra.mxu0 0
    %4418 = vmatprep.subr.bf16.mxu0 0
    %4419 = vmatpush1.bf16.msra.mxu0 0
    %4420 = vmatprep.subr.bf16.mxu0 0
    %4421 = vmatpush1.bf16.msra.mxu0 0
    %4422 = vmatprep.subr.bf16.mxu0 0
    %4423 = vmatpush1.bf16.msra.mxu0 0
    %4424 = vmatprep.subr.bf16.mxu0 0
    %4425 = vmatpush1.bf16.msra.mxu0 0
    %4426 = vmatprep.subr.bf16.mxu0 0
    %4427 = vmatpush1.bf16.msra.mxu0 0
    %4428 = vmatprep.subr.bf16.mxu0 0
    %4429 = vmatpush1.bf16.msra.mxu0 0
    %4430 = vmatprep.subr.bf16.mxu0 0
    %4431 = vmatpush1.bf16.msra.mxu0 0
    %4432 = vmatprep.subr.bf16.mxu0 0
    %4433 = vmatpush1.bf16.msra.mxu0 0
    %4434 = vmatprep.subr.bf16.mxu0 0
    %4435 = vmatpush1.bf16.msra.mxu0 0
    %4436 = vmatprep.subr.bf16.mxu0 0
    %4437 = vmatpush1.bf16.msra.mxu0 0
    %4438 = vmatprep.mubr.bf16.mxu0 0
    %4439 = vmatmul.mubr.bf16.gmra.mrb[0].mxu0 %v4042
    %v4440 = vpop.f32.mrb[0].mxu0
    %v4441 = vadd.f32 0.0, %v4440
    %v4442 = vpop.f32.mrb[0].mxu0
    %v4443 = vpop.f32.mrb[0].mxu0
    %v4444 = vpop.f32.mrb[0].mxu0
    %4445 = vdwg.mxu0
    %v4446 = vadd.f32 %v4405, %v4441
    %v4448 = vshrl.u32 %v4038, 16
    %v4450 = vrot.slane %v4448, 2
    %v4451 = vshll.u32 %v4038, 16
    %v4453 = vrot.slane %v4451, 3
    %v4454 = vor.u32 %v4450, %v4453
    %v4456 = vsel %vm283, %v4454, 0
    %4458 = vmatprep.subr.bf16.mxu0 0
    %4459 = vmatpush1.bf16.msra.mxu0 %v672
    %4460 = vmatprep.subr.bf16.mxu0 0
    %4461 = vmatpush1.bf16.msra.mxu0 0
    %4462 = vmatprep.subr.bf16.mxu0 0
    %4463 = vmatpush1.bf16.msra.mxu0 0
    %4464 = vmatprep.subr.bf16.mxu0 0
    %4465 = vmatpush1.bf16.msra.mxu0 0
    %4466 = vmatprep.subr.bf16.mxu0 0
    %4467 = vmatpush1.bf16.msra.mxu0 0
    %4468 = vmatprep.subr.bf16.mxu0 0
    %4469 = vmatpush1.bf16.msra.mxu0 0
    %4470 = vmatprep.subr.bf16.mxu0 0
    %4471 = vmatpush1.bf16.msra.mxu0 0
    %4472 = vmatprep.subr.bf16.mxu0 0
    %4473 = vmatpush1.bf16.msra.mxu0 0
    %4474 = vmatprep.subr.bf16.mxu0 0
    %4475 = vmatpush1.bf16.msra.mxu0 0
    %4476 = vmatprep.subr.bf16.mxu0 0
    %4477 = vmatpush1.bf16.msra.mxu0 0
    %4478 = vmatprep.subr.bf16.mxu0 0
    %4479 = vmatpush1.bf16.msra.mxu0 0
    %4480 = vmatprep.subr.bf16.mxu0 0
    %4481 = vmatpush1.bf16.msra.mxu0 0
    %4482 = vmatprep.subr.bf16.mxu0 0
    %4483 = vmatpush1.bf16.msra.mxu0 0
    %4484 = vmatprep.subr.bf16.mxu0 0
    %4485 = vmatpush1.bf16.msra.mxu0 0
    %4486 = vmatprep.subr.bf16.mxu0 0
    %4487 = vmatpush1.bf16.msra.mxu0 0
    %4488 = vmatprep.subr.bf16.mxu0 0
    %4489 = vmatpush1.bf16.msra.mxu0 0
    %4490 = vmatprep.mubr.bf16.mxu0 0
    %4491 = vmatmul.mubr.bf16.gmra.mrb[0].mxu0 %v4456
    %v4492 = vpop.f32.mrb[0].mxu0
    %v4493 = vadd.f32 0.0, %v4492
    %v4494 = vpop.f32.mrb[0].mxu0
    %v4495 = vpop.f32.mrb[0].mxu0
    %v4496 = vpop.f32.mrb[0].mxu0
    %4497 = vdwg.mxu0
    %v4498 = vadd.f32 %v4446, %v4493
    %v4499 = vpack.c.bf16 %v263, %v263
    %v4501 = vsel %vm283, %v4499, 0
    %4503 = vmatprep.subr.bf16.mxu0 0
    %4504 = vmatpush1.bf16.msra.mxu0 %v725
    %4505 = vmatprep.subr.bf16.mxu0 0
    %4506 = vmatpush1.bf16.msra.mxu0 0
    %4507 = vmatprep.subr.bf16.mxu0 0
    %4508 = vmatpush1.bf16.msra.mxu0 0
    %4509 = vmatprep.subr.bf16.mxu0 0
    %4510 = vmatpush1.bf16.msra.mxu0 0
    %4511 = vmatprep.subr.bf16.mxu0 0
    %4512 = vmatpush1.bf16.msra.mxu0 0
    %4513 = vmatprep.subr.bf16.mxu0 0
    %4514 = vmatpush1.bf16.msra.mxu0 0
    %4515 = vmatprep.subr.bf16.mxu0 0
    %4516 = vmatpush1.bf16.msra.mxu0 0
    %4517 = vmatprep.subr.bf16.mxu0 0
    %4518 = vmatpush1.bf16.msra.mxu0 0
    %4519 = vmatprep.subr.bf16.mxu0 0
    %4520 = vmatpush1.bf16.msra.mxu0 0
    %4521 = vmatprep.subr.bf16.mxu0 0
    %4522 = vmatpush1.bf16.msra.mxu0 0
    %4523 = vmatprep.subr.bf16.mxu0 0
    %4524 = vmatpush1.bf16.msra.mxu0 0
    %4525 = vmatprep.subr.bf16.mxu0 0
    %4526 = vmatpush1.bf16.msra.mxu0 0
    %4527 = vmatprep.subr.bf16.mxu0 0
    %4528 = vmatpush1.bf16.msra.mxu0 0
    %4529 = vmatprep.subr.bf16.mxu0 0
    %4530 = vmatpush1.bf16.msra.mxu0 0
    %4531 = vmatprep.subr.bf16.mxu0 0
    %4532 = vmatpush1.bf16.msra.mxu0 0
    %4533 = vmatprep.subr.bf16.mxu0 0
    %4534 = vmatpush1.bf16.msra.mxu0 0
    %4535 = vmatprep.mubr.bf16.mxu0 0
    %4536 = vmatmul.mubr.bf16.gmra.mrb[0].mxu0 %v4501
    %v4537 = vpop.f32.mrb[0].mxu0
    %v4538 = vadd.f32 0.0, %v4537
    %v4539 = vpop.f32.mrb[0].mxu0
    %v4540 = vpop.f32.mrb[0].mxu0
    %v4541 = vpop.f32.mrb[0].mxu0
    %4542 = vdwg.mxu0
    %v4543 = vadd.f32 %v4498, %v4538
    %v4544 = vadd.f32 %v4543, %v776
    %v4545 = vmax.f32 %v4544, 0.0
    %v4546 = vpack.c.bf16 %v4545, %v4545
    %v4547 = vld [vmem:[%s5 + $0x80] sm:$0xf]
    %v4548 = vld [vmem:[%s5 + $0x84] sm:$0xf]
    %v4549 = vld [vmem:[%s5 + $0x88] sm:$0xf]
    %v4550 = vld [vmem:[%s5 + $0x8c] sm:$0xf]
    %v4555 = vunpack.c.l.b16 %v4547
    %v4556 = vunpack.c.l.b16 %v4548
    %v4557 = vunpack.c.l.b16 %v4549
    %v4558 = vunpack.c.l.b16 %v4550
    %v4559 = vpack.c.b16 %v4556, %v4555
    %v4560 = vpack.c.b16 %v4558, %v4557
    %v4564 = vsel %vm1220, %v4546, 0
    %4566 = vmatprep.subr.bf16.mxu0 0
    %4567 = vmatpush1.bf16.msra.mxu0 %v4559
    %4568 = vmatprep.subr.bf16.mxu0 0
    %4569 = vmatpush1.bf16.msra.mxu0 %v4560
    %4570 = vmatprep.subr.bf16.mxu0 0
    %4571 = vmatpush1.bf16.msra.mxu0 0
    %4572 = vmatprep.subr.bf16.mxu0 0
    %4573 = vmatpush1.bf16.msra.mxu0 0
    %4574 = vmatprep.subr.bf16.mxu0 0
    %4575 = vmatpush1.bf16.msra.mxu0 0
    %4576 = vmatprep.subr.bf16.mxu0 0
    %4577 = vmatpush1.bf16.msra.mxu0 0
    %4578 = vmatprep.subr.bf16.mxu0 0
    %4579 = vmatpush1.bf16.msra.mxu0 0
    %4580 = vmatprep.subr.bf16.mxu0 0
    %4581 = vmatpush1.bf16.msra.mxu0 0
    %4582 = vmatprep.subr.bf16.mxu0 0
    %4583 = vmatpush1.bf16.msra.mxu0 0
    %4584 = vmatprep.subr.bf16.mxu0 0
    %4585 = vmatpush1.bf16.msra.mxu0 0
    %4586 = vmatprep.subr.bf16.mxu0 0
    %4587 = vmatpush1.bf16.msra.mxu0 0
    %4588 = vmatprep.subr.bf16.mxu0 0
    %4589 = vmatpush1.bf16.msra.mxu0 0
    %4590 = vmatprep.subr.bf16.mxu0 0
    %4591 = vmatpush1.bf16.msra.mxu0 0
    %4592 = vmatprep.subr.bf16.mxu0 0
    %4593 = vmatpush1.bf16.msra.mxu0 0
    %4594 = vmatprep.subr.bf16.mxu0 0
    %4595 = vmatpush1.bf16.msra.mxu0 0
    %4596 = vmatprep.subr.bf16.mxu0 0
    %4597 = vmatpush1.bf16.msra.mxu0 0
    %4598 = vmatprep.mubr.bf16.mxu0 0
    %4599 = vmatmul.mubr.bf16.gmra.mrb[0].mxu0 %v4564
    %v4600 = vpop.f32.mrb[0].mxu0
    %v4601 = vadd.f32 0.0, %v4600
    %v4602 = vpop.f32.mrb[0].mxu0
    %v4603 = vpop.f32.mrb[0].mxu0
    %v4604 = vpop.f32.mrb[0].mxu0
    %4605 = vdwg.mxu0
    %v4606 = vadd.f32 %v4147, %v4601
    %v4607 = vld [vmem:[%s6] sm:$0x1]
    %v4609 = vlaneseq
    %v4610 = vshrl.u32 %v4609, 7
    %v4611 = vsub.s32 0, %v4610
    %v4612 = vrot.slane %v4607, %v4611
    %v4614 = vadd.f32 %v4606, %v4612
    %v4615 = vmax.f32 %v4614, 0.0
    %v4616 = vpack.c.bf16 %v4615, %v4615
    %v4617 = vld [vmem:[%s7] sm:$0xff]
    %v4618 = vld [vmem:[%s7 + $0x8] sm:$0xff]
    %v4619 = vld [vmem:[%s7 + $0x10] sm:$0xff]
    %v4620 = vld [vmem:[%s7 + $0x18] sm:$0xff]
    %v4621 = vld [vmem:[%s7 + $0x20] sm:$0xff]
    %v4622 = vld [vmem:[%s7 + $0x28] sm:$0xff]
    %v4623 = vld [vmem:[%s7 + $0x30] sm:$0xff]
    %v4624 = vld [vmem:[%s7 + $0x38] sm:$0xff]
    %v4625 = vld [vmem:[%s7 + $0x40] sm:$0xff]
    %v4626 = vld [vmem:[%s7 + $0x48] sm:$0xff]
    %v4627 = vld [vmem:[%s7 + $0x50] sm:$0xff]
    %v4628 = vld [vmem:[%s7 + $0x58] sm:$0xff]
    %v4629 = vld [vmem:[%s7 + $0x60] sm:$0xff]
    %v4630 = vld [vmem:[%s7 + $0x68] sm:$0xff]
    %v4631 = vld [vmem:[%s7 + $0x70] sm:$0xff]
    %v4632 = vld [vmem:[%s7 + $0x78] sm:$0xff]
    %v4649 = vunpack.c.l.b16 %v4617
    %v4650 = vunpack.c.h.b16 %v4617
    %v4651 = vunpack.c.l.b16 %v4618
    %v4652 = vunpack.c.h.b16 %v4618
    %v4653 = vunpack.c.l.b16 %v4619
    %v4654 = vunpack.c.h.b16 %v4619
    %v4655 = vunpack.c.l.b16 %v4620
    %v4656 = vunpack.c.h.b16 %v4620
    %v4657 = vunpack.c.l.b16 %v4621
    %v4658 = vunpack.c.h.b16 %v4621
    %v4659 = vunpack.c.l.b16 %v4622
    %v4660 = vunpack.c.h.b16 %v4622
    %v4661 = vunpack.c.l.b16 %v4623
    %v4662 = vunpack.c.h.b16 %v4623
    %v4663 = vunpack.c.l.b16 %v4624
    %v4664 = vunpack.c.h.b16 %v4624
    %v4665 = vunpack.c.l.b16 %v4625
    %v4666 = vunpack.c.h.b16 %v4625
    %v4667 = vunpack.c.l.b16 %v4626
    %v4668 = vunpack.c.h.b16 %v4626
    %v4669 = vunpack.c.l.b16 %v4627
    %v4670 = vunpack.c.h.b16 %v4627
    %v4671 = vunpack.c.l.b16 %v4628
    %v4672 = vunpack.c.h.b16 %v4628
    %v4673 = vunpack.c.l.b16 %v4629
    %v4674 = vunpack.c.h.b16 %v4629
    %v4675 = vunpack.c.l.b16 %v4630
    %v4676 = vunpack.c.h.b16 %v4630
    %v4677 = vunpack.c.l.b16 %v4631
    %v4678 = vunpack.c.h.b16 %v4631
    %v4679 = vunpack.c.l.b16 %v4632
    %v4680 = vunpack.c.h.b16 %v4632
    %v4681 = vpack.c.b16 %v4651, %v4649
    %v4682 = vpack.c.b16 %v4652, %v4650
    %v4683 = vpack.c.b16 %v4655, %v4653
    %v4684 = vpack.c.b16 %v4656, %v4654
    %v4685 = vpack.c.b16 %v4659, %v4657
    %v4686 = vpack.c.b16 %v4660, %v4658
    %v4687 = vpack.c.b16 %v4663, %v4661
    %v4688 = vpack.c.b16 %v4664, %v4662
    %v4689 = vpack.c.b16 %v4667, %v4665
    %v4690 = vpack.c.b16 %v4668, %v4666
    %v4691 = vpack.c.b16 %v4671, %v4669
    %v4692 = vpack.c.b16 %v4672, %v4670
    %v4693 = vpack.c.b16 %v4675, %v4673
    %v4694 = vpack.c.b16 %v4676, %v4674
    %v4695 = vpack.c.b16 %v4679, %v4677
    %v4696 = vpack.c.b16 %v4680, %v4678
    %4713 = vmatprep.subr.bf16.mxu0 %v4682
    %4714 = vmatpush1.bf16.msra.mxu0 %v4681
    %4715 = vmatprep.subr.bf16.mxu0 %v4684
    %4716 = vmatpush1.bf16.msra.mxu0 %v4683
    %4717 = vmatprep.subr.bf16.mxu0 %v4686
    %4718 = vmatpush1.bf16.msra.mxu0 %v4685
    %4719 = vmatprep.subr.bf16.mxu0 %v4688
    %4720 = vmatpush1.bf16.msra.mxu0 %v4687
    %4721 = vmatprep.subr.bf16.mxu0 %v4690
    %4722 = vmatpush1.bf16.msra.mxu0 %v4689
    %4723 = vmatprep.subr.bf16.mxu0 %v4692
    %4724 = vmatpush1.bf16.msra.mxu0 %v4691
    %4725 = vmatprep.subr.bf16.mxu0 %v4694
    %4726 = vmatpush1.bf16.msra.mxu0 %v4693
    %4727 = vmatprep.subr.bf16.mxu0 %v4696
    %4728 = vmatpush1.bf16.msra.mxu0 %v4695
    %4729 = vmatprep.subr.bf16.mxu0 0
    %4730 = vmatpush1.bf16.msra.mxu0 0
    %4731 = vmatprep.subr.bf16.mxu0 0
    %4732 = vmatpush1.bf16.msra.mxu0 0
    %4733 = vmatprep.subr.bf16.mxu0 0
    %4734 = vmatpush1.bf16.msra.mxu0 0
    %4735 = vmatprep.subr.bf16.mxu0 0
    %4736 = vmatpush1.bf16.msra.mxu0 0
    %4737 = vmatprep.subr.bf16.mxu0 0
    %4738 = vmatpush1.bf16.msra.mxu0 0
    %4739 = vmatprep.subr.bf16.mxu0 0
    %4740 = vmatpush1.bf16.msra.mxu0 0
    %4741 = vmatprep.subr.bf16.mxu0 0
    %4742 = vmatpush1.bf16.msra.mxu0 0
    %4743 = vmatprep.subr.bf16.mxu0 0
    %4744 = vmatpush1.bf16.msra.mxu0 0
    %4745 = vmatprep.mubr.bf16.mxu0 0
    %4746 = vmatmul.mubr.bf16.gmra.mrb[0].mxu0 %v4616
    %v4747 = vpop.f32.mrb[0].mxu0
    %v4748 = vadd.f32 0.0, %v4747
    %v4749 = vpop.f32.mrb[0].mxu0
    %v4750 = vadd.f32 0.0, %v4749
    %v4751 = vpop.f32.mrb[0].mxu0
    %v4752 = vpop.f32.mrb[0].mxu0
    %4753 = vdwg.mxu0
    %v4754 = vlaneseq
    %v4755 = vshrl.u32 %v4754, 7
    %v4756 = vlaneseq
    %v4757 = vand.u32 %v4756, 127
    %v4758 = vadd.s32 %v4757, 128
    %v4759 = vmul.u32 %v4755, 64
    %vm4760 = vcmp.ge.s32.totalorder %v4757, %v4759
    %vm4761 = vcmp.ge.s32.totalorder %v4758, %v4759
    %v4762 = vadd.s32 %v4755, 1
    %v4763 = vmul.u32 %v4762, 64
    %vm4764 = vcmp.lt.s32.totalorder %v4757, %v4763
    %vm4765 = vcmp.lt.s32.totalorder %v4758, %v4763
    %vm4766 = vmand %vm4760, %vm4764
    %vm4767 = vmand %vm4761, %vm4765
    %v4768 = vsel %vm4766, %v4748, 0.0
    %v4769 = vsel %vm4767, %v4750, 0.0
    %vm4770 = vcmask 1042432
    %v4771 = vsel %vm4770, %v4768, 0.0
    %v4772 = vrot.slane %v4771, 4
    %v4773 = vadd.f32 %v4771, %v4772
    %v4774 = vrot.slane %v4773, 2
    %v4775 = vadd.f32 %v4773, %v4774
    %v4776 = vrot.slane %v4775, 1
    %v4777 = vadd.f32 %v4775, %v4776
    %v4778 = vsel %vm4770, %v4769, 0.0
    %v4779 = vrot.slane %v4778, 4
    %v4780 = vadd.f32 %v4778, %v4779
    %v4781 = vrot.slane %v4780, 2
    %v4782 = vadd.f32 %v4780, %v4781
    %v4783 = vrot.slane %v4782, 1
    %v4784 = vadd.f32 %v4782, %v4783
    %v4785 = vld [vmem:[%s8] sm:$0x3]
    %v4787 = vlaneseq
    %v4788 = vshrl.u32 %v4787, 7
    %v4789 = vsub.s32 0, %v4788
    %v4790 = vrot.slane %v4785, %v4789
    %v4791 = vlaneseq
    %v4792 = vshrl.u32 %v4791, 7
    %v4793 = vsub.s32 1, %v4792
    %v4794 = vrot.slane %v4785, %v4793
    %v4797 = vadd.f32 %v4777, %v4790
    %v4798 = vadd.f32 %v4784, %v4794
    %v4801 = vcombine.low %v4797, %v4798
    %v4803 = vunpack.c.l.s4 1966171168
    %v4804 = vunpack.c.0.s8 %v4803
    %v4805 = vlaneseq
    %v4806 = vshrl.u32 %v4805, 7
    %v4807 = vsub.s32 %v4804, %v4806
    %v4808 = vrot.slane %v4801, %v4807
    %v4810 = vunpack.c.l.s4 1966171168
    %v4811 = vunpack.c.0.s8 %v4810
    %v4812 = vlaneseq
    %v4813 = vshrl.u32 %v4812, 7
    %v4814 = vsub.s32 %v4811, %v4813
    %v4815 = vrot.slane %v4808, %v4814
    %v4817 = vlaneseq
    %vm4818 = vcmp.ge.s32.totalorder %v4817, 0
    %vm4819 = vcmp.lt.s32.totalorder %v4817, 256
    %vm4820 = vmand %vm4818, %vm4819
    %4821 = vst.msk [vmem:[#allocation2] sm:$0x3] %vm4820, %v4815
    // Predicated region
    $region38: #{concat_encoders_forward.1} parent=1 // pred_check
      _
    $region39: #{concat_encoders_forward.1} parent=1 // pred_check_branch
      %4823 = sbr.rel (0) target = $region41
    $region40: #{concat_encoders_forward.1} parent=1 // pred_region
      %s4825 = ssub.s32 32, 32
      %4826 = vsyncadd [#allocation3], %s4825
      %s4828 = sshll.u32 [#allocation2], 4
      %s4829 = int_to_ptr.vmem [resolvable:$true] %s4828
      %4831 = dma.vmem_to_hbm [thread:$0]  %s4829, 32, %s9, [#allocation3]
    $region41: #{concat_encoders_forward.1} parent=1 // pred_fallthru
      _
    // Predicated region
    $region42: #{concat_encoders_forward.1} parent=1 // pred_check
      _
    $region43: #{concat_encoders_forward.1} parent=1 // pred_check_branch
      %4833 = sbr.rel (0) target = $region45
    $region44: #{concat_encoders_forward.1} parent=1 // pred_region
      %4834 = dma.done [#allocation3], 32
    $region45: #{concat_encoders_forward.1} parent=1 // pred_fallthru
      _
    %4835 = vsyncpa [#allocation3], 1

</llo_original>
